<compile_context>
chip_gen: v7x
topology: tpu7x:2x2x1
jax: 0.10.0
libtpu: 0.0.40
codegen_flags: <defaults>
</compile_context>

<pallas_src>
import jax
import jax.numpy as jnp
from jax import lax
from jax.experimental import pallas as pl
from jax.experimental.pallas import tpu as pltpu

# ---- small, forward-consistent hyperparameters (scaled down from the original) ----
VOCAB_SIZE = 64       # len(chars) in the original script (synthetic here)
VOCAB_PAD = 128       # lm_head padded to a lane-dense 128-wide output
N_EMBD = 32
N_HEAD = 4
HS = N_EMBD // N_HEAD           # head_size = 8
HID = 4 * N_EMBD                # MLP hidden = 128
N_LAYER = 2
BLOCK_SIZE = 8
LN_EPS = 1e-5
NEG_INF = -1e30
C = N_EMBD


def _layernorm(x, g, b):
    mu = jnp.mean(x, axis=-1, keepdims=True)
    var = jnp.mean((x - mu) ** 2, axis=-1, keepdims=True)
    return (x - mu) * lax.rsqrt(var + LN_EPS) * g + b


# ---------------------------------------------------------------------------
# One fused kernel per sequence (grid=(B,), batch-parallel):
#   one-hot token gather + pos add -> N_LAYER transformer blocks -> lm_head
#   -> logits (padded to 128 lanes) and per-row NLL (masked to the real vocab).
# All weights stay VMEM-resident for the whole pass.
# ---------------------------------------------------------------------------
def fused_forward_kernel(idx_ref, tgt_ref, emb_ref, wqkv_ref, wo_ref,
                         w1_ref, w2_ref, vec_ref, lm_ref,
                         logits_ref, nll_ref):
    T = idx_ref.shape[0]

    # ---- in-kernel token-embedding gather (one-hot MXU matmul) + pos add ----
    idx_col = idx_ref[...]                                            # (T, 1) int32
    vocab_iota = lax.broadcasted_iota(jnp.int32, (T, VOCAB_SIZE), 1)
    onehot = (vocab_iota == idx_col).astype(jnp.bfloat16)             # (T, 64)
    tok = jnp.dot(onehot, emb_ref[:VOCAB_SIZE, :],
                  preferred_element_type=jnp.float32)                 # (T, C) f32
    pos = emb_ref[VOCAB_SIZE:VOCAB_SIZE + T, :].astype(jnp.float32)   # (T, C)
    x = tok + pos

    # ---- in-kernel per-sequence causal additive bias (no (BT,BT) input) ----
    row = lax.broadcasted_iota(jnp.int32, (T, T), 0)
    col = lax.broadcasted_iota(jnp.int32, (T, T), 1)
    mask_bias = jnp.where(row >= col, 0.0, NEG_INF).astype(jnp.float32)

    for l in range(N_LAYER):                 # static unroll; weights VMEM-resident
        vec = vec_ref[l]                     # (8, HID) f32 bias/LN slab
        b1 = vec[0:1, :]
        bo = vec[1:2, :C]
        b2 = vec[2:3, :C]
        g1 = vec[3:4, :C]
        be1 = vec[4:5, :C]
        g2 = vec[5:6, :C]
        be2 = vec[6:7, :C]

        # ---- attention ----
        h1 = _layernorm(x, g1, be1)
        # single fused QKV matmul (scale folded into the Q weights at init)
        qkv = jnp.dot(h1.astype(jnp.bfloat16), wqkv_ref[l],
                      preferred_element_type=jnp.float32)             # (T, 3C) f32
        wo_l = wo_ref[l]                                              # (C, C) bf16

        sa = jnp.zeros((T, C), jnp.float32)
        for h in range(N_HEAD):
            q_h = qkv[:, h * HS:(h + 1) * HS].astype(jnp.bfloat16)
            k_h = qkv[:, C + h * HS:C + (h + 1) * HS].astype(jnp.bfloat16)
            v_h = qkv[:, 2 * C + h * HS:2 * C + (h + 1) * HS].astype(jnp.bfloat16)
            # scores: contract last dims (no explicit k.T transpose)
            s = lax.dot_general(q_h, k_h, (((1,), (1,)), ((), ())),
                                preferred_element_type=jnp.float32) + mask_bias
            s = s - jnp.max(s, axis=-1, keepdims=True)
            p = jnp.exp(s)
            p = p * pl.reciprocal(jnp.sum(p, axis=-1, keepdims=True), approx=True)
            o_h = jnp.dot(p.astype(jnp.bfloat16), v_h,
                          preferred_element_type=jnp.float32)
            # concat-free head merge: attn @ Wo == sum_h attn_h @ Wo[h-slice]
            sa = sa + jnp.dot(o_h.astype(jnp.bfloat16),
                              wo_l[h * HS:(h + 1) * HS, :],
                              preferred_element_type=jnp.float32)
        x = x + sa + bo                      # residual 1 (dropout = identity)

        # ---- MLP ----
        h2 = _layernorm(x, g2, be2)
        ff = jnp.maximum(
            jnp.dot(h2.astype(jnp.bfloat16), w1_ref[l],
                    preferred_element_type=jnp.float32) + b1, 0.0)
        ff = jnp.dot(ff.astype(jnp.bfloat16), w2_ref[l],
                     preferred_element_type=jnp.float32) + b2
        x = x + ff                           # residual 2 (dropout = identity)

    # ---- lm_head (vocab padded to 128 lanes -> unmasked lane-dense store) ----
    lm_w = lm_ref[:C, :]                                              # (C, 128) bf16
    lm_b = lm_ref[C:C + 1, :].astype(jnp.float32)                     # (1, 128)
    logits = jnp.dot(x.astype(jnp.bfloat16), lm_w,
                     preferred_element_type=jnp.float32) + lm_b       # (T, 128) f32
    logits_ref[...] = logits

    # ---- fused cross-entropy pieces: per-row NLL over the REAL vocab only ----
    lane_v = lax.broadcasted_iota(jnp.int32, (T, VOCAB_PAD), 1)
    tgt_col = tgt_ref[...]                                            # (T, 1) int32
    masked = jnp.where(lane_v < VOCAB_SIZE, logits, NEG_INF)
    m = jnp.max(masked, axis=-1, keepdims=True)
    lse = m + jnp.log(jnp.sum(jnp.exp(masked - m), axis=-1, keepdims=True))
    picked = jnp.sum(jnp.where(lane_v == tgt_col, logits, 0.0),
                     axis=-1, keepdims=True)
    nll_ref[...] = lse - picked


# ---------------------------------------------------------------------------
# Forward pass: one fused pallas_call; only trivial reshapes / a mean in JAX.
# ---------------------------------------------------------------------------
def forward(params, idx, targets=None):
    B, T = idx.shape
    BT = B * T

    idx_col = idx.reshape(BT, 1).astype(jnp.int32)
    if targets is None:
        tgt_col = jnp.zeros((BT, 1), jnp.int32)
    else:
        tgt_col = targets.reshape(BT, 1).astype(jnp.int32)

    args = (idx_col, tgt_col,
            params["emb_slab"], params["wqkv"], params["wo_p"],
            params["w1_p"], params["w2_p"], params["vec_slab"], params["lm_slab"])

    def seq_spec(last):
        return pl.BlockSpec((T, last), lambda b: (b, 0))

    def full(arr):
        n = arr.ndim
        return pl.BlockSpec(arr.shape, lambda b, n=n: (0,) * n)

    in_specs = [seq_spec(1), seq_spec(1)] + [full(a) for a in args[2:]]

    logits_pad, nll = pl.pallas_call(
        fused_forward_kernel,
        out_shape=(jax.ShapeDtypeStruct((BT, VOCAB_PAD), jnp.float32),
                   jax.ShapeDtypeStruct((BT, 1), jnp.float32)),
        grid=(B,),
        in_specs=in_specs,
        out_specs=(pl.BlockSpec((T, VOCAB_PAD), lambda b: (b, 0)),
                   pl.BlockSpec((T, 1), lambda b: (b, 0))),
        compiler_params=pltpu.CompilerParams(dimension_semantics=("parallel",)),
    )(*args)

    logits = logits_pad[:, :VOCAB_SIZE].reshape(B, T, VOCAB_SIZE)
    loss = None if targets is None else jnp.mean(nll)
    return logits, loss


# ---------------------------------------------------------------------------
# Parameter init (deterministic, synthetic). Raw f32 copies are kept for the
# pure-JAX reference; the kernel consumes the packed / bf16 slabs.
# ---------------------------------------------------------------------------
def init_params(key):
    V, L = VOCAB_SIZE, N_LAYER
    ks = iter(jax.random.split(key, 13))
    nrm = lambda k, s: (0.02 * jax.random.normal(k, s)).astype(jnp.float32)
    p = {
        "tok_emb": nrm(next(ks), (V, C)),
        "pos_emb": nrm(next(ks), (BLOCK_SIZE, C)),
        "lm_w": nrm(next(ks), (C, V)),
        "lm_b": nrm(next(ks), (1, V)),
        "wq": nrm(next(ks), (L, C, C)),
        "wk": nrm(next(ks), (L, C, C)),
        "wv": nrm(next(ks), (L, C, C)),
        "wo": nrm(next(ks), (L, C, C)),
        "bo": nrm(next(ks), (L, 1, C)),
        "w1": nrm(next(ks), (L, C, HID)),
        "b1": nrm(next(ks), (L, 1, HID)),
        "w2": nrm(next(ks), (L, HID, C)),
        "b2": nrm(next(ks), (L, 1, C)),
        "g1": jnp.ones((L, 1, C), jnp.float32),
        "be1": jnp.zeros((L, 1, C), jnp.float32),
        "g2": jnp.ones((L, 1, C), jnp.float32),
        "be2": jnp.zeros((L, 1, C), jnp.float32),
    }

    scale = C ** (-0.5)    # attention scale folded into the Q weights
    p["wqkv"] = jnp.concatenate([p["wq"] * scale, p["wk"], p["wv"]],
                                axis=-1).astype(jnp.bfloat16)          # (L, C, 3C)
    p["wo_p"] = p["wo"].astype(jnp.bfloat16)
    p["w1_p"] = p["w1"].astype(jnp.bfloat16)
    p["w2_p"] = p["w2"].astype(jnp.bfloat16)
    p["emb_slab"] = jnp.concatenate([p["tok_emb"], p["pos_emb"]],
                                    axis=0).astype(jnp.bfloat16)       # (V+BS, C)

    padC = lambda v: jnp.pad(v, ((0, 0), (0, 0), (0, HID - C)))
    p["vec_slab"] = jnp.concatenate(                                    # (L, 8, HID) f32
        [p["b1"], padC(p["bo"]), padC(p["b2"]), padC(p["g1"]), padC(p["be1"]),
         padC(p["g2"]), padC(p["be2"]), jnp.zeros((L, 1, HID), jnp.float32)], axis=1)

    lm_w_pad = jnp.pad(p["lm_w"], ((0, 0), (0, VOCAB_PAD - VOCAB_SIZE)))
    lm_b_pad = jnp.pad(p["lm_b"], ((0, 0), (0, VOCAB_PAD - VOCAB_SIZE)))
    p["lm_slab"] = jnp.concatenate(                                     # (C+8, 128) bf16
        [lm_w_pad, lm_b_pad, jnp.zeros((7, VOCAB_PAD), jnp.float32)],
        axis=0).astype(jnp.bfloat16)
    return p


# ---------------------------------------------------------------------------
# Pure-JAX f32 reference (mirrors the PyTorch module exactly).
# ---------------------------------------------------------------------------
def reference_forward(params, idx):
    B, T = idx.shape
    x = jnp.take(params["tok_emb"], idx, axis=0) + params["pos_emb"][:T][None]
    causal = jnp.arange(T)[:, None] >= jnp.arange(T)[None, :]
    for l in range(N_LAYER):
        h1 = _layernorm(x, params["g1"][l], params["be1"][l])
        outs = []
        for h in range(N_HEAD):
            sl = slice(h * HS, (h + 1) * HS)
            q = h1 @ params["wq"][l][:, sl]
            k = h1 @ params["wk"][l][:, sl]
            v = h1 @ params["wv"][l][:, sl]
            s = jnp.einsum("btd,bsd->bts", q, k) * N_EMBD ** (-0.5)
            s = jnp.where(causal[None], s, -jnp.inf)
            p = jax.nn.softmax(s, axis=-1)
            outs.append(jnp.einsum("bts,bsd->btd", p, v))
        attn = jnp.concatenate(outs, axis=-1)
        x = x + attn @ params["wo"][l] + params["bo"][l]
        h2 = _layernorm(x, params["g2"][l], params["be2"][l])
        ff = (jnp.maximum(h2 @ params["w1"][l] + params["b1"][l], 0.0)
              @ params["w2"][l] + params["b2"][l])
        x = x + ff
    return x @ params["lm_w"] + params["lm_b"]


def reference_loss(logits, targets):
    flat = logits.reshape(-1, VOCAB_SIZE)
    lse = jax.nn.logsumexp(flat, axis=-1)
    picked = jnp.take_along_axis(flat, targets.reshape(-1, 1), axis=-1)[:, 0]
    return jnp.mean(lse - picked)


if __name__ == "__main__":
    key = jax.random.PRNGKey(0)
    pkey, ikey, tkey = jax.random.split(key, 3)
    params = init_params(pkey)

    B, T = 2, BLOCK_SIZE
    idx = jax.random.randint(ikey, (B, T), 0, VOCAB_SIZE, dtype=jnp.int32)
    targets = jax.random.randint(tkey, (B, T), 0, VOCAB_SIZE, dtype=jnp.int32)

    fwd = jax.jit(forward)
    logits, loss = fwd(params, idx, targets)
    logits = jax.block_until_ready(logits)
    loss = jax.block_until_ready(loss)

    ref_logits = reference_forward(params, idx)
    ref_loss = reference_loss(ref_logits, targets)

    assert logits.shape == (B, T, VOCAB_SIZE)
    # tolerance loosened (per review) because matmul operands are bf16 (f32 accum)
    assert jnp.allclose(logits, ref_logits, atol=2e-2, rtol=2e-2)
    assert jnp.isfinite(loss)
    assert jnp.allclose(loss, ref_loss, atol=2e-2)

    print("KERNEL_OK")
</pallas_src>

<mosaic_0001>
module attributes {stable_mosaic.version = 11 : i64} {
  func.func @fused_forward_kernel(%arg0: i32, %arg1: memref<8x1xi32, #tpu.memory_space<vmem>>, %arg2: memref<8x1xi32, #tpu.memory_space<vmem>>, %arg3: memref<72x32xbf16, #tpu.memory_space<vmem>>, %arg4: memref<2x32x96xbf16, #tpu.memory_space<vmem>>, %arg5: memref<2x32x32xbf16, #tpu.memory_space<vmem>>, %arg6: memref<2x32x128xbf16, #tpu.memory_space<vmem>>, %arg7: memref<2x128x32xbf16, #tpu.memory_space<vmem>>, %arg8: memref<2x8x128xf32, #tpu.memory_space<vmem>>, %arg9: memref<40x128xbf16, #tpu.memory_space<vmem>>, %arg10: memref<8x128xf32, #tpu.memory_space<vmem>>, %arg11: memref<8x1xf32, #tpu.memory_space<vmem>>) attributes {dimension_semantics = [#tpu.dimension_semantics<parallel>], iteration_bounds = array<i64: 2>, scalar_prefetch = 0 : i64, scratch_operands = 0 : i64, tpu.core_type = #tpu.core_type<tc>, window_params = [{transform_indices = @transform_0, window_bounds = array<i64: 8, 1>}, {transform_indices = @transform_1, window_bounds = array<i64: 8, 1>}, {pipeline_mode = #tpu.pipeline_mode<synchronous>, transform_indices = @transform_2, window_bounds = array<i64: 72, 32>}, {pipeline_mode = #tpu.pipeline_mode<synchronous>, transform_indices = @transform_3, window_bounds = array<i64: 2, 32, 96>}, {pipeline_mode = #tpu.pipeline_mode<synchronous>, transform_indices = @transform_4, window_bounds = array<i64: 2, 32, 32>}, {pipeline_mode = #tpu.pipeline_mode<synchronous>, transform_indices = @transform_5, window_bounds = array<i64: 2, 32, 128>}, {pipeline_mode = #tpu.pipeline_mode<synchronous>, transform_indices = @transform_6, window_bounds = array<i64: 2, 128, 32>}, {pipeline_mode = #tpu.pipeline_mode<synchronous>, transform_indices = @transform_7, window_bounds = array<i64: 2, 8, 128>}, {pipeline_mode = #tpu.pipeline_mode<synchronous>, transform_indices = @transform_8, window_bounds = array<i64: 40, 128>}, {transform_indices = @transform_9, window_bounds = array<i64: 8, 128>}, {transform_indices = @transform_10, window_bounds = array<i64: 8, 1>}]} {
    %c0 = arith.constant 0 : index
    %c0_0 = arith.constant 0 : index
    %0 = vector.load %arg1[%c0, %c0_0] : memref<8x1xi32, #tpu.memory_space<vmem>>, vector<8x1xi32>
    %1 = tpu.iota {dimensions = array<i32: 1>} : vector<8x64xi32>
    %2 = vector.broadcast %0 : vector<8x1xi32> to vector<8x64xi32>
    %3 = arith.cmpi eq, %1, %2 : vector<8x64xi32>
    %4 = arith.extui %3 : vector<8x64xi1> to vector<8x64xi32>
    %5 = arith.sitofp %4 : vector<8x64xi32> to vector<8x64xf32>
    %6 = arith.truncf %5 : vector<8x64xf32> to vector<8x64xbf16>
    %c0_1 = arith.constant 0 : index
    %c0_2 = arith.constant 0 : index
    %7 = vector.load %arg3[%c0_1, %c0_2] : memref<72x32xbf16, #tpu.memory_space<vmem>>, vector<64x32xbf16>
    %cst = arith.constant dense<0.000000e+00> : vector<8x32xf32>
    %8 = tpu.matmul %6, %7, %cst {dimension_numbers = #tpu.dot_dimension_numbers<[1], [0], [0], [1], [0, 0, 1, 1], [], []>} : vector<8x64xbf16>, vector<64x32xbf16>, vector<8x32xf32> -> vector<8x32xf32>
    %c64 = arith.constant 64 : index
    %c0_3 = arith.constant 0 : index
    %9 = vector.load %arg3[%c64, %c0_3] : memref<72x32xbf16, #tpu.memory_space<vmem>>, vector<8x32xbf16>
    %10 = arith.extf %9 : vector<8x32xbf16> to vector<8x32xf32>
    %11 = arith.addf %8, %10 : vector<8x32xf32>
    %12 = tpu.iota {dimensions = array<i32: 0>} : vector<8x8xi32>
    %13 = tpu.iota {dimensions = array<i32: 1>} : vector<8x8xi32>
    %14 = arith.cmpi sge, %12, %13 : vector<8x8xi32>
    %cst_4 = arith.constant 0.000000e+00 : f32
    %cst_5 = arith.constant -1.000000e+30 : f32
    %15 = vector.broadcast %cst_4 : f32 to vector<8x8xf32>
    %16 = vector.broadcast %cst_5 : f32 to vector<8x8xf32>
    %17 = arith.select %14, %15, %16 : vector<8x8xi1>, vector<8x8xf32>
    %c0_6 = arith.constant 0 : index
    %c0_7 = arith.constant 0 : index
    %c0_8 = arith.constant 0 : index
    %18 = vector.load %arg8[%c0_6, %c0_7, %c0_8] : memref<2x8x128xf32, #tpu.memory_space<vmem>>, vector<1x8x128xf32>
    %19 = vector.shape_cast %18 : vector<1x8x128xf32> to vector<8x128xf32>
    %20 = vector.extract_strided_slice %19 {offsets = [0, 0], sizes = [1, 128], strides = [1, 1]} : vector<8x128xf32> to vector<1x128xf32>
    %21 = vector.extract_strided_slice %19 {offsets = [1, 0], sizes = [1, 32], strides = [1, 1]} : vector<8x128xf32> to vector<1x32xf32>
    %22 = vector.extract_strided_slice %19 {offsets = [2, 0], sizes = [1, 32], strides = [1, 1]} : vector<8x128xf32> to vector<1x32xf32>
    %23 = vector.extract_strided_slice %19 {offsets = [3, 0], sizes = [1, 32], strides = [1, 1]} : vector<8x128xf32> to vector<1x32xf32>
    %24 = vector.extract_strided_slice %19 {offsets = [4, 0], sizes = [1, 32], strides = [1, 1]} : vector<8x128xf32> to vector<1x32xf32>
    %25 = vector.extract_strided_slice %19 {offsets = [5, 0], sizes = [1, 32], strides = [1, 1]} : vector<8x128xf32> to vector<1x32xf32>
    %26 = vector.extract_strided_slice %19 {offsets = [6, 0], sizes = [1, 32], strides = [1, 1]} : vector<8x128xf32> to vector<1x32xf32>
    %cst_9 = arith.constant dense<0.000000e+00> : vector<8xf32>
    %27 = vector.multi_reduction <add>, %11, %cst_9 [1] : vector<8x32xf32> to vector<8xf32>
    %28 = vector.shape_cast %27 : vector<8xf32> to vector<8x1xf32>
    %cst_10 = arith.constant 3.200000e+01 : f32
    %29 = vector.broadcast %cst_10 : f32 to vector<8x1xf32>
    %30 = arith.divf %28, %29 : vector<8x1xf32>
    %31 = vector.broadcast %30 : vector<8x1xf32> to vector<8x32xf32>
    %32 = arith.subf %11, %31 : vector<8x32xf32>
    %33 = arith.mulf %32, %32 : vector<8x32xf32>
    %cst_11 = arith.constant dense<0.000000e+00> : vector<8xf32>
    %34 = vector.multi_reduction <add>, %33, %cst_11 [1] : vector<8x32xf32> to vector<8xf32>
    %35 = vector.shape_cast %34 : vector<8xf32> to vector<8x1xf32>
    %cst_12 = arith.constant 3.200000e+01 : f32
    %36 = vector.broadcast %cst_12 : f32 to vector<8x1xf32>
    %37 = arith.divf %35, %36 : vector<8x1xf32>
    %38 = vector.broadcast %30 : vector<8x1xf32> to vector<8x32xf32>
    %39 = arith.subf %11, %38 : vector<8x32xf32>
    %cst_13 = arith.constant 9.99999974E-6 : f32
    %40 = vector.broadcast %cst_13 : f32 to vector<8x1xf32>
    %41 = arith.addf %37, %40 : vector<8x1xf32>
    %42 = math.rsqrt %41 : vector<8x1xf32>
    %43 = vector.broadcast %42 : vector<8x1xf32> to vector<8x32xf32>
    %44 = arith.mulf %39, %43 : vector<8x32xf32>
    %45 = vector.broadcast %23 : vector<1x32xf32> to vector<8x32xf32>
    %46 = arith.mulf %44, %45 : vector<8x32xf32>
    %47 = vector.broadcast %24 : vector<1x32xf32> to vector<8x32xf32>
    %48 = arith.addf %46, %47 : vector<8x32xf32>
    %49 = arith.truncf %48 : vector<8x32xf32> to vector<8x32xbf16>
    %c0_14 = arith.constant 0 : index
    %c0_15 = arith.constant 0 : index
    %c0_16 = arith.constant 0 : index
    %50 = vector.load %arg4[%c0_14, %c0_15, %c0_16] : memref<2x32x96xbf16, #tpu.memory_space<vmem>>, vector<1x32x96xbf16>
    %51 = vector.shape_cast %50 : vector<1x32x96xbf16> to vector<32x96xbf16>
    %cst_17 = arith.constant dense<0.000000e+00> : vector<8x96xf32>
    %52 = tpu.matmul %49, %51, %cst_17 {dimension_numbers = #tpu.dot_dimension_numbers<[1], [0], [0], [1], [0, 0, 1, 1], [], []>} : vector<8x32xbf16>, vector<32x96xbf16>, vector<8x96xf32> -> vector<8x96xf32>
    %c0_18 = arith.constant 0 : index
    %c0_19 = arith.constant 0 : index
    %c0_20 = arith.constant 0 : index
    %53 = vector.load %arg5[%c0_18, %c0_19, %c0_20] : memref<2x32x32xbf16, #tpu.memory_space<vmem>>, vector<1x32x32xbf16>
    %54 = vector.shape_cast %53 : vector<1x32x32xbf16> to vector<32x32xbf16>
    %cst_21 = arith.constant 0.000000e+00 : f32
    %55 = vector.broadcast %cst_21 : f32 to vector<8x32xf32>
    %56 = vector.extract_strided_slice %52 {offsets = [0, 0], sizes = [8, 8], strides = [1, 1]} : vector<8x96xf32> to vector<8x8xf32>
    %57 = arith.truncf %56 : vector<8x8xf32> to vector<8x8xbf16>
    %58 = vector.extract_strided_slice %52 {offsets = [0, 32], sizes = [8, 8], strides = [1, 1]} : vector<8x96xf32> to vector<8x8xf32>
    %59 = arith.truncf %58 : vector<8x8xf32> to vector<8x8xbf16>
    %60 = vector.extract_strided_slice %52 {offsets = [0, 64], sizes = [8, 8], strides = [1, 1]} : vector<8x96xf32> to vector<8x8xf32>
    %61 = arith.truncf %60 : vector<8x8xf32> to vector<8x8xbf16>
    %cst_22 = arith.constant dense<0.000000e+00> : vector<8x8xf32>
    %62 = tpu.matmul %57, %59, %cst_22 {dimension_numbers = #tpu.dot_dimension_numbers<[1], [1], [0], [0], [0, 0, 1, 0], [], []>} : vector<8x8xbf16>, vector<8x8xbf16>, vector<8x8xf32> -> vector<8x8xf32>
    %63 = arith.addf %62, %17 : vector<8x8xf32>
    %cst_23 = arith.constant dense<0xFF800000> : vector<8xf32>
    %64 = vector.multi_reduction <maximumf>, %63, %cst_23 [1] : vector<8x8xf32> to vector<8xf32>
    %65 = vector.shape_cast %64 : vector<8xf32> to vector<8x1xf32>
    %66 = vector.broadcast %65 : vector<8x1xf32> to vector<8x8xf32>
    %67 = arith.subf %63, %66 : vector<8x8xf32>
    %68 = math.exp %67 : vector<8x8xf32>
    %cst_24 = arith.constant dense<0.000000e+00> : vector<8xf32>
    %69 = vector.multi_reduction <add>, %68, %cst_24 [1] : vector<8x8xf32> to vector<8xf32>
    %70 = vector.shape_cast %69 : vector<8xf32> to vector<8x1xf32>
    %71 = tpu.reciprocal %70 {approx = true} : vector<8x1xf32> -> vector<8x1xf32>
    %72 = vector.broadcast %71 : vector<8x1xf32> to vector<8x8xf32>
    %73 = arith.mulf %68, %72 : vector<8x8xf32>
    %74 = arith.truncf %73 : vector<8x8xf32> to vector<8x8xbf16>
    %cst_25 = arith.constant dense<0.000000e+00> : vector<8x8xf32>
    %75 = tpu.matmul %74, %61, %cst_25 {dimension_numbers = #tpu.dot_dimension_numbers<[1], [0], [0], [1], [0, 0, 1, 1], [], []>} : vector<8x8xbf16>, vector<8x8xbf16>, vector<8x8xf32> -> vector<8x8xf32>
    %76 = arith.truncf %75 : vector<8x8xf32> to vector<8x8xbf16>
    %77 = vector.extract_strided_slice %54 {offsets = [0, 0], sizes = [8, 32], strides = [1, 1]} : vector<32x32xbf16> to vector<8x32xbf16>
    %cst_26 = arith.constant dense<0.000000e+00> : vector<8x32xf32>
    %78 = tpu.matmul %76, %77, %cst_26 {dimension_numbers = #tpu.dot_dimension_numbers<[1], [0], [0], [1], [0, 0, 1, 1], [], []>} : vector<8x8xbf16>, vector<8x32xbf16>, vector<8x32xf32> -> vector<8x32xf32>
    %79 = arith.addf %55, %78 : vector<8x32xf32>
    %80 = vector.extract_strided_slice %52 {offsets = [0, 8], sizes = [8, 8], strides = [1, 1]} : vector<8x96xf32> to vector<8x8xf32>
    %81 = arith.truncf %80 : vector<8x8xf32> to vector<8x8xbf16>
    %82 = vector.extract_strided_slice %52 {offsets = [0, 40], sizes = [8, 8], strides = [1, 1]} : vector<8x96xf32> to vector<8x8xf32>
    %83 = arith.truncf %82 : vector<8x8xf32> to vector<8x8xbf16>
    %84 = vector.extract_strided_slice %52 {offsets = [0, 72], sizes = [8, 8], strides = [1, 1]} : vector<8x96xf32> to vector<8x8xf32>
    %85 = arith.truncf %84 : vector<8x8xf32> to vector<8x8xbf16>
    %cst_27 = arith.constant dense<0.000000e+00> : vector<8x8xf32>
    %86 = tpu.matmul %81, %83, %cst_27 {dimension_numbers = #tpu.dot_dimension_numbers<[1], [1], [0], [0], [0, 0, 1, 0], [], []>} : vector<8x8xbf16>, vector<8x8xbf16>, vector<8x8xf32> -> vector<8x8xf32>
    %87 = arith.addf %86, %17 : vector<8x8xf32>
    %cst_28 = arith.constant dense<0xFF800000> : vector<8xf32>
    %88 = vector.multi_reduction <maximumf>, %87, %cst_28 [1] : vector<8x8xf32> to vector<8xf32>
    %89 = vector.shape_cast %88 : vector<8xf32> to vector<8x1xf32>
    %90 = vector.broadcast %89 : vector<8x1xf32> to vector<8x8xf32>
    %91 = arith.subf %87, %90 : vector<8x8xf32>
    %92 = math.exp %91 : vector<8x8xf32>
    %cst_29 = arith.constant dense<0.000000e+00> : vector<8xf32>
    %93 = vector.multi_reduction <add>, %92, %cst_29 [1] : vector<8x8xf32> to vector<8xf32>
    %94 = vector.shape_cast %93 : vector<8xf32> to vector<8x1xf32>
    %95 = tpu.reciprocal %94 {approx = true} : vector<8x1xf32> -> vector<8x1xf32>
    %96 = vector.broadcast %95 : vector<8x1xf32> to vector<8x8xf32>
    %97 = arith.mulf %92, %96 : vector<8x8xf32>
    %98 = arith.truncf %97 : vector<8x8xf32> to vector<8x8xbf16>
    %cst_30 = arith.constant dense<0.000000e+00> : vector<8x8xf32>
    %99 = tpu.matmul %98, %85, %cst_30 {dimension_numbers = #tpu.dot_dimension_numbers<[1], [0], [0], [1], [0, 0, 1, 1], [], []>} : vector<8x8xbf16>, vector<8x8xbf16>, vector<8x8xf32> -> vector<8x8xf32>
    %100 = arith.truncf %99 : vector<8x8xf32> to vector<8x8xbf16>
    %101 = vector.extract_strided_slice %54 {offsets = [8, 0], sizes = [8, 32], strides = [1, 1]} : vector<32x32xbf16> to vector<8x32xbf16>
    %cst_31 = arith.constant dense<0.000000e+00> : vector<8x32xf32>
    %102 = tpu.matmul %100, %101, %cst_31 {dimension_numbers = #tpu.dot_dimension_numbers<[1], [0], [0], [1], [0, 0, 1, 1], [], []>} : vector<8x8xbf16>, vector<8x32xbf16>, vector<8x32xf32> -> vector<8x32xf32>
    %103 = arith.addf %79, %102 : vector<8x32xf32>
    %104 = vector.extract_strided_slice %52 {offsets = [0, 16], sizes = [8, 8], strides = [1, 1]} : vector<8x96xf32> to vector<8x8xf32>
    %105 = arith.truncf %104 : vector<8x8xf32> to vector<8x8xbf16>
    %106 = vector.extract_strided_slice %52 {offsets = [0, 48], sizes = [8, 8], strides = [1, 1]} : vector<8x96xf32> to vector<8x8xf32>
    %107 = arith.truncf %106 : vector<8x8xf32> to vector<8x8xbf16>
    %108 = vector.extract_strided_slice %52 {offsets = [0, 80], sizes = [8, 8], strides = [1, 1]} : vector<8x96xf32> to vector<8x8xf32>
    %109 = arith.truncf %108 : vector<8x8xf32> to vector<8x8xbf16>
    %cst_32 = arith.constant dense<0.000000e+00> : vector<8x8xf32>
    %110 = tpu.matmul %105, %107, %cst_32 {dimension_numbers = #tpu.dot_dimension_numbers<[1], [1], [0], [0], [0, 0, 1, 0], [], []>} : vector<8x8xbf16>, vector<8x8xbf16>, vector<8x8xf32> -> vector<8x8xf32>
    %111 = arith.addf %110, %17 : vector<8x8xf32>
    %cst_33 = arith.constant dense<0xFF800000> : vector<8xf32>
    %112 = vector.multi_reduction <maximumf>, %111, %cst_33 [1] : vector<8x8xf32> to vector<8xf32>
    %113 = vector.shape_cast %112 : vector<8xf32> to vector<8x1xf32>
    %114 = vector.broadcast %113 : vector<8x1xf32> to vector<8x8xf32>
    %115 = arith.subf %111, %114 : vector<8x8xf32>
    %116 = math.exp %115 : vector<8x8xf32>
    %cst_34 = arith.constant dense<0.000000e+00> : vector<8xf32>
    %117 = vector.multi_reduction <add>, %116, %cst_34 [1] : vector<8x8xf32> to vector<8xf32>
    %118 = vector.shape_cast %117 : vector<8xf32> to vector<8x1xf32>
    %119 = tpu.reciprocal %118 {approx = true} : vector<8x1xf32> -> vector<8x1xf32>
    %120 = vector.broadcast %119 : vector<8x1xf32> to vector<8x8xf32>
    %121 = arith.mulf %116, %120 : vector<8x8xf32>
    %122 = arith.truncf %121 : vector<8x8xf32> to vector<8x8xbf16>
    %cst_35 = arith.constant dense<0.000000e+00> : vector<8x8xf32>
    %123 = tpu.matmul %122, %109, %cst_35 {dimension_numbers = #tpu.dot_dimension_numbers<[1], [0], [0], [1], [0, 0, 1, 1], [], []>} : vector<8x8xbf16>, vector<8x8xbf16>, vector<8x8xf32> -> vector<8x8xf32>
    %124 = arith.truncf %123 : vector<8x8xf32> to vector<8x8xbf16>
    %125 = vector.extract_strided_slice %54 {offsets = [16, 0], sizes = [8, 32], strides = [1, 1]} : vector<32x32xbf16> to vector<8x32xbf16>
    %cst_36 = arith.constant dense<0.000000e+00> : vector<8x32xf32>
    %126 = tpu.matmul %124, %125, %cst_36 {dimension_numbers = #tpu.dot_dimension_numbers<[1], [0], [0], [1], [0, 0, 1, 1], [], []>} : vector<8x8xbf16>, vector<8x32xbf16>, vector<8x32xf32> -> vector<8x32xf32>
    %127 = arith.addf %103, %126 : vector<8x32xf32>
    %128 = vector.extract_strided_slice %52 {offsets = [0, 24], sizes = [8, 8], strides = [1, 1]} : vector<8x96xf32> to vector<8x8xf32>
    %129 = arith.truncf %128 : vector<8x8xf32> to vector<8x8xbf16>
    %130 = vector.extract_strided_slice %52 {offsets = [0, 56], sizes = [8, 8], strides = [1, 1]} : vector<8x96xf32> to vector<8x8xf32>
    %131 = arith.truncf %130 : vector<8x8xf32> to vector<8x8xbf16>
    %132 = vector.extract_strided_slice %52 {offsets = [0, 88], sizes = [8, 8], strides = [1, 1]} : vector<8x96xf32> to vector<8x8xf32>
    %133 = arith.truncf %132 : vector<8x8xf32> to vector<8x8xbf16>
    %cst_37 = arith.constant dense<0.000000e+00> : vector<8x8xf32>
    %134 = tpu.matmul %129, %131, %cst_37 {dimension_numbers = #tpu.dot_dimension_numbers<[1], [1], [0], [0], [0, 0, 1, 0], [], []>} : vector<8x8xbf16>, vector<8x8xbf16>, vector<8x8xf32> -> vector<8x8xf32>
    %135 = arith.addf %134, %17 : vector<8x8xf32>
    %cst_38 = arith.constant dense<0xFF800000> : vector<8xf32>
    %136 = vector.multi_reduction <maximumf>, %135, %cst_38 [1] : vector<8x8xf32> to vector<8xf32>
    %137 = vector.shape_cast %136 : vector<8xf32> to vector<8x1xf32>
    %138 = vector.broadcast %137 : vector<8x1xf32> to vector<8x8xf32>
    %139 = arith.subf %135, %138 : vector<8x8xf32>
    %140 = math.exp %139 : vector<8x8xf32>
    %cst_39 = arith.constant dense<0.000000e+00> : vector<8xf32>
    %141 = vector.multi_reduction <add>, %140, %cst_39 [1] : vector<8x8xf32> to vector<8xf32>
    %142 = vector.shape_cast %141 : vector<8xf32> to vector<8x1xf32>
    %143 = tpu.reciprocal %142 {approx = true} : vector<8x1xf32> -> vector<8x1xf32>
    %144 = vector.broadcast %143 : vector<8x1xf32> to vector<8x8xf32>
    %145 = arith.mulf %140, %144 : vector<8x8xf32>
    %146 = arith.truncf %145 : vector<8x8xf32> to vector<8x8xbf16>
    %cst_40 = arith.constant dense<0.000000e+00> : vector<8x8xf32>
    %147 = tpu.matmul %146, %133, %cst_40 {dimension_numbers = #tpu.dot_dimension_numbers<[1], [0], [0], [1], [0, 0, 1, 1], [], []>} : vector<8x8xbf16>, vector<8x8xbf16>, vector<8x8xf32> -> vector<8x8xf32>
    %148 = arith.truncf %147 : vector<8x8xf32> to vector<8x8xbf16>
    %149 = vector.extract_strided_slice %54 {offsets = [24, 0], sizes = [8, 32], strides = [1, 1]} : vector<32x32xbf16> to vector<8x32xbf16>
    %cst_41 = arith.constant dense<0.000000e+00> : vector<8x32xf32>
    %150 = tpu.matmul %148, %149, %cst_41 {dimension_numbers = #tpu.dot_dimension_numbers<[1], [0], [0], [1], [0, 0, 1, 1], [], []>} : vector<8x8xbf16>, vector<8x32xbf16>, vector<8x32xf32> -> vector<8x32xf32>
    %151 = arith.addf %127, %150 : vector<8x32xf32>
    %152 = arith.addf %11, %151 : vector<8x32xf32>
    %153 = vector.broadcast %21 : vector<1x32xf32> to vector<8x32xf32>
    %154 = arith.addf %152, %153 : vector<8x32xf32>
    %cst_42 = arith.constant dense<0.000000e+00> : vector<8xf32>
    %155 = vector.multi_reduction <add>, %154, %cst_42 [1] : vector<8x32xf32> to vector<8xf32>
    %156 = vector.shape_cast %155 : vector<8xf32> to vector<8x1xf32>
    %cst_43 = arith.constant 3.200000e+01 : f32
    %157 = vector.broadcast %cst_43 : f32 to vector<8x1xf32>
    %158 = arith.divf %156, %157 : vector<8x1xf32>
    %159 = vector.broadcast %158 : vector<8x1xf32> to vector<8x32xf32>
    %160 = arith.subf %154, %159 : vector<8x32xf32>
    %161 = arith.mulf %160, %160 : vector<8x32xf32>
    %cst_44 = arith.constant dense<0.000000e+00> : vector<8xf32>
    %162 = vector.multi_reduction <add>, %161, %cst_44 [1] : vector<8x32xf32> to vector<8xf32>
    %163 = vector.shape_cast %162 : vector<8xf32> to vector<8x1xf32>
    %cst_45 = arith.constant 3.200000e+01 : f32
    %164 = vector.broadcast %cst_45 : f32 to vector<8x1xf32>
    %165 = arith.divf %163, %164 : vector<8x1xf32>
    %166 = vector.broadcast %158 : vector<8x1xf32> to vector<8x32xf32>
    %167 = arith.subf %154, %166 : vector<8x32xf32>
    %cst_46 = arith.constant 9.99999974E-6 : f32
    %168 = vector.broadcast %cst_46 : f32 to vector<8x1xf32>
    %169 = arith.addf %165, %168 : vector<8x1xf32>
    %170 = math.rsqrt %169 : vector<8x1xf32>
    %171 = vector.broadcast %170 : vector<8x1xf32> to vector<8x32xf32>
    %172 = arith.mulf %167, %171 : vector<8x32xf32>
    %173 = vector.broadcast %25 : vector<1x32xf32> to vector<8x32xf32>
    %174 = arith.mulf %172, %173 : vector<8x32xf32>
    %175 = vector.broadcast %26 : vector<1x32xf32> to vector<8x32xf32>
    %176 = arith.addf %174, %175 : vector<8x32xf32>
    %177 = arith.truncf %176 : vector<8x32xf32> to vector<8x32xbf16>
    %c0_47 = arith.constant 0 : index
    %c0_48 = arith.constant 0 : index
    %c0_49 = arith.constant 0 : index
    %178 = vector.load %arg6[%c0_47, %c0_48, %c0_49] : memref<2x32x128xbf16, #tpu.memory_space<vmem>>, vector<1x32x128xbf16>
    %179 = vector.shape_cast %178 : vector<1x32x128xbf16> to vector<32x128xbf16>
    %cst_50 = arith.constant dense<0.000000e+00> : vector<8x128xf32>
    %180 = tpu.matmul %177, %179, %cst_50 {dimension_numbers = #tpu.dot_dimension_numbers<[1], [0], [0], [1], [0, 0, 1, 1], [], []>} : vector<8x32xbf16>, vector<32x128xbf16>, vector<8x128xf32> -> vector<8x128xf32>
    %181 = vector.broadcast %20 : vector<1x128xf32> to vector<8x128xf32>
    %182 = arith.addf %180, %181 : vector<8x128xf32>
    %cst_51 = arith.constant 0.000000e+00 : f32
    %183 = vector.broadcast %cst_51 : f32 to vector<8x128xf32>
    %184 = arith.maximumf %182, %183 : vector<8x128xf32>
    %185 = arith.truncf %184 : vector<8x128xf32> to vector<8x128xbf16>
    %c0_52 = arith.constant 0 : index
    %c0_53 = arith.constant 0 : index
    %c0_54 = arith.constant 0 : index
    %186 = vector.load %arg7[%c0_52, %c0_53, %c0_54] : memref<2x128x32xbf16, #tpu.memory_space<vmem>>, vector<1x128x32xbf16>
    %187 = vector.shape_cast %186 : vector<1x128x32xbf16> to vector<128x32xbf16>
    %cst_55 = arith.constant dense<0.000000e+00> : vector<8x32xf32>
    %188 = tpu.matmul %185, %187, %cst_55 {dimension_numbers = #tpu.dot_dimension_numbers<[1], [0], [0], [1], [0, 0, 1, 1], [], []>} : vector<8x128xbf16>, vector<128x32xbf16>, vector<8x32xf32> -> vector<8x32xf32>
    %189 = vector.broadcast %22 : vector<1x32xf32> to vector<8x32xf32>
    %190 = arith.addf %188, %189 : vector<8x32xf32>
    %191 = arith.addf %154, %190 : vector<8x32xf32>
    %c1 = arith.constant 1 : index
    %c0_56 = arith.constant 0 : index
    %c0_57 = arith.constant 0 : index
    %192 = vector.load %arg8[%c1, %c0_56, %c0_57] : memref<2x8x128xf32, #tpu.memory_space<vmem>>, vector<1x8x128xf32>
    %193 = vector.shape_cast %192 : vector<1x8x128xf32> to vector<8x128xf32>
    %194 = vector.extract_strided_slice %193 {offsets = [0, 0], sizes = [1, 128], strides = [1, 1]} : vector<8x128xf32> to vector<1x128xf32>
    %195 = vector.extract_strided_slice %193 {offsets = [1, 0], sizes = [1, 32], strides = [1, 1]} : vector<8x128xf32> to vector<1x32xf32>
    %196 = vector.extract_strided_slice %193 {offsets = [2, 0], sizes = [1, 32], strides = [1, 1]} : vector<8x128xf32> to vector<1x32xf32>
    %197 = vector.extract_strided_slice %193 {offsets = [3, 0], sizes = [1, 32], strides = [1, 1]} : vector<8x128xf32> to vector<1x32xf32>
    %198 = vector.extract_strided_slice %193 {offsets = [4, 0], sizes = [1, 32], strides = [1, 1]} : vector<8x128xf32> to vector<1x32xf32>
    %199 = vector.extract_strided_slice %193 {offsets = [5, 0], sizes = [1, 32], strides = [1, 1]} : vector<8x128xf32> to vector<1x32xf32>
    %200 = vector.extract_strided_slice %193 {offsets = [6, 0], sizes = [1, 32], strides = [1, 1]} : vector<8x128xf32> to vector<1x32xf32>
    %cst_58 = arith.constant dense<0.000000e+00> : vector<8xf32>
    %201 = vector.multi_reduction <add>, %191, %cst_58 [1] : vector<8x32xf32> to vector<8xf32>
    %202 = vector.shape_cast %201 : vector<8xf32> to vector<8x1xf32>
    %cst_59 = arith.constant 3.200000e+01 : f32
    %203 = vector.broadcast %cst_59 : f32 to vector<8x1xf32>
    %204 = arith.divf %202, %203 : vector<8x1xf32>
    %205 = vector.broadcast %204 : vector<8x1xf32> to vector<8x32xf32>
    %206 = arith.subf %191, %205 : vector<8x32xf32>
    %207 = arith.mulf %206, %206 : vector<8x32xf32>
    %cst_60 = arith.constant dense<0.000000e+00> : vector<8xf32>
    %208 = vector.multi_reduction <add>, %207, %cst_60 [1] : vector<8x32xf32> to vector<8xf32>
    %209 = vector.shape_cast %208 : vector<8xf32> to vector<8x1xf32>
    %cst_61 = arith.constant 3.200000e+01 : f32
    %210 = vector.broadcast %cst_61 : f32 to vector<8x1xf32>
    %211 = arith.divf %209, %210 : vector<8x1xf32>
    %212 = vector.broadcast %204 : vector<8x1xf32> to vector<8x32xf32>
    %213 = arith.subf %191, %212 : vector<8x32xf32>
    %cst_62 = arith.constant 9.99999974E-6 : f32
    %214 = vector.broadcast %cst_62 : f32 to vector<8x1xf32>
    %215 = arith.addf %211, %214 : vector<8x1xf32>
    %216 = math.rsqrt %215 : vector<8x1xf32>
    %217 = vector.broadcast %216 : vector<8x1xf32> to vector<8x32xf32>
    %218 = arith.mulf %213, %217 : vector<8x32xf32>
    %219 = vector.broadcast %197 : vector<1x32xf32> to vector<8x32xf32>
    %220 = arith.mulf %218, %219 : vector<8x32xf32>
    %221 = vector.broadcast %198 : vector<1x32xf32> to vector<8x32xf32>
    %222 = arith.addf %220, %221 : vector<8x32xf32>
    %223 = arith.truncf %222 : vector<8x32xf32> to vector<8x32xbf16>
    %c1_63 = arith.constant 1 : index
    %c0_64 = arith.constant 0 : index
    %c0_65 = arith.constant 0 : index
    %224 = vector.load %arg4[%c1_63, %c0_64, %c0_65] : memref<2x32x96xbf16, #tpu.memory_space<vmem>>, vector<1x32x96xbf16>
    %225 = vector.shape_cast %224 : vector<1x32x96xbf16> to vector<32x96xbf16>
    %cst_66 = arith.constant dense<0.000000e+00> : vector<8x96xf32>
    %226 = tpu.matmul %223, %225, %cst_66 {dimension_numbers = #tpu.dot_dimension_numbers<[1], [0], [0], [1], [0, 0, 1, 1], [], []>} : vector<8x32xbf16>, vector<32x96xbf16>, vector<8x96xf32> -> vector<8x96xf32>
    %c1_67 = arith.constant 1 : index
    %c0_68 = arith.constant 0 : index
    %c0_69 = arith.constant 0 : index
    %227 = vector.load %arg5[%c1_67, %c0_68, %c0_69] : memref<2x32x32xbf16, #tpu.memory_space<vmem>>, vector<1x32x32xbf16>
    %228 = vector.shape_cast %227 : vector<1x32x32xbf16> to vector<32x32xbf16>
    %cst_70 = arith.constant 0.000000e+00 : f32
    %229 = vector.broadcast %cst_70 : f32 to vector<8x32xf32>
    %230 = vector.extract_strided_slice %226 {offsets = [0, 0], sizes = [8, 8], strides = [1, 1]} : vector<8x96xf32> to vector<8x8xf32>
    %231 = arith.truncf %230 : vector<8x8xf32> to vector<8x8xbf16>
    %232 = vector.extract_strided_slice %226 {offsets = [0, 32], sizes = [8, 8], strides = [1, 1]} : vector<8x96xf32> to vector<8x8xf32>
    %233 = arith.truncf %232 : vector<8x8xf32> to vector<8x8xbf16>
    %234 = vector.extract_strided_slice %226 {offsets = [0, 64], sizes = [8, 8], strides = [1, 1]} : vector<8x96xf32> to vector<8x8xf32>
    %235 = arith.truncf %234 : vector<8x8xf32> to vector<8x8xbf16>
    %cst_71 = arith.constant dense<0.000000e+00> : vector<8x8xf32>
    %236 = tpu.matmul %231, %233, %cst_71 {dimension_numbers = #tpu.dot_dimension_numbers<[1], [1], [0], [0], [0, 0, 1, 0], [], []>} : vector<8x8xbf16>, vector<8x8xbf16>, vector<8x8xf32> -> vector<8x8xf32>
    %237 = arith.addf %236, %17 : vector<8x8xf32>
    %cst_72 = arith.constant dense<0xFF800000> : vector<8xf32>
    %238 = vector.multi_reduction <maximumf>, %237, %cst_72 [1] : vector<8x8xf32> to vector<8xf32>
    %239 = vector.shape_cast %238 : vector<8xf32> to vector<8x1xf32>
    %240 = vector.broadcast %239 : vector<8x1xf32> to vector<8x8xf32>
    %241 = arith.subf %237, %240 : vector<8x8xf32>
    %242 = math.exp %241 : vector<8x8xf32>
    %cst_73 = arith.constant dense<0.000000e+00> : vector<8xf32>
    %243 = vector.multi_reduction <add>, %242, %cst_73 [1] : vector<8x8xf32> to vector<8xf32>
    %244 = vector.shape_cast %243 : vector<8xf32> to vector<8x1xf32>
    %245 = tpu.reciprocal %244 {approx = true} : vector<8x1xf32> -> vector<8x1xf32>
    %246 = vector.broadcast %245 : vector<8x1xf32> to vector<8x8xf32>
    %247 = arith.mulf %242, %246 : vector<8x8xf32>
    %248 = arith.truncf %247 : vector<8x8xf32> to vector<8x8xbf16>
    %cst_74 = arith.constant dense<0.000000e+00> : vector<8x8xf32>
    %249 = tpu.matmul %248, %235, %cst_74 {dimension_numbers = #tpu.dot_dimension_numbers<[1], [0], [0], [1], [0, 0, 1, 1], [], []>} : vector<8x8xbf16>, vector<8x8xbf16>, vector<8x8xf32> -> vector<8x8xf32>
    %250 = arith.truncf %249 : vector<8x8xf32> to vector<8x8xbf16>
    %251 = vector.extract_strided_slice %228 {offsets = [0, 0], sizes = [8, 32], strides = [1, 1]} : vector<32x32xbf16> to vector<8x32xbf16>
    %cst_75 = arith.constant dense<0.000000e+00> : vector<8x32xf32>
    %252 = tpu.matmul %250, %251, %cst_75 {dimension_numbers = #tpu.dot_dimension_numbers<[1], [0], [0], [1], [0, 0, 1, 1], [], []>} : vector<8x8xbf16>, vector<8x32xbf16>, vector<8x32xf32> -> vector<8x32xf32>
    %253 = arith.addf %229, %252 : vector<8x32xf32>
    %254 = vector.extract_strided_slice %226 {offsets = [0, 8], sizes = [8, 8], strides = [1, 1]} : vector<8x96xf32> to vector<8x8xf32>
    %255 = arith.truncf %254 : vector<8x8xf32> to vector<8x8xbf16>
    %256 = vector.extract_strided_slice %226 {offsets = [0, 40], sizes = [8, 8], strides = [1, 1]} : vector<8x96xf32> to vector<8x8xf32>
    %257 = arith.truncf %256 : vector<8x8xf32> to vector<8x8xbf16>
    %258 = vector.extract_strided_slice %226 {offsets = [0, 72], sizes = [8, 8], strides = [1, 1]} : vector<8x96xf32> to vector<8x8xf32>
    %259 = arith.truncf %258 : vector<8x8xf32> to vector<8x8xbf16>
    %cst_76 = arith.constant dense<0.000000e+00> : vector<8x8xf32>
    %260 = tpu.matmul %255, %257, %cst_76 {dimension_numbers = #tpu.dot_dimension_numbers<[1], [1], [0], [0], [0, 0, 1, 0], [], []>} : vector<8x8xbf16>, vector<8x8xbf16>, vector<8x8xf32> -> vector<8x8xf32>
    %261 = arith.addf %260, %17 : vector<8x8xf32>
    %cst_77 = arith.constant dense<0xFF800000> : vector<8xf32>
    %262 = vector.multi_reduction <maximumf>, %261, %cst_77 [1] : vector<8x8xf32> to vector<8xf32>
    %263 = vector.shape_cast %262 : vector<8xf32> to vector<8x1xf32>
    %264 = vector.broadcast %263 : vector<8x1xf32> to vector<8x8xf32>
    %265 = arith.subf %261, %264 : vector<8x8xf32>
    %266 = math.exp %265 : vector<8x8xf32>
    %cst_78 = arith.constant dense<0.000000e+00> : vector<8xf32>
    %267 = vector.multi_reduction <add>, %266, %cst_78 [1] : vector<8x8xf32> to vector<8xf32>
    %268 = vector.shape_cast %267 : vector<8xf32> to vector<8x1xf32>
    %269 = tpu.reciprocal %268 {approx = true} : vector<8x1xf32> -> vector<8x1xf32>
    %270 = vector.broadcast %269 : vector<8x1xf32> to vector<8x8xf32>
    %271 = arith.mulf %266, %270 : vector<8x8xf32>
    %272 = arith.truncf %271 : vector<8x8xf32> to vector<8x8xbf16>
    %cst_79 = arith.constant dense<0.000000e+00> : vector<8x8xf32>
    %273 = tpu.matmul %272, %259, %cst_79 {dimension_numbers = #tpu.dot_dimension_numbers<[1], [0], [0], [1], [0, 0, 1, 1], [], []>} : vector<8x8xbf16>, vector<8x8xbf16>, vector<8x8xf32> -> vector<8x8xf32>
    %274 = arith.truncf %273 : vector<8x8xf32> to vector<8x8xbf16>
    %275 = vector.extract_strided_slice %228 {offsets = [8, 0], sizes = [8, 32], strides = [1, 1]} : vector<32x32xbf16> to vector<8x32xbf16>
    %cst_80 = arith.constant dense<0.000000e+00> : vector<8x32xf32>
    %276 = tpu.matmul %274, %275, %cst_80 {dimension_numbers = #tpu.dot_dimension_numbers<[1], [0], [0], [1], [0, 0, 1, 1], [], []>} : vector<8x8xbf16>, vector<8x32xbf16>, vector<8x32xf32> -> vector<8x32xf32>
    %277 = arith.addf %253, %276 : vector<8x32xf32>
    %278 = vector.extract_strided_slice %226 {offsets = [0, 16], sizes = [8, 8], strides = [1, 1]} : vector<8x96xf32> to vector<8x8xf32>
    %279 = arith.truncf %278 : vector<8x8xf32> to vector<8x8xbf16>
    %280 = vector.extract_strided_slice %226 {offsets = [0, 48], sizes = [8, 8], strides = [1, 1]} : vector<8x96xf32> to vector<8x8xf32>
    %281 = arith.truncf %280 : vector<8x8xf32> to vector<8x8xbf16>
    %282 = vector.extract_strided_slice %226 {offsets = [0, 80], sizes = [8, 8], strides = [1, 1]} : vector<8x96xf32> to vector<8x8xf32>
    %283 = arith.truncf %282 : vector<8x8xf32> to vector<8x8xbf16>
    %cst_81 = arith.constant dense<0.000000e+00> : vector<8x8xf32>
    %284 = tpu.matmul %279, %281, %cst_81 {dimension_numbers = #tpu.dot_dimension_numbers<[1], [1], [0], [0], [0, 0, 1, 0], [], []>} : vector<8x8xbf16>, vector<8x8xbf16>, vector<8x8xf32> -> vector<8x8xf32>
    %285 = arith.addf %284, %17 : vector<8x8xf32>
    %cst_82 = arith.constant dense<0xFF800000> : vector<8xf32>
    %286 = vector.multi_reduction <maximumf>, %285, %cst_82 [1] : vector<8x8xf32> to vector<8xf32>
    %287 = vector.shape_cast %286 : vector<8xf32> to vector<8x1xf32>
    %288 = vector.broadcast %287 : vector<8x1xf32> to vector<8x8xf32>
    %289 = arith.subf %285, %288 : vector<8x8xf32>
    %290 = math.exp %289 : vector<8x8xf32>
    %cst_83 = arith.constant dense<0.000000e+00> : vector<8xf32>
    %291 = vector.multi_reduction <add>, %290, %cst_83 [1] : vector<8x8xf32> to vector<8xf32>
    %292 = vector.shape_cast %291 : vector<8xf32> to vector<8x1xf32>
    %293 = tpu.reciprocal %292 {approx = true} : vector<8x1xf32> -> vector<8x1xf32>
    %294 = vector.broadcast %293 : vector<8x1xf32> to vector<8x8xf32>
    %295 = arith.mulf %290, %294 : vector<8x8xf32>
    %296 = arith.truncf %295 : vector<8x8xf32> to vector<8x8xbf16>
    %cst_84 = arith.constant dense<0.000000e+00> : vector<8x8xf32>
    %297 = tpu.matmul %296, %283, %cst_84 {dimension_numbers = #tpu.dot_dimension_numbers<[1], [0], [0], [1], [0, 0, 1, 1], [], []>} : vector<8x8xbf16>, vector<8x8xbf16>, vector<8x8xf32> -> vector<8x8xf32>
    %298 = arith.truncf %297 : vector<8x8xf32> to vector<8x8xbf16>
    %299 = vector.extract_strided_slice %228 {offsets = [16, 0], sizes = [8, 32], strides = [1, 1]} : vector<32x32xbf16> to vector<8x32xbf16>
    %cst_85 = arith.constant dense<0.000000e+00> : vector<8x32xf32>
    %300 = tpu.matmul %298, %299, %cst_85 {dimension_numbers = #tpu.dot_dimension_numbers<[1], [0], [0], [1], [0, 0, 1, 1], [], []>} : vector<8x8xbf16>, vector<8x32xbf16>, vector<8x32xf32> -> vector<8x32xf32>
    %301 = arith.addf %277, %300 : vector<8x32xf32>
    %302 = vector.extract_strided_slice %226 {offsets = [0, 24], sizes = [8, 8], strides = [1, 1]} : vector<8x96xf32> to vector<8x8xf32>
    %303 = arith.truncf %302 : vector<8x8xf32> to vector<8x8xbf16>
    %304 = vector.extract_strided_slice %226 {offsets = [0, 56], sizes = [8, 8], strides = [1, 1]} : vector<8x96xf32> to vector<8x8xf32>
    %305 = arith.truncf %304 : vector<8x8xf32> to vector<8x8xbf16>
    %306 = vector.extract_strided_slice %226 {offsets = [0, 88], sizes = [8, 8], strides = [1, 1]} : vector<8x96xf32> to vector<8x8xf32>
    %307 = arith.truncf %306 : vector<8x8xf32> to vector<8x8xbf16>
    %cst_86 = arith.constant dense<0.000000e+00> : vector<8x8xf32>
    %308 = tpu.matmul %303, %305, %cst_86 {dimension_numbers = #tpu.dot_dimension_numbers<[1], [1], [0], [0], [0, 0, 1, 0], [], []>} : vector<8x8xbf16>, vector<8x8xbf16>, vector<8x8xf32> -> vector<8x8xf32>
    %309 = arith.addf %308, %17 : vector<8x8xf32>
    %cst_87 = arith.constant dense<0xFF800000> : vector<8xf32>
    %310 = vector.multi_reduction <maximumf>, %309, %cst_87 [1] : vector<8x8xf32> to vector<8xf32>
    %311 = vector.shape_cast %310 : vector<8xf32> to vector<8x1xf32>
    %312 = vector.broadcast %311 : vector<8x1xf32> to vector<8x8xf32>
    %313 = arith.subf %309, %312 : vector<8x8xf32>
    %314 = math.exp %313 : vector<8x8xf32>
    %cst_88 = arith.constant dense<0.000000e+00> : vector<8xf32>
    %315 = vector.multi_reduction <add>, %314, %cst_88 [1] : vector<8x8xf32> to vector<8xf32>
    %316 = vector.shape_cast %315 : vector<8xf32> to vector<8x1xf32>
    %317 = tpu.reciprocal %316 {approx = true} : vector<8x1xf32> -> vector<8x1xf32>
    %318 = vector.broadcast %317 : vector<8x1xf32> to vector<8x8xf32>
    %319 = arith.mulf %314, %318 : vector<8x8xf32>
    %320 = arith.truncf %319 : vector<8x8xf32> to vector<8x8xbf16>
    %cst_89 = arith.constant dense<0.000000e+00> : vector<8x8xf32>
    %321 = tpu.matmul %320, %307, %cst_89 {dimension_numbers = #tpu.dot_dimension_numbers<[1], [0], [0], [1], [0, 0, 1, 1], [], []>} : vector<8x8xbf16>, vector<8x8xbf16>, vector<8x8xf32> -> vector<8x8xf32>
    %322 = arith.truncf %321 : vector<8x8xf32> to vector<8x8xbf16>
    %323 = vector.extract_strided_slice %228 {offsets = [24, 0], sizes = [8, 32], strides = [1, 1]} : vector<32x32xbf16> to vector<8x32xbf16>
    %cst_90 = arith.constant dense<0.000000e+00> : vector<8x32xf32>
    %324 = tpu.matmul %322, %323, %cst_90 {dimension_numbers = #tpu.dot_dimension_numbers<[1], [0], [0], [1], [0, 0, 1, 1], [], []>} : vector<8x8xbf16>, vector<8x32xbf16>, vector<8x32xf32> -> vector<8x32xf32>
    %325 = arith.addf %301, %324 : vector<8x32xf32>
    %326 = arith.addf %191, %325 : vector<8x32xf32>
    %327 = vector.broadcast %195 : vector<1x32xf32> to vector<8x32xf32>
    %328 = arith.addf %326, %327 : vector<8x32xf32>
    %cst_91 = arith.constant dense<0.000000e+00> : vector<8xf32>
    %329 = vector.multi_reduction <add>, %328, %cst_91 [1] : vector<8x32xf32> to vector<8xf32>
    %330 = vector.shape_cast %329 : vector<8xf32> to vector<8x1xf32>
    %cst_92 = arith.constant 3.200000e+01 : f32
    %331 = vector.broadcast %cst_92 : f32 to vector<8x1xf32>
    %332 = arith.divf %330, %331 : vector<8x1xf32>
    %333 = vector.broadcast %332 : vector<8x1xf32> to vector<8x32xf32>
    %334 = arith.subf %328, %333 : vector<8x32xf32>
    %335 = arith.mulf %334, %334 : vector<8x32xf32>
    %cst_93 = arith.constant dense<0.000000e+00> : vector<8xf32>
    %336 = vector.multi_reduction <add>, %335, %cst_93 [1] : vector<8x32xf32> to vector<8xf32>
    %337 = vector.shape_cast %336 : vector<8xf32> to vector<8x1xf32>
    %cst_94 = arith.constant 3.200000e+01 : f32
    %338 = vector.broadcast %cst_94 : f32 to vector<8x1xf32>
    %339 = arith.divf %337, %338 : vector<8x1xf32>
    %340 = vector.broadcast %332 : vector<8x1xf32> to vector<8x32xf32>
    %341 = arith.subf %328, %340 : vector<8x32xf32>
    %cst_95 = arith.constant 9.99999974E-6 : f32
    %342 = vector.broadcast %cst_95 : f32 to vector<8x1xf32>
    %343 = arith.addf %339, %342 : vector<8x1xf32>
    %344 = math.rsqrt %343 : vector<8x1xf32>
    %345 = vector.broadcast %344 : vector<8x1xf32> to vector<8x32xf32>
    %346 = arith.mulf %341, %345 : vector<8x32xf32>
    %347 = vector.broadcast %199 : vector<1x32xf32> to vector<8x32xf32>
    %348 = arith.mulf %346, %347 : vector<8x32xf32>
    %349 = vector.broadcast %200 : vector<1x32xf32> to vector<8x32xf32>
    %350 = arith.addf %348, %349 : vector<8x32xf32>
    %351 = arith.truncf %350 : vector<8x32xf32> to vector<8x32xbf16>
    %c1_96 = arith.constant 1 : index
    %c0_97 = arith.constant 0 : index
    %c0_98 = arith.constant 0 : index
    %352 = vector.load %arg6[%c1_96, %c0_97, %c0_98] : memref<2x32x128xbf16, #tpu.memory_space<vmem>>, vector<1x32x128xbf16>
    %353 = vector.shape_cast %352 : vector<1x32x128xbf16> to vector<32x128xbf16>
    %cst_99 = arith.constant dense<0.000000e+00> : vector<8x128xf32>
    %354 = tpu.matmul %351, %353, %cst_99 {dimension_numbers = #tpu.dot_dimension_numbers<[1], [0], [0], [1], [0, 0, 1, 1], [], []>} : vector<8x32xbf16>, vector<32x128xbf16>, vector<8x128xf32> -> vector<8x128xf32>
    %355 = vector.broadcast %194 : vector<1x128xf32> to vector<8x128xf32>
    %356 = arith.addf %354, %355 : vector<8x128xf32>
    %cst_100 = arith.constant 0.000000e+00 : f32
    %357 = vector.broadcast %cst_100 : f32 to vector<8x128xf32>
    %358 = arith.maximumf %356, %357 : vector<8x128xf32>
    %359 = arith.truncf %358 : vector<8x128xf32> to vector<8x128xbf16>
    %c1_101 = arith.constant 1 : index
    %c0_102 = arith.constant 0 : index
    %c0_103 = arith.constant 0 : index
    %360 = vector.load %arg7[%c1_101, %c0_102, %c0_103] : memref<2x128x32xbf16, #tpu.memory_space<vmem>>, vector<1x128x32xbf16>
    %361 = vector.shape_cast %360 : vector<1x128x32xbf16> to vector<128x32xbf16>
    %cst_104 = arith.constant dense<0.000000e+00> : vector<8x32xf32>
    %362 = tpu.matmul %359, %361, %cst_104 {dimension_numbers = #tpu.dot_dimension_numbers<[1], [0], [0], [1], [0, 0, 1, 1], [], []>} : vector<8x128xbf16>, vector<128x32xbf16>, vector<8x32xf32> -> vector<8x32xf32>
    %363 = vector.broadcast %196 : vector<1x32xf32> to vector<8x32xf32>
    %364 = arith.addf %362, %363 : vector<8x32xf32>
    %365 = arith.addf %328, %364 : vector<8x32xf32>
    %c0_105 = arith.constant 0 : index
    %c0_106 = arith.constant 0 : index
    %366 = vector.load %arg9[%c0_105, %c0_106] : memref<40x128xbf16, #tpu.memory_space<vmem>>, vector<32x128xbf16>
    %c32 = arith.constant 32 : index
    %c0_107 = arith.constant 0 : index
    %367 = vector.load %arg9[%c32, %c0_107] : memref<40x128xbf16, #tpu.memory_space<vmem>>, vector<1x128xbf16>
    %368 = arith.extf %367 : vector<1x128xbf16> to vector<1x128xf32>
    %369 = arith.truncf %365 : vector<8x32xf32> to vector<8x32xbf16>
    %cst_108 = arith.constant dense<0.000000e+00> : vector<8x128xf32>
    %370 = tpu.matmul %369, %366, %cst_108 {dimension_numbers = #tpu.dot_dimension_numbers<[1], [0], [0], [1], [0, 0, 1, 1], [], []>} : vector<8x32xbf16>, vector<32x128xbf16>, vector<8x128xf32> -> vector<8x128xf32>
    %371 = vector.broadcast %368 : vector<1x128xf32> to vector<8x128xf32>
    %372 = arith.addf %370, %371 : vector<8x128xf32>
    %c0_109 = arith.constant 0 : index
    %c0_110 = arith.constant 0 : index
    %373 = vector.load %arg10[%c0_109, %c0_110] : memref<8x128xf32, #tpu.memory_space<vmem>>, vector<8x128xf32>
    tpu.vector_store %arg10[%c0_109, %c0_110], %372 {strides = array<i32>} : memref<8x128xf32, #tpu.memory_space<vmem>>, vector<8x128xf32>,
    %374 = tpu.iota {dimensions = array<i32: 1>} : vector<8x128xi32>
    %c0_111 = arith.constant 0 : index
    %c0_112 = arith.constant 0 : index
    %375 = vector.load %arg2[%c0_111, %c0_112] : memref<8x1xi32, #tpu.memory_space<vmem>>, vector<8x1xi32>
    %c64_i32 = arith.constant 64 : i32
    %376 = vector.broadcast %c64_i32 : i32 to vector<8x128xi32>
    %377 = arith.cmpi slt, %374, %376 : vector<8x128xi32>
    %cst_113 = arith.constant -1.000000e+30 : f32
    %378 = vector.broadcast %cst_113 : f32 to vector<8x128xf32>
    %379 = arith.select %377, %372, %378 : vector<8x128xi1>, vector<8x128xf32>
    %cst_114 = arith.constant dense<0xFF800000> : vector<8xf32>
    %380 = vector.multi_reduction <maximumf>, %379, %cst_114 [1] : vector<8x128xf32> to vector<8xf32>
    %381 = vector.shape_cast %380 : vector<8xf32> to vector<8x1xf32>
    %382 = vector.broadcast %381 : vector<8x1xf32> to vector<8x128xf32>
    %383 = arith.subf %379, %382 : vector<8x128xf32>
    %384 = math.exp %383 : vector<8x128xf32>
    %cst_115 = arith.constant dense<0.000000e+00> : vector<8xf32>
    %385 = vector.multi_reduction <add>, %384, %cst_115 [1] : vector<8x128xf32> to vector<8xf32>
    %386 = vector.shape_cast %385 : vector<8xf32> to vector<8x1xf32>
    %387 = math.log %386 : vector<8x1xf32>
    %388 = arith.addf %381, %387 : vector<8x1xf32>
    %389 = vector.broadcast %375 : vector<8x1xi32> to vector<8x128xi32>
    %390 = arith.cmpi eq, %374, %389 : vector<8x128xi32>
    %cst_116 = arith.constant 0.000000e+00 : f32
    %391 = vector.broadcast %cst_116 : f32 to vector<8x128xf32>
    %392 = arith.select %390, %372, %391 : vector<8x128xi1>, vector<8x128xf32>
    %cst_117 = arith.constant dense<0.000000e+00> : vector<8xf32>
    %393 = vector.multi_reduction <add>, %392, %cst_117 [1] : vector<8x128xf32> to vector<8xf32>
    %394 = vector.shape_cast %393 : vector<8xf32> to vector<8x1xf32>
    %395 = arith.subf %388, %394 : vector<8x1xf32>
    %c0_118 = arith.constant 0 : index
    %c0_119 = arith.constant 0 : index
    %396 = vector.load %arg11[%c0_118, %c0_119] : memref<8x1xf32, #tpu.memory_space<vmem>>, vector<8x1xf32>
    tpu.vector_store %arg11[%c0_118, %c0_119], %395 {strides = array<i32>} : memref<8x1xf32, #tpu.memory_space<vmem>>, vector<8x1xf32>,
    return
  }
  func.func @transform_0(%arg0: i32) -> (i32, i32) {
    %c0_i32 = arith.constant 0 : i32
    %c0_i32_0 = arith.constant 0 : i32
    return %arg0, %c0_i32 : i32, i32
  }
  func.func @transform_1(%arg0: i32) -> (i32, i32) {
    %c0_i32 = arith.constant 0 : i32
    %c0_i32_0 = arith.constant 0 : i32
    return %arg0, %c0_i32 : i32, i32
  }
  func.func @transform_2(%arg0: i32) -> (i32, i32) {
    %c0_i32 = arith.constant 0 : i32
    %c0_i32_0 = arith.constant 0 : i32
    %c0_i32_1 = arith.constant 0 : i32
    return %c0_i32, %c0_i32_0 : i32, i32
  }
  func.func @transform_3(%arg0: i32) -> (i32, i32, i32) {
    %c0_i32 = arith.constant 0 : i32
    %c0_i32_0 = arith.constant 0 : i32
    %c0_i32_1 = arith.constant 0 : i32
    %c0_i32_2 = arith.constant 0 : i32
    return %c0_i32, %c0_i32_0, %c0_i32_1 : i32, i32, i32
  }
  func.func @transform_4(%arg0: i32) -> (i32, i32, i32) {
    %c0_i32 = arith.constant 0 : i32
    %c0_i32_0 = arith.constant 0 : i32
    %c0_i32_1 = arith.constant 0 : i32
    %c0_i32_2 = arith.constant 0 : i32
    return %c0_i32, %c0_i32_0, %c0_i32_1 : i32, i32, i32
  }
  func.func @transform_5(%arg0: i32) -> (i32, i32, i32) {
    %c0_i32 = arith.constant 0 : i32
    %c0_i32_0 = arith.constant 0 : i32
    %c0_i32_1 = arith.constant 0 : i32
    %c0_i32_2 = arith.constant 0 : i32
    return %c0_i32, %c0_i32_0, %c0_i32_1 : i32, i32, i32
  }
  func.func @transform_6(%arg0: i32) -> (i32, i32, i32) {
    %c0_i32 = arith.constant 0 : i32
    %c0_i32_0 = arith.constant 0 : i32
    %c0_i32_1 = arith.constant 0 : i32
    %c0_i32_2 = arith.constant 0 : i32
    return %c0_i32, %c0_i32_0, %c0_i32_1 : i32, i32, i32
  }
  func.func @transform_7(%arg0: i32) -> (i32, i32, i32) {
    %c0_i32 = arith.constant 0 : i32
    %c0_i32_0 = arith.constant 0 : i32
    %c0_i32_1 = arith.constant 0 : i32
    %c0_i32_2 = arith.constant 0 : i32
    return %c0_i32, %c0_i32_0, %c0_i32_1 : i32, i32, i32
  }
  func.func @transform_8(%arg0: i32) -> (i32, i32) {
    %c0_i32 = arith.constant 0 : i32
    %c0_i32_0 = arith.constant 0 : i32
    %c0_i32_1 = arith.constant 0 : i32
    return %c0_i32, %c0_i32_0 : i32, i32
  }
  func.func @transform_9(%arg0: i32) -> (i32, i32) {
    %c0_i32 = arith.constant 0 : i32
    %c0_i32_0 = arith.constant 0 : i32
    return %arg0, %c0_i32 : i32, i32
  }
  func.func @transform_10(%arg0: i32) -> (i32, i32) {
    %c0_i32 = arith.constant 0 : i32
    %c0_i32_0 = arith.constant 0 : i32
    return %arg0, %c0_i32 : i32, i32
  }
}

</mosaic_0001>

<llo_original>
// kernel: forward.1
$region0: #{forward.1}
  #allocation0 [shape = 'u32[]', space=smem, size = 0x4, offset = 0x4, fixed_abs, tag = 'smem constant byte address 0x4 - core index']
  #allocation1 [shape = 'u32[144,128]{1,0:T(1,128)}', space=vmem, size = 0x12000, scoped, tag = 'internal scratch']
  %s0 = inlined_call_operand.vmem [shape: s32[16,1], index: 0, kind: input, shape index: {}]
  %s1 = inlined_call_operand.vmem [shape: s32[16,1], index: 1, kind: input, shape index: {}]
  %s2 = inlined_call_operand.vmem [shape: bf16[72,32], index: 2, kind: input, shape index: {}]
  %s3 = inlined_call_operand.vmem [shape: bf16[2,32,96], index: 3, kind: input, shape index: {}]
  %s4 = inlined_call_operand.vmem [shape: bf16[2,32,32], index: 4, kind: input, shape index: {}]
  %s5 = inlined_call_operand.vmem [shape: bf16[2,32,128], index: 5, kind: input, shape index: {}]
  %s6 = inlined_call_operand.vmem [shape: bf16[2,128,32], index: 6, kind: input, shape index: {}]
  %s7 = inlined_call_operand.vmem [shape: f32[2,8,128], index: 7, kind: input, shape index: {}]
  %s8 = inlined_call_operand.vmem [shape: bf16[40,128], index: 8, kind: input, shape index: {}]
  %s9 = inlined_call_operand.vmem [shape: f32[16,128], index: 9, kind: output, shape index: {0}]
  %s10 = inlined_call_operand.vmem [shape: f32[16,1], index: 10, kind: output, shape index: {1}]
  %11 = xla_tuple %s9, %s10
  %s12 = sld [smem:[#allocation0]]
  $region77: #{forward.1} parent=0
    _
  %s14 = ssub.s32 1, %s12
  %s15 = scalar_select 0, %s14, %s12
  loop: start=0, step=1, limit=4
  $region2: #{forward.1} parent=0 // loop_pre_header
    _
  $region3: #{forward.1} parent=0 // loop_header
    %s17 = sphi 0, %s21
    %p18 = scmp.ge.s32.totalorder %s17, 4
    %s27 = sphi 0, %s29
    %s30 = sphi 0, %s27
    %s31 = sphi 0, %s30
    %s47 = sphi 0, %s31
    %s53 = sphi 0, %s55
    %s56 = sphi 0, %s53
    %s57 = sphi 0, %s56
    %s73 = sphi 0, %s57
    %s77 = sphi 0, %s77
    %s79 = sphi 0, %s77
    %s80 = sphi 0, %s79
    %s94 = sphi 0, %s80
    %s98 = sphi 0, %s98
    %s100 = sphi 0, %s98
    %s101 = sphi 0, %s100
    %s115 = sphi 0, %s101
    %s119 = sphi 0, %s119
    %s121 = sphi 0, %s119
    %s122 = sphi 0, %s121
    %s136 = sphi 0, %s122
    %s140 = sphi 0, %s140
    %s142 = sphi 0, %s140
    %s143 = sphi 0, %s142
    %s157 = sphi 0, %s143
    %s161 = sphi 0, %s161
    %s163 = sphi 0, %s161
    %s164 = sphi 0, %s163
    %s178 = sphi 0, %s164
    %s182 = sphi 0, %s182
    %s184 = sphi 0, %s182
    %s185 = sphi 0, %s184
    %s199 = sphi 0, %s185
    %s203 = sphi 0, %s203
    %s205 = sphi 0, %s203
    %s206 = sphi 0, %s205
    %s220 = sphi 0, %s206
    %s226 = sphi 0, %s228
    %s229 = sphi 0, %s226
    %s230 = sphi 0, %s229
    %s246 = sphi 0, %s230
    %s252 = sphi 0, %s254
    %s255 = sphi 0, %s252
    %s256 = sphi 0, %s255
    %s272 = sphi 0, %s256
  $region4: #{forward.1} parent=0 // loop_header_branch
    %20 = sbr.rel (%p18) target = $region8
  $region5: #{forward.1} parent=0 // loop_body
    %s22 = ssub.s32 %s17, 1
    %s23 = ssub.s32 %s17, 2
    %s24 = sadd.s32 %s17, 1
    %s25 = ssub.s32 %s17, %s24
    %p26 = scmp.eq.s32.totalorder %s25, 0
    %s28 = sadd.s32 %s27, 1
    %s29 = scalar_select %p26, %s27, %s28
    %p32 = pneg %p26
    %p33 = scmp.eq.s32.totalorder %s17, 1
    %p34 = por %p32, %p33
    %p35 = scmp.ne.s32.totalorder %s27, %s30
    %p36 = scmp.eq.s32.totalorder %s17, 0
    %p37 = por %p35, %p36
    %p38 = scmp.ne.s32.totalorder %s27, %s30
    %p39 = scmp.eq.s32.totalorder %s22, 1
    %p40 = por %p38, %p39
    %p41 = scmp.ne.s32.totalorder %s30, %s31
    %p42 = scmp.eq.s32.totalorder %s22, 0
    %p43 = por %p41, %p42
    %p44 = scmp.ne.s32.totalorder %s30, %s31
    %p45 = scmp.eq.s32.totalorder %s23, 1
    %p46 = por %p44, %p45
    %p48 = scmp.ne.s32.totalorder %s31, %s47
    %p49 = scmp.eq.s32.totalorder %s23, 0
    %p50 = por %p48, %p49
    %s51 = ssub.s32 %s17, %s24
    %p52 = scmp.eq.s32.totalorder %s51, 0
    %s54 = sadd.s32 %s53, 1
    %s55 = scalar_select %p52, %s53, %s54
    %p58 = pneg %p52
    %p59 = scmp.eq.s32.totalorder %s17, 1
    %p60 = por %p58, %p59
    %p61 = scmp.ne.s32.totalorder %s53, %s56
    %p62 = scmp.eq.s32.totalorder %s17, 0
    %p63 = por %p61, %p62
    %p64 = scmp.ne.s32.totalorder %s53, %s56
    %p65 = scmp.eq.s32.totalorder %s22, 1
    %p66 = por %p64, %p65
    %p67 = scmp.ne.s32.totalorder %s56, %s57
    %p68 = scmp.eq.s32.totalorder %s22, 0
    %p69 = por %p67, %p68
    %p70 = scmp.ne.s32.totalorder %s56, %s57
    %p71 = scmp.eq.s32.totalorder %s23, 1
    %p72 = por %p70, %p71
    %p74 = scmp.ne.s32.totalorder %s57, %s73
    %p75 = scmp.eq.s32.totalorder %s23, 0
    %p76 = por %p74, %p75
    %s78 = sadd.s32 %s77, 1
    %p81 = scmp.eq.s32.totalorder %s17, 1
    %p82 = scmp.ne.s32.totalorder %s77, %s79
    %p83 = scmp.eq.s32.totalorder %s17, 0
    %p84 = por %p82, %p83
    %p85 = scmp.ne.s32.totalorder %s77, %s79
    %p86 = scmp.eq.s32.totalorder %s22, 1
    %p87 = por %p85, %p86
    %p88 = scmp.ne.s32.totalorder %s79, %s80
    %p89 = scmp.eq.s32.totalorder %s22, 0
    %p90 = por %p88, %p89
    %p91 = scmp.ne.s32.totalorder %s79, %s80
    %p92 = scmp.eq.s32.totalorder %s23, 1
    %p93 = por %p91, %p92
    %p95 = scmp.ne.s32.totalorder %s80, %s94
    %p96 = scmp.eq.s32.totalorder %s23, 0
    %p97 = por %p95, %p96
    %s99 = sadd.s32 %s98, 1
    %p102 = scmp.eq.s32.totalorder %s17, 1
    %p103 = scmp.ne.s32.totalorder %s98, %s100
    %p104 = scmp.eq.s32.totalorder %s17, 0
    %p105 = por %p103, %p104
    %p106 = scmp.ne.s32.totalorder %s98, %s100
    %p107 = scmp.eq.s32.totalorder %s22, 1
    %p108 = por %p106, %p107
    %p109 = scmp.ne.s32.totalorder %s100, %s101
    %p110 = scmp.eq.s32.totalorder %s22, 0
    %p111 = por %p109, %p110
    %p112 = scmp.ne.s32.totalorder %s100, %s101
    %p113 = scmp.eq.s32.totalorder %s23, 1
    %p114 = por %p112, %p113
    %p116 = scmp.ne.s32.totalorder %s101, %s115
    %p117 = scmp.eq.s32.totalorder %s23, 0
    %p118 = por %p116, %p117
    %s120 = sadd.s32 %s119, 1
    %p123 = scmp.eq.s32.totalorder %s17, 1
    %p124 = scmp.ne.s32.totalorder %s119, %s121
    %p125 = scmp.eq.s32.totalorder %s17, 0
    %p126 = por %p124, %p125
    %p127 = scmp.ne.s32.totalorder %s119, %s121
    %p128 = scmp.eq.s32.totalorder %s22, 1
    %p129 = por %p127, %p128
    %p130 = scmp.ne.s32.totalorder %s121, %s122
    %p131 = scmp.eq.s32.totalorder %s22, 0
    %p132 = por %p130, %p131
    %p133 = scmp.ne.s32.totalorder %s121, %s122
    %p134 = scmp.eq.s32.totalorder %s23, 1
    %p135 = por %p133, %p134
    %p137 = scmp.ne.s32.totalorder %s122, %s136
    %p138 = scmp.eq.s32.totalorder %s23, 0
    %p139 = por %p137, %p138
    %s141 = sadd.s32 %s140, 1
    %p144 = scmp.eq.s32.totalorder %s17, 1
    %p145 = scmp.ne.s32.totalorder %s140, %s142
    %p146 = scmp.eq.s32.totalorder %s17, 0
    %p147 = por %p145, %p146
    %p148 = scmp.ne.s32.totalorder %s140, %s142
    %p149 = scmp.eq.s32.totalorder %s22, 1
    %p150 = por %p148, %p149
    %p151 = scmp.ne.s32.totalorder %s142, %s143
    %p152 = scmp.eq.s32.totalorder %s22, 0
    %p153 = por %p151, %p152
    %p154 = scmp.ne.s32.totalorder %s142, %s143
    %p155 = scmp.eq.s32.totalorder %s23, 1
    %p156 = por %p154, %p155
    %p158 = scmp.ne.s32.totalorder %s143, %s157
    %p159 = scmp.eq.s32.totalorder %s23, 0
    %p160 = por %p158, %p159
    %s162 = sadd.s32 %s161, 1
    %p165 = scmp.eq.s32.totalorder %s17, 1
    %p166 = scmp.ne.s32.totalorder %s161, %s163
    %p167 = scmp.eq.s32.totalorder %s17, 0
    %p168 = por %p166, %p167
    %p169 = scmp.ne.s32.totalorder %s161, %s163
    %p170 = scmp.eq.s32.totalorder %s22, 1
    %p171 = por %p169, %p170
    %p172 = scmp.ne.s32.totalorder %s163, %s164
    %p173 = scmp.eq.s32.totalorder %s22, 0
    %p174 = por %p172, %p173
    %p175 = scmp.ne.s32.totalorder %s163, %s164
    %p176 = scmp.eq.s32.totalorder %s23, 1
    %p177 = por %p175, %p176
    %p179 = scmp.ne.s32.totalorder %s164, %s178
    %p180 = scmp.eq.s32.totalorder %s23, 0
    %p181 = por %p179, %p180
    %s183 = sadd.s32 %s182, 1
    %p186 = scmp.eq.s32.totalorder %s17, 1
    %p187 = scmp.ne.s32.totalorder %s182, %s184
    %p188 = scmp.eq.s32.totalorder %s17, 0
    %p189 = por %p187, %p188
    %p190 = scmp.ne.s32.totalorder %s182, %s184
    %p191 = scmp.eq.s32.totalorder %s22, 1
    %p192 = por %p190, %p191
    %p193 = scmp.ne.s32.totalorder %s184, %s185
    %p194 = scmp.eq.s32.totalorder %s22, 0
    %p195 = por %p193, %p194
    %p196 = scmp.ne.s32.totalorder %s184, %s185
    %p197 = scmp.eq.s32.totalorder %s23, 1
    %p198 = por %p196, %p197
    %p200 = scmp.ne.s32.totalorder %s185, %s199
    %p201 = scmp.eq.s32.totalorder %s23, 0
    %p202 = por %p200, %p201
    %s204 = sadd.s32 %s203, 1
    %p207 = scmp.eq.s32.totalorder %s17, 1
    %p208 = scmp.ne.s32.totalorder %s203, %s205
    %p209 = scmp.eq.s32.totalorder %s17, 0
    %p210 = por %p208, %p209
    %p211 = scmp.ne.s32.totalorder %s203, %s205
    %p212 = scmp.eq.s32.totalorder %s22, 1
    %p213 = por %p211, %p212
    %p214 = scmp.ne.s32.totalorder %s205, %s206
    %p215 = scmp.eq.s32.totalorder %s22, 0
    %p216 = por %p214, %p215
    %p217 = scmp.ne.s32.totalorder %s205, %s206
    %p218 = scmp.eq.s32.totalorder %s23, 1
    %p219 = por %p217, %p218
    %p221 = scmp.ne.s32.totalorder %s206, %s220
    %p222 = scmp.eq.s32.totalorder %s23, 0
    %p223 = por %p221, %p222
    %s224 = ssub.s32 %s17, %s24
    %p225 = scmp.eq.s32.totalorder %s224, 0
    %s227 = sadd.s32 %s226, 1
    %s228 = scalar_select %p225, %s226, %s227
    %p231 = pneg %p225
    %p232 = scmp.eq.s32.totalorder %s17, 1
    %p233 = por %p231, %p232
    %p234 = scmp.ne.s32.totalorder %s226, %s229
    %p235 = scmp.eq.s32.totalorder %s17, 0
    %p236 = por %p234, %p235
    %p237 = scmp.ne.s32.totalorder %s226, %s229
    %p238 = scmp.eq.s32.totalorder %s22, 1
    %p239 = por %p237, %p238
    %p240 = scmp.ne.s32.totalorder %s229, %s230
    %p241 = scmp.eq.s32.totalorder %s22, 0
    %p242 = por %p240, %p241
    %p243 = scmp.ne.s32.totalorder %s229, %s230
    %p244 = scmp.eq.s32.totalorder %s23, 1
    %p245 = por %p243, %p244
    %p247 = scmp.ne.s32.totalorder %s230, %s246
    %p248 = scmp.eq.s32.totalorder %s23, 0
    %p249 = por %p247, %p248
    %s250 = ssub.s32 %s17, %s24
    %p251 = scmp.eq.s32.totalorder %s250, 0
    %s253 = sadd.s32 %s252, 1
    %s254 = scalar_select %p251, %s252, %s253
    %p257 = pneg %p251
    %p258 = scmp.eq.s32.totalorder %s17, 1
    %p259 = por %p257, %p258
    %p260 = scmp.ne.s32.totalorder %s252, %s255
    %p261 = scmp.eq.s32.totalorder %s17, 0
    %p262 = por %p260, %p261
    %p263 = scmp.ne.s32.totalorder %s252, %s255
    %p264 = scmp.eq.s32.totalorder %s22, 1
    %p265 = por %p263, %p264
    %p266 = scmp.ne.s32.totalorder %s255, %s256
    %p267 = scmp.eq.s32.totalorder %s22, 0
    %p268 = por %p266, %p267
    %p269 = scmp.ne.s32.totalorder %s255, %s256
    %p270 = scmp.eq.s32.totalorder %s23, 1
    %p271 = por %p269, %p270
    %p273 = scmp.ne.s32.totalorder %s256, %s272
    %p274 = scmp.eq.s32.totalorder %s23, 0
    %p275 = por %p273, %p274
    %p276 = scmp.le.s32.totalorder 1, %s17
    %p277 = scmp.lt.s32.totalorder %s17, 3
    %p278 = pnand %p276, %p277
    %p279 = pneg %p278
    // Predicated region
    $region9: #{forward.1} parent=5 // pred_check
      _
    $region10: #{forward.1} parent=5 // pred_check_branch
      %281 = sbr.rel (%p278) target = $region12
    $region11: #{forward.1} parent=5 // pred_region
      %s282 = ssub.s32 %s17, 1
      // Predicated region
      $region13: #{forward.1} parent=11 // pred_check
        %p283 = pneg %p90
      $region14: #{forward.1} parent=11 // pred_check_branch
        %285 = sbr.rel (%p283) target = $region16
      $region15: #{forward.1} parent=11 // pred_region
        _
      $region16: #{forward.1} parent=11 // pred_fallthru
        _
      // Predicated region
      $region17: #{forward.1} parent=11 // pred_check
        %p286 = pneg %p111
      $region18: #{forward.1} parent=11 // pred_check_branch
        %288 = sbr.rel (%p286) target = $region20
      $region19: #{forward.1} parent=11 // pred_region
        _
      $region20: #{forward.1} parent=11 // pred_fallthru
        _
      // Predicated region
      $region21: #{forward.1} parent=11 // pred_check
        %p289 = pneg %p132
      $region22: #{forward.1} parent=11 // pred_check_branch
        %291 = sbr.rel (%p289) target = $region24
      $region23: #{forward.1} parent=11 // pred_region
        _
      $region24: #{forward.1} parent=11 // pred_fallthru
        _
      // Predicated region
      $region25: #{forward.1} parent=11 // pred_check
        %p292 = pneg %p153
      $region26: #{forward.1} parent=11 // pred_check_branch
        %294 = sbr.rel (%p292) target = $region28
      $region27: #{forward.1} parent=11 // pred_region
        _
      $region28: #{forward.1} parent=11 // pred_fallthru
        _
      // Predicated region
      $region29: #{forward.1} parent=11 // pred_check
        %p295 = pneg %p174
      $region30: #{forward.1} parent=11 // pred_check_branch
        %297 = sbr.rel (%p295) target = $region32
      $region31: #{forward.1} parent=11 // pred_region
        _
      $region32: #{forward.1} parent=11 // pred_fallthru
        _
      // Predicated region
      $region33: #{forward.1} parent=11 // pred_check
        %p298 = pneg %p195
      $region34: #{forward.1} parent=11 // pred_check_branch
        %300 = sbr.rel (%p298) target = $region36
      $region35: #{forward.1} parent=11 // pred_region
        _
      $region36: #{forward.1} parent=11 // pred_fallthru
        _
      // Predicated region
      $region37: #{forward.1} parent=11 // pred_check
        %p301 = pneg %p216
      $region38: #{forward.1} parent=11 // pred_check_branch
        %303 = sbr.rel (%p301) target = $region40
      $region39: #{forward.1} parent=11 // pred_region
        _
      $region40: #{forward.1} parent=11 // pred_fallthru
        _
    $region12: #{forward.1} parent=5 // pred_fallthru
      _
    %p304 = scmp.lt.s32.totalorder %s17, 2
    // Predicated region
    $region41: #{forward.1} parent=5 // pred_check
      %p305 = pneg %p304
    $region42: #{forward.1} parent=5 // pred_check_branch
      %307 = sbr.rel (%p305) target = $region44
    $region43: #{forward.1} parent=5 // pred_region
      // Predicated region
      $region45: #{forward.1} parent=43 // pred_check
        %p308 = pneg %p37
      $region46: #{forward.1} parent=43 // pred_check_branch
        %310 = sbr.rel (%p308) target = $region48
      $region47: #{forward.1} parent=43 // pred_region
        %p311 = scmp.lt.s32.totalorder %s17, 1
        %s312 = scalar_select %p311, %s17, 1
        %s313 = smul.addr %s312, 8
        %s314 = scalar_lea.vmem %s0, %s313
      $region48: #{forward.1} parent=43 // pred_fallthru
        _
      // Predicated region
      $region49: #{forward.1} parent=43 // pred_check
        %p315 = pneg %p63
      $region50: #{forward.1} parent=43 // pred_check_branch
        %317 = sbr.rel (%p315) target = $region52
      $region51: #{forward.1} parent=43 // pred_region
        %p318 = scmp.lt.s32.totalorder %s17, 1
        %s319 = scalar_select %p318, %s17, 1
        %s320 = smul.addr %s319, 8
        %s321 = scalar_lea.vmem %s1, %s320
      $region52: #{forward.1} parent=43 // pred_fallthru
        _
    $region44: #{forward.1} parent=5 // pred_fallthru
      _
    %p322 = scmp.le.s32.totalorder 1, %s17
    %p323 = scmp.lt.s32.totalorder %s17, 3
    %p324 = pnand %p322, %p323
    %p325 = pneg %p324
    // Predicated region
    $region53: #{forward.1} parent=5 // pred_check
      _
    $region54: #{forward.1} parent=5 // pred_check_branch
      %327 = sbr.rel (%p324) target = $region56
    $region55: #{forward.1} parent=5 // pred_region
      %s328 = ssub.s32 %s17, 1
      %p329 = scmp.lt.s32.totalorder %s22, 1
      %s330 = scalar_select %p329, %s22, 1
      %s331 = smul.addr %s330, 8
      %s332 = scalar_lea.vmem %s0, %s331
      %p333 = pneg %p43
      %p334 = pneg %p40
      %p335 = scmp.lt.s32.totalorder %s22, 1
      %s336 = scalar_select %p335, %s22, 1
      %s337 = smul.addr %s336, 8
      %s338 = scalar_lea.vmem %s1, %s337
      %p339 = pneg %p69
      %p340 = pneg %p66
      %p341 = pneg %p90
      %p342 = pneg %p87
      %p343 = pneg %p111
      %p344 = pneg %p108
      %p345 = pneg %p132
      %p346 = pneg %p129
      %p347 = pneg %p153
      %p348 = pneg %p150
      %p349 = pneg %p174
      %p350 = pneg %p171
      %p351 = pneg %p195
      %p352 = pneg %p192
      %p353 = pneg %p216
      %p354 = pneg %p213
      %p355 = pneg %p242
      %p356 = pneg %p239
      %p357 = scmp.lt.s32.totalorder %s22, 1
      %s358 = scalar_select %p357, %s22, 1
      %s359 = smul.addr %s358, 8
      %s360 = scalar_lea.vmem %s9, %s359
      %p361 = pneg %p268
      %p362 = pneg %p265
      %p363 = scmp.lt.s32.totalorder %s22, 1
      %s364 = scalar_select %p363, %s22, 1
      %s365 = smul.addr %s364, 8
      %s366 = scalar_lea.vmem %s10, %s365
      %p367 = scmp.lt.s32.totalorder %s22, 1
      %s368 = scalar_select %p367, %s22, 1
      %s369 = smul.addr %s368, 8
      %s370 = scalar_lea.vmem %s0, %s369
      %p371 = scmp.lt.s32.totalorder %s22, 1
      %s372 = scalar_select %p371, %s22, 1
      %s373 = smul.addr %s372, 8
      %s374 = scalar_lea.vmem %s1, %s373
      %p375 = scmp.lt.s32.totalorder %s22, 1
      %s376 = scalar_select %p375, %s22, 1
      %s377 = smul.addr %s376, 8
      %s378 = scalar_lea.vmem %s9, %s377
      %p379 = scmp.lt.s32.totalorder %s22, 1
      %s380 = scalar_select %p379, %s22, 1
      %s381 = smul.addr %s380, 8
      %s382 = scalar_lea.vmem %s10, %s381
      %v384 = vld [vmem:[%s370] sm:$0xff]
      %v385 = vlaneseq
      %v386 = vand.u32 %v385, 127
      %387 = vset.pattern.permute.xlu0 0
      %388 = vperm.xlu0 %387, %v384
      %v389 = vpop.permute.xlu0 %388
      %vm390 = vcmp.eq.s32.totalorder %v386, %v389
      %v391 = vsel %vm390, 1, 0
      %v392 = vcvt.s32.f32 %v391
      %v393 = vpack.c.bf16 %v392, %v392
      %v394 = vld [vmem:[%s2] sm:$0xf]
      %v395 = vld [vmem:[%s2 + $0x4] sm:$0xf]
      %v396 = vld [vmem:[%s2 + $0x8] sm:$0xf]
      %v397 = vld [vmem:[%s2 + $0xc] sm:$0xf]
      %v398 = vld [vmem:[%s2 + $0x10] sm:$0xf]
      %v399 = vld [vmem:[%s2 + $0x14] sm:$0xf]
      %v400 = vld [vmem:[%s2 + $0x18] sm:$0xf]
      %v401 = vld [vmem:[%s2 + $0x1c] sm:$0xf]
      %v402 = vld [vmem:[%s2 + $0x20] sm:$0xf]
      %v403 = vunpack.c.l.bf16 %v402
      %v412 = vunpack.c.l.b16 %v394
      %v413 = vunpack.c.l.b16 %v395
      %v414 = vunpack.c.l.b16 %v396
      %v415 = vunpack.c.l.b16 %v397
      %v416 = vunpack.c.l.b16 %v398
      %v417 = vunpack.c.l.b16 %v399
      %v418 = vunpack.c.l.b16 %v400
      %v419 = vunpack.c.l.b16 %v401
      %v420 = vpack.c.b16 %v413, %v412
      %v421 = vpack.c.b16 %v415, %v414
      %v422 = vpack.c.b16 %v417, %v416
      %v423 = vpack.c.b16 %v419, %v418
      %vm428 = vcmask 523264
      %v430 = vsel %vm428, %v393, 0
      %432 = vmatprep.subr.bf16.mxu0 0
      %433 = vmatpush1.bf16.msra.mxu0 %v420
      %434 = vmatprep.subr.bf16.mxu0 0
      %435 = vmatpush1.bf16.msra.mxu0 %v421
      %436 = vmatprep.subr.bf16.mxu0 0
      %437 = vmatpush1.bf16.msra.mxu0 %v422
      %438 = vmatprep.subr.bf16.mxu0 0
      %439 = vmatpush1.bf16.msra.mxu0 %v423
      %440 = vmatprep.subr.bf16.mxu0 0
      %441 = vmatpush1.bf16.msra.mxu0 0
      %442 = vmatprep.subr.bf16.mxu0 0
      %443 = vmatpush1.bf16.msra.mxu0 0
      %444 = vmatprep.subr.bf16.mxu0 0
      %445 = vmatpush1.bf16.msra.mxu0 0
      %446 = vmatprep.subr.bf16.mxu0 0
      %447 = vmatpush1.bf16.msra.mxu0 0
      %448 = vmatprep.subr.bf16.mxu0 0
      %449 = vmatpush1.bf16.msra.mxu0 0
      %450 = vmatprep.subr.bf16.mxu0 0
      %451 = vmatpush1.bf16.msra.mxu0 0
      %452 = vmatprep.subr.bf16.mxu0 0
      %453 = vmatpush1.bf16.msra.mxu0 0
      %454 = vmatprep.subr.bf16.mxu0 0
      %455 = vmatpush1.bf16.msra.mxu0 0
      %456 = vmatprep.subr.bf16.mxu0 0
      %457 = vmatpush1.bf16.msra.mxu0 0
      %458 = vmatprep.subr.bf16.mxu0 0
      %459 = vmatpush1.bf16.msra.mxu0 0
      %460 = vmatprep.subr.bf16.mxu0 0
      %461 = vmatpush1.bf16.msra.mxu0 0
      %462 = vmatprep.subr.bf16.mxu0 0
      %463 = vmatpush1.bf16.msra.mxu0 0
      %464 = vmatprep.mubr.bf16.mxu0 0
      %465 = vmatmul.mubr.bf16.gmra.mrb[0].mxu0 %v430
      %v466 = vpop.f32.mrb[0].mxu0
      %v467 = vadd.f32 %v403, %v466
      %v468 = vpop.f32.mrb[0].mxu0
      %v469 = vpop.f32.mrb[0].mxu0
      %v470 = vpop.f32.mrb[0].mxu0
      %471 = vdwg.mxu0
      %v472 = vlaneseq
      %v473 = vshrl.u32 %v472, 7
      %vm474 = vcmp.ge.s32.totalorder %v473, %v386
      %v475 = vsel %vm474, 0.0, -1e+30
      %v476 = vld [vmem:[%s7] sm:$0xff]
      %vm477 = vcmask 261120
      %v478 = vsel %vm477, %v467, 0.0
      %479 = vadd.xlane.f32.xlu0 %v478
      %v480 = vpop.xlane.xlu0 %479
      %v481 = vrcp.pop 32.0
      %v482 = vmul.f32 %v480, %v481
      %v483 = vsub.f32 %v467, %v482
      %v484 = vmul.f32 %v483, %v483
      %v485 = vsel %vm477, %v484, 0.0
      %486 = vadd.xlane.f32.xlu0 %v485
      %v487 = vpop.xlane.xlu0 %486
      %v488 = vmul.f32 %v487, %v481
      %v489 = vadd.f32 %v488, 1e-05
      %v490 = vrsqrt.pop %v489
      %v491 = vmul.f32 %v483, %v490
      %v492 = vlaneseq
      %v493 = vshrl.u32 %v492, 7
      %v494 = vsub.s32 3, %v493
      %v495 = vrot.slane %v476, %v494
      %v496 = vmul.f32 %v491, %v495
      %v497 = vlaneseq
      %v498 = vshrl.u32 %v497, 7
      %v499 = vsub.s32 4, %v498
      %v500 = vrot.slane %v476, %v499
      %v501 = vadd.f32 %v496, %v500
      %v502 = vpack.c.bf16 %v501, %v501
      %v503 = vld [vmem:[%s3] sm:$0xf]
      %v504 = vld [vmem:[%s3 + $0x4] sm:$0xf]
      %v505 = vld [vmem:[%s3 + $0x8] sm:$0xf]
      %v506 = vld [vmem:[%s3 + $0xc] sm:$0xf]
      %v511 = vunpack.c.l.b16 %v503
      %v512 = vunpack.c.l.b16 %v504
      %v513 = vunpack.c.l.b16 %v505
      %v514 = vunpack.c.l.b16 %v506
      %v515 = vpack.c.b16 %v512, %v511
      %v516 = vpack.c.b16 %v514, %v513
      %v520 = vsel %vm477, %v502, 0
      %522 = vmatprep.subr.bf16.mxu0 0
      %523 = vmatpush1.bf16.msra.mxu0 %v515
      %524 = vmatprep.subr.bf16.mxu0 0
      %525 = vmatpush1.bf16.msra.mxu0 %v516
      %526 = vmatprep.subr.bf16.mxu0 0
      %527 = vmatpush1.bf16.msra.mxu0 0
      %528 = vmatprep.subr.bf16.mxu0 0
      %529 = vmatpush1.bf16.msra.mxu0 0
      %530 = vmatprep.subr.bf16.mxu0 0
      %531 = vmatpush1.bf16.msra.mxu0 0
      %532 = vmatprep.subr.bf16.mxu0 0
      %533 = vmatpush1.bf16.msra.mxu0 0
      %534 = vmatprep.subr.bf16.mxu0 0
      %535 = vmatpush1.bf16.msra.mxu0 0
      %536 = vmatprep.subr.bf16.mxu0 0
      %537 = vmatpush1.bf16.msra.mxu0 0
      %538 = vmatprep.subr.bf16.mxu0 0
      %539 = vmatpush1.bf16.msra.mxu0 0
      %540 = vmatprep.subr.bf16.mxu0 0
      %541 = vmatpush1.bf16.msra.mxu0 0
      %542 = vmatprep.subr.bf16.mxu0 0
      %543 = vmatpush1.bf16.msra.mxu0 0
      %544 = vmatprep.subr.bf16.mxu0 0
      %545 = vmatpush1.bf16.msra.mxu0 0
      %546 = vmatprep.subr.bf16.mxu0 0
      %547 = vmatpush1.bf16.msra.mxu0 0
      %548 = vmatprep.subr.bf16.mxu0 0
      %549 = vmatpush1.bf16.msra.mxu0 0
      %550 = vmatprep.subr.bf16.mxu0 0
      %551 = vmatpush1.bf16.msra.mxu0 0
      %552 = vmatprep.subr.bf16.mxu0 0
      %553 = vmatpush1.bf16.msra.mxu0 0
      %554 = vmatprep.mubr.bf16.mxu0 0
      %555 = vmatmul.mubr.bf16.gmra.mrb[0].mxu0 %v520
      %v556 = vpop.f32.mrb[0].mxu0
      %v557 = vadd.f32 0.0, %v556
      %v558 = vpop.f32.mrb[0].mxu0
      %v559 = vpop.f32.mrb[0].mxu0
      %v560 = vpop.f32.mrb[0].mxu0
      %561 = vdwg.mxu0
      %v562 = vld [vmem:[%s4] sm:$0xf]
      %v563 = vld [vmem:[%s4 + $0x4] sm:$0xf]
      %v564 = vld [vmem:[%s4 + $0x8] sm:$0xf]
      %v565 = vld [vmem:[%s4 + $0xc] sm:$0xf]
      %v566 = vpack.c.bf16 %v557, %v557
      %568 = vrot.lane.b32.xlu0 %v566, 96
      %v569 = vpop.permute.xlu0 %568
      %vm570 = vcmask 64512
      %v572 = vsel %vm570, %v566, 0
      %v575 = vsel %vm570, %v569, 0
      %577 = vmatprep.subr.bf16.mxu0 0
      %578 = vmatpush1.bf16.xpose.msra.mxu0 %v575
      %579 = vmatprep.subr.bf16.mxu0 0
      %580 = vmatpush1.bf16.xpose.msra.mxu0 0
      %581 = vmatprep.subr.bf16.mxu0 0
      %582 = vmatpush1.bf16.xpose.msra.mxu0 0
      %583 = vmatprep.subr.bf16.mxu0 0
      %584 = vmatpush1.bf16.xpose.msra.mxu0 0
      %585 = vmatprep.subr.bf16.mxu0 0
      %586 = vmatpush1.bf16.xpose.msra.mxu0 0
      %587 = vmatprep.subr.bf16.mxu0 0
      %588 = vmatpush1.bf16.xpose.msra.mxu0 0
      %589 = vmatprep.subr.bf16.mxu0 0
      %590 = vmatpush1.bf16.xpose.msra.mxu0 0
      %591 = vmatprep.subr.bf16.mxu0 0
      %592 = vmatpush1.bf16.xpose.msra.mxu0 0
      %593 = vmatprep.subr.bf16.mxu0 0
      %594 = vmatpush1.bf16.xpose.msra.mxu0 0
      %595 = vmatprep.subr.bf16.mxu0 0
      %596 = vmatpush1.bf16.xpose.msra.mxu0 0
      %597 = vmatprep.subr.bf16.mxu0 0
      %598 = vmatpush1.bf16.xpose.msra.mxu0 0
      %599 = vmatprep.subr.bf16.mxu0 0
      %600 = vmatpush1.bf16.xpose.msra.mxu0 0
      %601 = vmatprep.subr.bf16.mxu0 0
      %602 = vmatpush1.bf16.xpose.msra.mxu0 0
      %603 = vmatprep.subr.bf16.mxu0 0
      %604 = vmatpush1.bf16.xpose.msra.mxu0 0
      %605 = vmatprep.subr.bf16.mxu0 0
      %606 = vmatpush1.bf16.xpose.msra.mxu0 0
      %607 = vmatprep.subr.bf16.mxu0 0
      %608 = vmatpush1.bf16.xpose.msra.mxu0 0
      %609 = vmatprep.mubr.bf16.mxu0 0
      %610 = vmatmul.mubr.bf16.gmra.mrb[0].mxu0 %v572
      %v611 = vpop.f32.mrb[0].mxu0
      %v612 = vadd.f32 %v475, %v611
      %v613 = vpop.f32.mrb[0].mxu0
      %v614 = vpop.f32.mrb[0].mxu0
      %v615 = vpop.f32.mrb[0].mxu0
      %616 = vdwg.mxu0
      %v617 = vsel %vm570, %v612, -inf
      %618 = vmax.xlane.f32.xlu0 %v617
      %v619 = vpop.xlane.xlu0 %618
      %v620 = vsub.f32 %v612, %v619
      %v621 = vmul.f32 %v620, 1.442695
      %v622 = vpow.pop %v621
      %v623 = vsel %vm570, %v622, 0.0
      %624 = vadd.xlane.f32.xlu0 %v623
      %v625 = vpop.xlane.xlu0 %624
      %v626 = vrcp.pop %v625
      %v627 = vmul.f32 %v622, %v626
      %v628 = vpack.c.bf16 %v627, %v627
      %629 = vrot.lane.b32.xlu0 %v566, 64
      %v630 = vpop.permute.xlu0 %629
      %v632 = vsel %vm570, %v628, 0
      %vm634 = vcmask 1043456
      %v636 = vsel %vm634, %v630, 0
      %638 = vmatprep.subr.bf16.mxu0 0
      %639 = vmatpush1.bf16.msra.mxu0 %v636
      %640 = vmatprep.subr.bf16.mxu0 0
      %641 = vmatpush1.bf16.msra.mxu0 0
      %642 = vmatprep.subr.bf16.mxu0 0
      %643 = vmatpush1.bf16.msra.mxu0 0
      %644 = vmatprep.subr.bf16.mxu0 0
      %645 = vmatpush1.bf16.msra.mxu0 0
      %646 = vmatprep.subr.bf16.mxu0 0
      %647 = vmatpush1.bf16.msra.mxu0 0
      %648 = vmatprep.subr.bf16.mxu0 0
      %649 = vmatpush1.bf16.msra.mxu0 0
      %650 = vmatprep.subr.bf16.mxu0 0
      %651 = vmatpush1.bf16.msra.mxu0 0
      %652 = vmatprep.subr.bf16.mxu0 0
      %653 = vmatpush1.bf16.msra.mxu0 0
      %654 = vmatprep.subr.bf16.mxu0 0
      %655 = vmatpush1.bf16.msra.mxu0 0
      %656 = vmatprep.subr.bf16.mxu0 0
      %657 = vmatpush1.bf16.msra.mxu0 0
      %658 = vmatprep.subr.bf16.mxu0 0
      %659 = vmatpush1.bf16.msra.mxu0 0
      %660 = vmatprep.subr.bf16.mxu0 0
      %661 = vmatpush1.bf16.msra.mxu0 0
      %662 = vmatprep.subr.bf16.mxu0 0
      %663 = vmatpush1.bf16.msra.mxu0 0
      %664 = vmatprep.subr.bf16.mxu0 0
      %665 = vmatpush1.bf16.msra.mxu0 0
      %666 = vmatprep.subr.bf16.mxu0 0
      %667 = vmatpush1.bf16.msra.mxu0 0
      %668 = vmatprep.subr.bf16.mxu0 0
      %669 = vmatpush1.bf16.msra.mxu0 0
      %670 = vmatprep.mubr.bf16.mxu0 0
      %671 = vmatmul.mubr.bf16.gmra.mrb[0].mxu0 %v632
      %v672 = vpop.f32.mrb[0].mxu0
      %v673 = vadd.f32 0.0, %v672
      %v674 = vpop.f32.mrb[0].mxu0
      %v675 = vpop.f32.mrb[0].mxu0
      %v676 = vpop.f32.mrb[0].mxu0
      %677 = vdwg.mxu0
      %v678 = vpack.c.bf16 %v673, %v673
      %679 = vrot.lane.b32.xlu0 %v566, 120
      %v680 = vpop.permute.xlu0 %679
      %681 = vrot.lane.b32.xlu0 %v566, 88
      %v682 = vpop.permute.xlu0 %681
      %v684 = vsel %vm570, %v680, 0
      %v687 = vsel %vm570, %v682, 0
      %689 = vmatprep.subr.bf16.mxu0 0
      %690 = vmatpush1.bf16.xpose.msra.mxu0 %v687
      %691 = vmatprep.subr.bf16.mxu0 0
      %692 = vmatpush1.bf16.xpose.msra.mxu0 0
      %693 = vmatprep.subr.bf16.mxu0 0
      %694 = vmatpush1.bf16.xpose.msra.mxu0 0
      %695 = vmatprep.subr.bf16.mxu0 0
      %696 = vmatpush1.bf16.xpose.msra.mxu0 0
      %697 = vmatprep.subr.bf16.mxu0 0
      %698 = vmatpush1.bf16.xpose.msra.mxu0 0
      %699 = vmatprep.subr.bf16.mxu0 0
      %700 = vmatpush1.bf16.xpose.msra.mxu0 0
      %701 = vmatprep.subr.bf16.mxu0 0
      %702 = vmatpush1.bf16.xpose.msra.mxu0 0
      %703 = vmatprep.subr.bf16.mxu0 0
      %704 = vmatpush1.bf16.xpose.msra.mxu0 0
      %705 = vmatprep.subr.bf16.mxu0 0
      %706 = vmatpush1.bf16.xpose.msra.mxu0 0
      %707 = vmatprep.subr.bf16.mxu0 0
      %708 = vmatpush1.bf16.xpose.msra.mxu0 0
      %709 = vmatprep.subr.bf16.mxu0 0
      %710 = vmatpush1.bf16.xpose.msra.mxu0 0
      %711 = vmatprep.subr.bf16.mxu0 0
      %712 = vmatpush1.bf16.xpose.msra.mxu0 0
      %713 = vmatprep.subr.bf16.mxu0 0
      %714 = vmatpush1.bf16.xpose.msra.mxu0 0
      %715 = vmatprep.subr.bf16.mxu0 0
      %716 = vmatpush1.bf16.xpose.msra.mxu0 0
      %717 = vmatprep.subr.bf16.mxu0 0
      %718 = vmatpush1.bf16.xpose.msra.mxu0 0
      %719 = vmatprep.subr.bf16.mxu0 0
      %720 = vmatpush1.bf16.xpose.msra.mxu0 0
      %721 = vmatprep.mubr.bf16.mxu0 0
      %722 = vmatmul.mubr.bf16.gmra.mrb[0].mxu0 %v684
      %v723 = vpop.f32.mrb[0].mxu0
      %v724 = vadd.f32 %v475, %v723
      %v725 = vpop.f32.mrb[0].mxu0
      %v726 = vpop.f32.mrb[0].mxu0
      %v727 = vpop.f32.mrb[0].mxu0
      %728 = vdwg.mxu0
      %v729 = vsel %vm570, %v724, -inf
      %730 = vmax.xlane.f32.xlu0 %v729
      %v731 = vpop.xlane.xlu0 %730
      %v732 = vsub.f32 %v724, %v731
      %v733 = vmul.f32 %v732, 1.442695
      %v734 = vpow.pop %v733
      %v735 = vsel %vm570, %v734, 0.0
      %736 = vadd.xlane.f32.xlu0 %v735
      %v737 = vpop.xlane.xlu0 %736
      %v738 = vrcp.pop %v737
      %v739 = vmul.f32 %v734, %v738
      %v740 = vpack.c.bf16 %v739, %v739
      %741 = vrot.lane.b32.xlu0 %v566, 56
      %v742 = vpop.permute.xlu0 %741
      %v744 = vsel %vm570, %v740, 0
      %v747 = vsel %vm634, %v742, 0
      %749 = vmatprep.subr.bf16.mxu0 0
      %750 = vmatpush1.bf16.msra.mxu0 %v747
      %751 = vmatprep.subr.bf16.mxu0 0
      %752 = vmatpush1.bf16.msra.mxu0 0
      %753 = vmatprep.subr.bf16.mxu0 0
      %754 = vmatpush1.bf16.msra.mxu0 0
      %755 = vmatprep.subr.bf16.mxu0 0
      %756 = vmatpush1.bf16.msra.mxu0 0
      %757 = vmatprep.subr.bf16.mxu0 0
      %758 = vmatpush1.bf16.msra.mxu0 0
      %759 = vmatprep.subr.bf16.mxu0 0
      %760 = vmatpush1.bf16.msra.mxu0 0
      %761 = vmatprep.subr.bf16.mxu0 0
      %762 = vmatpush1.bf16.msra.mxu0 0
      %763 = vmatprep.subr.bf16.mxu0 0
      %764 = vmatpush1.bf16.msra.mxu0 0
      %765 = vmatprep.subr.bf16.mxu0 0
      %766 = vmatpush1.bf16.msra.mxu0 0
      %767 = vmatprep.subr.bf16.mxu0 0
      %768 = vmatpush1.bf16.msra.mxu0 0
      %769 = vmatprep.subr.bf16.mxu0 0
      %770 = vmatpush1.bf16.msra.mxu0 0
      %771 = vmatprep.subr.bf16.mxu0 0
      %772 = vmatpush1.bf16.msra.mxu0 0
      %773 = vmatprep.subr.bf16.mxu0 0
      %774 = vmatpush1.bf16.msra.mxu0 0
      %775 = vmatprep.subr.bf16.mxu0 0
      %776 = vmatpush1.bf16.msra.mxu0 0
      %777 = vmatprep.subr.bf16.mxu0 0
      %778 = vmatpush1.bf16.msra.mxu0 0
      %779 = vmatprep.subr.bf16.mxu0 0
      %780 = vmatpush1.bf16.msra.mxu0 0
      %781 = vmatprep.mubr.bf16.mxu0 0
      %782 = vmatmul.mubr.bf16.gmra.mrb[0].mxu0 %v744
      %v783 = vpop.f32.mrb[0].mxu0
      %v784 = vadd.f32 0.0, %v783
      %v785 = vpop.f32.mrb[0].mxu0
      %v786 = vpop.f32.mrb[0].mxu0
      %v787 = vpop.f32.mrb[0].mxu0
      %788 = vdwg.mxu0
      %v789 = vpack.c.bf16 %v784, %v784
      %v791 = vsel %vm570, %v789, 0
      %v794 = vsel %vm634, %v563, 0
      %796 = vmatprep.subr.bf16.mxu0 0
      %797 = vmatpush1.bf16.msra.mxu0 %v794
      %798 = vmatprep.subr.bf16.mxu0 0
      %799 = vmatpush1.bf16.msra.mxu0 0
      %800 = vmatprep.subr.bf16.mxu0 0
      %801 = vmatpush1.bf16.msra.mxu0 0
      %802 = vmatprep.subr.bf16.mxu0 0
      %803 = vmatpush1.bf16.msra.mxu0 0
      %804 = vmatprep.subr.bf16.mxu0 0
      %805 = vmatpush1.bf16.msra.mxu0 0
      %806 = vmatprep.subr.bf16.mxu0 0
      %807 = vmatpush1.bf16.msra.mxu0 0
      %808 = vmatprep.subr.bf16.mxu0 0
      %809 = vmatpush1.bf16.msra.mxu0 0
      %810 = vmatprep.subr.bf16.mxu0 0
      %811 = vmatpush1.bf16.msra.mxu0 0
      %812 = vmatprep.subr.bf16.mxu0 0
      %813 = vmatpush1.bf16.msra.mxu0 0
      %814 = vmatprep.subr.bf16.mxu0 0
      %815 = vmatpush1.bf16.msra.mxu0 0
      %816 = vmatprep.subr.bf16.mxu0 0
      %817 = vmatpush1.bf16.msra.mxu0 0
      %818 = vmatprep.subr.bf16.mxu0 0
      %819 = vmatpush1.bf16.msra.mxu0 0
      %820 = vmatprep.subr.bf16.mxu0 0
      %821 = vmatpush1.bf16.msra.mxu0 0
      %822 = vmatprep.subr.bf16.mxu0 0
      %823 = vmatpush1.bf16.msra.mxu0 0
      %824 = vmatprep.subr.bf16.mxu0 0
      %825 = vmatpush1.bf16.msra.mxu0 0
      %826 = vmatprep.subr.bf16.mxu0 0
      %827 = vmatpush1.bf16.msra.mxu0 0
      %828 = vmatprep.mubr.bf16.mxu0 0
      %829 = vmatmul.mubr.bf16.gmra.mrb[0].mxu0 %v791
      %v830 = vpop.f32.mrb[0].mxu0
      %v831 = vadd.f32 0.0, %v830
      %v832 = vpop.f32.mrb[0].mxu0
      %v833 = vpop.f32.mrb[0].mxu0
      %v834 = vpop.f32.mrb[0].mxu0
      %835 = vdwg.mxu0
      %v837 = vsel %vm570, %v678, 0
      %v840 = vsel %vm634, %v562, 0
      %842 = vmatprep.subr.bf16.mxu0 0
      %843 = vmatpush1.bf16.msra.mxu0 %v840
      %844 = vmatprep.subr.bf16.mxu0 0
      %845 = vmatpush1.bf16.msra.mxu0 0
      %846 = vmatprep.subr.bf16.mxu0 0
      %847 = vmatpush1.bf16.msra.mxu0 0
      %848 = vmatprep.subr.bf16.mxu0 0
      %849 = vmatpush1.bf16.msra.mxu0 0
      %850 = vmatprep.subr.bf16.mxu0 0
      %851 = vmatpush1.bf16.msra.mxu0 0
      %852 = vmatprep.subr.bf16.mxu0 0
      %853 = vmatpush1.bf16.msra.mxu0 0
      %854 = vmatprep.subr.bf16.mxu0 0
      %855 = vmatpush1.bf16.msra.mxu0 0
      %856 = vmatprep.subr.bf16.mxu0 0
      %857 = vmatpush1.bf16.msra.mxu0 0
      %858 = vmatprep.subr.bf16.mxu0 0
      %859 = vmatpush1.bf16.msra.mxu0 0
      %860 = vmatprep.subr.bf16.mxu0 0
      %861 = vmatpush1.bf16.msra.mxu0 0
      %862 = vmatprep.subr.bf16.mxu0 0
      %863 = vmatpush1.bf16.msra.mxu0 0
      %864 = vmatprep.subr.bf16.mxu0 0
      %865 = vmatpush1.bf16.msra.mxu0 0
      %866 = vmatprep.subr.bf16.mxu0 0
      %867 = vmatpush1.bf16.msra.mxu0 0
      %868 = vmatprep.subr.bf16.mxu0 0
      %869 = vmatpush1.bf16.msra.mxu0 0
      %870 = vmatprep.subr.bf16.mxu0 0
      %871 = vmatpush1.bf16.msra.mxu0 0
      %872 = vmatprep.subr.bf16.mxu0 0
      %873 = vmatpush1.bf16.msra.mxu0 0
      %874 = vmatprep.mubr.bf16.mxu0 0
      %875 = vmatmul.mubr.bf16.gmra.mrb[0].mxu0 %v837
      %v876 = vpop.f32.mrb[0].mxu0
      %v877 = vadd.f32 %v831, %v876
      %v878 = vpop.f32.mrb[0].mxu0
      %v879 = vpop.f32.mrb[0].mxu0
      %v880 = vpop.f32.mrb[0].mxu0
      %881 = vdwg.mxu0
      %882 = vrot.lane.b32.xlu0 %v566, 112
      %v883 = vpop.permute.xlu0 %882
      %884 = vrot.lane.b32.xlu0 %v566, 80
      %v885 = vpop.permute.xlu0 %884
      %v887 = vsel %vm570, %v883, 0
      %v890 = vsel %vm570, %v885, 0
      %892 = vmatprep.subr.bf16.mxu0 0
      %893 = vmatpush1.bf16.xpose.msra.mxu0 %v890
      %894 = vmatprep.subr.bf16.mxu0 0
      %895 = vmatpush1.bf16.xpose.msra.mxu0 0
      %896 = vmatprep.subr.bf16.mxu0 0
      %897 = vmatpush1.bf16.xpose.msra.mxu0 0
      %898 = vmatprep.subr.bf16.mxu0 0
      %899 = vmatpush1.bf16.xpose.msra.mxu0 0
      %900 = vmatprep.subr.bf16.mxu0 0
      %901 = vmatpush1.bf16.xpose.msra.mxu0 0
      %902 = vmatprep.subr.bf16.mxu0 0
      %903 = vmatpush1.bf16.xpose.msra.mxu0 0
      %904 = vmatprep.subr.bf16.mxu0 0
      %905 = vmatpush1.bf16.xpose.msra.mxu0 0
      %906 = vmatprep.subr.bf16.mxu0 0
      %907 = vmatpush1.bf16.xpose.msra.mxu0 0
      %908 = vmatprep.subr.bf16.mxu0 0
      %909 = vmatpush1.bf16.xpose.msra.mxu0 0
      %910 = vmatprep.subr.bf16.mxu0 0
      %911 = vmatpush1.bf16.xpose.msra.mxu0 0
      %912 = vmatprep.subr.bf16.mxu0 0
      %913 = vmatpush1.bf16.xpose.msra.mxu0 0
      %914 = vmatprep.subr.bf16.mxu0 0
      %915 = vmatpush1.bf16.xpose.msra.mxu0 0
      %916 = vmatprep.subr.bf16.mxu0 0
      %917 = vmatpush1.bf16.xpose.msra.mxu0 0
      %918 = vmatprep.subr.bf16.mxu0 0
      %919 = vmatpush1.bf16.xpose.msra.mxu0 0
      %920 = vmatprep.subr.bf16.mxu0 0
      %921 = vmatpush1.bf16.xpose.msra.mxu0 0
      %922 = vmatprep.subr.bf16.mxu0 0
      %923 = vmatpush1.bf16.xpose.msra.mxu0 0
      %924 = vmatprep.mubr.bf16.mxu0 0
      %925 = vmatmul.mubr.bf16.gmra.mrb[0].mxu0 %v887
      %v926 = vpop.f32.mrb[0].mxu0
      %v927 = vadd.f32 %v475, %v926
      %v928 = vpop.f32.mrb[0].mxu0
      %v929 = vpop.f32.mrb[0].mxu0
      %v930 = vpop.f32.mrb[0].mxu0
      %931 = vdwg.mxu0
      %v932 = vsel %vm570, %v927, -inf
      %933 = vmax.xlane.f32.xlu0 %v932
      %v934 = vpop.xlane.xlu0 %933
      %v935 = vsub.f32 %v927, %v934
      %v936 = vmul.f32 %v935, 1.442695
      %v937 = vpow.pop %v936
      %v938 = vsel %vm570, %v937, 0.0
      %939 = vadd.xlane.f32.xlu0 %v938
      %v940 = vpop.xlane.xlu0 %939
      %v941 = vrcp.pop %v940
      %v942 = vmul.f32 %v937, %v941
      %v943 = vpack.c.bf16 %v942, %v942
      %944 = vrot.lane.b32.xlu0 %v566, 48
      %v945 = vpop.permute.xlu0 %944
      %v947 = vsel %vm570, %v943, 0
      %v950 = vsel %vm634, %v945, 0
      %952 = vmatprep.subr.bf16.mxu0 0
      %953 = vmatpush1.bf16.msra.mxu0 %v950
      %954 = vmatprep.subr.bf16.mxu0 0
      %955 = vmatpush1.bf16.msra.mxu0 0
      %956 = vmatprep.subr.bf16.mxu0 0
      %957 = vmatpush1.bf16.msra.mxu0 0
      %958 = vmatprep.subr.bf16.mxu0 0
      %959 = vmatpush1.bf16.msra.mxu0 0
      %960 = vmatprep.subr.bf16.mxu0 0
      %961 = vmatpush1.bf16.msra.mxu0 0
      %962 = vmatprep.subr.bf16.mxu0 0
      %963 = vmatpush1.bf16.msra.mxu0 0
      %964 = vmatprep.subr.bf16.mxu0 0
      %965 = vmatpush1.bf16.msra.mxu0 0
      %966 = vmatprep.subr.bf16.mxu0 0
      %967 = vmatpush1.bf16.msra.mxu0 0
      %968 = vmatprep.subr.bf16.mxu0 0
      %969 = vmatpush1.bf16.msra.mxu0 0
      %970 = vmatprep.subr.bf16.mxu0 0
      %971 = vmatpush1.bf16.msra.mxu0 0
      %972 = vmatprep.subr.bf16.mxu0 0
      %973 = vmatpush1.bf16.msra.mxu0 0
      %974 = vmatprep.subr.bf16.mxu0 0
      %975 = vmatpush1.bf16.msra.mxu0 0
      %976 = vmatprep.subr.bf16.mxu0 0
      %977 = vmatpush1.bf16.msra.mxu0 0
      %978 = vmatprep.subr.bf16.mxu0 0
      %979 = vmatpush1.bf16.msra.mxu0 0
      %980 = vmatprep.subr.bf16.mxu0 0
      %981 = vmatpush1.bf16.msra.mxu0 0
      %982 = vmatprep.subr.bf16.mxu0 0
      %983 = vmatpush1.bf16.msra.mxu0 0
      %984 = vmatprep.mubr.bf16.mxu0 0
      %985 = vmatmul.mubr.bf16.gmra.mrb[0].mxu0 %v947
      %v986 = vpop.f32.mrb[0].mxu0
      %v987 = vadd.f32 0.0, %v986
      %v988 = vpop.f32.mrb[0].mxu0
      %v989 = vpop.f32.mrb[0].mxu0
      %v990 = vpop.f32.mrb[0].mxu0
      %991 = vdwg.mxu0
      %v992 = vpack.c.bf16 %v987, %v987
      %v994 = vsel %vm570, %v992, 0
      %v997 = vsel %vm634, %v564, 0
      %999 = vmatprep.subr.bf16.mxu0 0
      %1000 = vmatpush1.bf16.msra.mxu0 %v997
      %1001 = vmatprep.subr.bf16.mxu0 0
      %1002 = vmatpush1.bf16.msra.mxu0 0
      %1003 = vmatprep.subr.bf16.mxu0 0
      %1004 = vmatpush1.bf16.msra.mxu0 0
      %1005 = vmatprep.subr.bf16.mxu0 0
      %1006 = vmatpush1.bf16.msra.mxu0 0
      %1007 = vmatprep.subr.bf16.mxu0 0
      %1008 = vmatpush1.bf16.msra.mxu0 0
      %1009 = vmatprep.subr.bf16.mxu0 0
      %1010 = vmatpush1.bf16.msra.mxu0 0
      %1011 = vmatprep.subr.bf16.mxu0 0
      %1012 = vmatpush1.bf16.msra.mxu0 0
      %1013 = vmatprep.subr.bf16.mxu0 0
      %1014 = vmatpush1.bf16.msra.mxu0 0
      %1015 = vmatprep.subr.bf16.mxu0 0
      %1016 = vmatpush1.bf16.msra.mxu0 0
      %1017 = vmatprep.subr.bf16.mxu0 0
      %1018 = vmatpush1.bf16.msra.mxu0 0
      %1019 = vmatprep.subr.bf16.mxu0 0
      %1020 = vmatpush1.bf16.msra.mxu0 0
      %1021 = vmatprep.subr.bf16.mxu0 0
      %1022 = vmatpush1.bf16.msra.mxu0 0
      %1023 = vmatprep.subr.bf16.mxu0 0
      %1024 = vmatpush1.bf16.msra.mxu0 0
      %1025 = vmatprep.subr.bf16.mxu0 0
      %1026 = vmatpush1.bf16.msra.mxu0 0
      %1027 = vmatprep.subr.bf16.mxu0 0
      %1028 = vmatpush1.bf16.msra.mxu0 0
      %1029 = vmatprep.subr.bf16.mxu0 0
      %1030 = vmatpush1.bf16.msra.mxu0 0
      %1031 = vmatprep.mubr.bf16.mxu0 0
      %1032 = vmatmul.mubr.bf16.gmra.mrb[0].mxu0 %v994
      %v1033 = vpop.f32.mrb[0].mxu0
      %v1034 = vadd.f32 0.0, %v1033
      %v1035 = vpop.f32.mrb[0].mxu0
      %v1036 = vpop.f32.mrb[0].mxu0
      %v1037 = vpop.f32.mrb[0].mxu0
      %1038 = vdwg.mxu0
      %v1039 = vadd.f32 %v877, %v1034
      %1040 = vrot.lane.b32.xlu0 %v566, 104
      %v1041 = vpop.permute.xlu0 %1040
      %1042 = vrot.lane.b32.xlu0 %v566, 72
      %v1043 = vpop.permute.xlu0 %1042
      %v1045 = vsel %vm570, %v1041, 0
      %v1048 = vsel %vm570, %v1043, 0
      %1050 = vmatprep.subr.bf16.mxu0 0
      %1051 = vmatpush1.bf16.xpose.msra.mxu0 %v1048
      %1052 = vmatprep.subr.bf16.mxu0 0
      %1053 = vmatpush1.bf16.xpose.msra.mxu0 0
      %1054 = vmatprep.subr.bf16.mxu0 0
      %1055 = vmatpush1.bf16.xpose.msra.mxu0 0
      %1056 = vmatprep.subr.bf16.mxu0 0
      %1057 = vmatpush1.bf16.xpose.msra.mxu0 0
      %1058 = vmatprep.subr.bf16.mxu0 0
      %1059 = vmatpush1.bf16.xpose.msra.mxu0 0
      %1060 = vmatprep.subr.bf16.mxu0 0
      %1061 = vmatpush1.bf16.xpose.msra.mxu0 0
      %1062 = vmatprep.subr.bf16.mxu0 0
      %1063 = vmatpush1.bf16.xpose.msra.mxu0 0
      %1064 = vmatprep.subr.bf16.mxu0 0
      %1065 = vmatpush1.bf16.xpose.msra.mxu0 0
      %1066 = vmatprep.subr.bf16.mxu0 0
      %1067 = vmatpush1.bf16.xpose.msra.mxu0 0
      %1068 = vmatprep.subr.bf16.mxu0 0
      %1069 = vmatpush1.bf16.xpose.msra.mxu0 0
      %1070 = vmatprep.subr.bf16.mxu0 0
      %1071 = vmatpush1.bf16.xpose.msra.mxu0 0
      %1072 = vmatprep.subr.bf16.mxu0 0
      %1073 = vmatpush1.bf16.xpose.msra.mxu0 0
      %1074 = vmatprep.subr.bf16.mxu0 0
      %1075 = vmatpush1.bf16.xpose.msra.mxu0 0
      %1076 = vmatprep.subr.bf16.mxu0 0
      %1077 = vmatpush1.bf16.xpose.msra.mxu0 0
      %1078 = vmatprep.subr.bf16.mxu0 0
      %1079 = vmatpush1.bf16.xpose.msra.mxu0 0
      %1080 = vmatprep.subr.bf16.mxu0 0
      %1081 = vmatpush1.bf16.xpose.msra.mxu0 0
      %1082 = vmatprep.mubr.bf16.mxu0 0
      %1083 = vmatmul.mubr.bf16.gmra.mrb[0].mxu0 %v1045
      %v1084 = vpop.f32.mrb[0].mxu0
      %v1085 = vadd.f32 %v475, %v1084
      %v1086 = vpop.f32.mrb[0].mxu0
      %v1087 = vpop.f32.mrb[0].mxu0
      %v1088 = vpop.f32.mrb[0].mxu0
      %1089 = vdwg.mxu0
      %v1090 = vsel %vm570, %v1085, -inf
      %1091 = vmax.xlane.f32.xlu0 %v1090
      %v1092 = vpop.xlane.xlu0 %1091
      %v1093 = vsub.f32 %v1085, %v1092
      %v1094 = vmul.f32 %v1093, 1.442695
      %v1095 = vpow.pop %v1094
      %v1096 = vsel %vm570, %v1095, 0.0
      %1097 = vadd.xlane.f32.xlu0 %v1096
      %v1098 = vpop.xlane.xlu0 %1097
      %v1099 = vrcp.pop %v1098
      %v1100 = vmul.f32 %v1095, %v1099
      %v1101 = vpack.c.bf16 %v1100, %v1100
      %1102 = vrot.lane.b32.xlu0 %v566, 40
      %v1103 = vpop.permute.xlu0 %1102
      %v1105 = vsel %vm570, %v1101, 0
      %v1108 = vsel %vm634, %v1103, 0
      %1110 = vmatprep.subr.bf16.mxu0 0
      %1111 = vmatpush1.bf16.msra.mxu0 %v1108
      %1112 = vmatprep.subr.bf16.mxu0 0
      %1113 = vmatpush1.bf16.msra.mxu0 0
      %1114 = vmatprep.subr.bf16.mxu0 0
      %1115 = vmatpush1.bf16.msra.mxu0 0
      %1116 = vmatprep.subr.bf16.mxu0 0
      %1117 = vmatpush1.bf16.msra.mxu0 0
      %1118 = vmatprep.subr.bf16.mxu0 0
      %1119 = vmatpush1.bf16.msra.mxu0 0
      %1120 = vmatprep.subr.bf16.mxu0 0
      %1121 = vmatpush1.bf16.msra.mxu0 0
      %1122 = vmatprep.subr.bf16.mxu0 0
      %1123 = vmatpush1.bf16.msra.mxu0 0
      %1124 = vmatprep.subr.bf16.mxu0 0
      %1125 = vmatpush1.bf16.msra.mxu0 0
      %1126 = vmatprep.subr.bf16.mxu0 0
      %1127 = vmatpush1.bf16.msra.mxu0 0
      %1128 = vmatprep.subr.bf16.mxu0 0
      %1129 = vmatpush1.bf16.msra.mxu0 0
      %1130 = vmatprep.subr.bf16.mxu0 0
      %1131 = vmatpush1.bf16.msra.mxu0 0
      %1132 = vmatprep.subr.bf16.mxu0 0
      %1133 = vmatpush1.bf16.msra.mxu0 0
      %1134 = vmatprep.subr.bf16.mxu0 0
      %1135 = vmatpush1.bf16.msra.mxu0 0
      %1136 = vmatprep.subr.bf16.mxu0 0
      %1137 = vmatpush1.bf16.msra.mxu0 0
      %1138 = vmatprep.subr.bf16.mxu0 0
      %1139 = vmatpush1.bf16.msra.mxu0 0
      %1140 = vmatprep.subr.bf16.mxu0 0
      %1141 = vmatpush1.bf16.msra.mxu0 0
      %1142 = vmatprep.mubr.bf16.mxu0 0
      %1143 = vmatmul.mubr.bf16.gmra.mrb[0].mxu0 %v1105
      %v1144 = vpop.f32.mrb[0].mxu0
      %v1145 = vadd.f32 0.0, %v1144
      %v1146 = vpop.f32.mrb[0].mxu0
      %v1147 = vpop.f32.mrb[0].mxu0
      %v1148 = vpop.f32.mrb[0].mxu0
      %1149 = vdwg.mxu0
      %v1150 = vpack.c.bf16 %v1145, %v1145
      %v1152 = vsel %vm570, %v1150, 0
      %v1155 = vsel %vm634, %v565, 0
      %1157 = vmatprep.subr.bf16.mxu0 0
      %1158 = vmatpush1.bf16.msra.mxu0 %v1155
      %1159 = vmatprep.subr.bf16.mxu0 0
      %1160 = vmatpush1.bf16.msra.mxu0 0
      %1161 = vmatprep.subr.bf16.mxu0 0
      %1162 = vmatpush1.bf16.msra.mxu0 0
      %1163 = vmatprep.subr.bf16.mxu0 0
      %1164 = vmatpush1.bf16.msra.mxu0 0
      %1165 = vmatprep.subr.bf16.mxu0 0
      %1166 = vmatpush1.bf16.msra.mxu0 0
      %1167 = vmatprep.subr.bf16.mxu0 0
      %1168 = vmatpush1.bf16.msra.mxu0 0
      %1169 = vmatprep.subr.bf16.mxu0 0
      %1170 = vmatpush1.bf16.msra.mxu0 0
      %1171 = vmatprep.subr.bf16.mxu0 0
      %1172 = vmatpush1.bf16.msra.mxu0 0
      %1173 = vmatprep.subr.bf16.mxu0 0
      %1174 = vmatpush1.bf16.msra.mxu0 0
      %1175 = vmatprep.subr.bf16.mxu0 0
      %1176 = vmatpush1.bf16.msra.mxu0 0
      %1177 = vmatprep.subr.bf16.mxu0 0
      %1178 = vmatpush1.bf16.msra.mxu0 0
      %1179 = vmatprep.subr.bf16.mxu0 0
      %1180 = vmatpush1.bf16.msra.mxu0 0
      %1181 = vmatprep.subr.bf16.mxu0 0
      %1182 = vmatpush1.bf16.msra.mxu0 0
      %1183 = vmatprep.subr.bf16.mxu0 0
      %1184 = vmatpush1.bf16.msra.mxu0 0
      %1185 = vmatprep.subr.bf16.mxu0 0
      %1186 = vmatpush1.bf16.msra.mxu0 0
      %1187 = vmatprep.subr.bf16.mxu0 0
      %1188 = vmatpush1.bf16.msra.mxu0 0
      %1189 = vmatprep.mubr.bf16.mxu0 0
      %1190 = vmatmul.mubr.bf16.gmra.mrb[0].mxu0 %v1152
      %v1191 = vpop.f32.mrb[0].mxu0
      %v1192 = vadd.f32 0.0, %v1191
      %v1193 = vpop.f32.mrb[0].mxu0
      %v1194 = vpop.f32.mrb[0].mxu0
      %v1195 = vpop.f32.mrb[0].mxu0
      %1196 = vdwg.mxu0
      %v1197 = vadd.f32 %v1039, %v1192
      %v1198 = vadd.f32 %v467, %v1197
      %v1199 = vlaneseq
      %v1200 = vshrl.u32 %v1199, 7
      %v1201 = vsub.s32 1, %v1200
      %v1202 = vrot.slane %v476, %v1201
      %v1203 = vadd.f32 %v1198, %v1202
      %v1204 = vsel %vm477, %v1203, 0.0
      %1205 = vadd.xlane.f32.xlu0 %v1204
      %v1206 = vpop.xlane.xlu0 %1205
      %v1207 = vmul.f32 %v1206, %v481
      %v1208 = vsub.f32 %v1203, %v1207
      %v1209 = vmul.f32 %v1208, %v1208
      %v1210 = vsel %vm477, %v1209, 0.0
      %1211 = vadd.xlane.f32.xlu0 %v1210
      %v1212 = vpop.xlane.xlu0 %1211
      %v1213 = vmul.f32 %v1212, %v481
      %v1214 = vadd.f32 %v1213, 1e-05
      %v1215 = vrsqrt.pop %v1214
      %v1216 = vmul.f32 %v1208, %v1215
      %v1217 = vlaneseq
      %v1218 = vshrl.u32 %v1217, 7
      %v1219 = vsub.s32 5, %v1218
      %v1220 = vrot.slane %v476, %v1219
      %v1221 = vmul.f32 %v1216, %v1220
      %v1222 = vlaneseq
      %v1223 = vshrl.u32 %v1222, 7
      %v1224 = vsub.s32 6, %v1223
      %v1225 = vrot.slane %v476, %v1224
      %v1226 = vadd.f32 %v1221, %v1225
      %v1227 = vpack.c.bf16 %v1226, %v1226
      %v1228 = vld [vmem:[%s5] sm:$0xf]
      %v1229 = vld [vmem:[%s5 + $0x4] sm:$0xf]
      %v1230 = vld [vmem:[%s5 + $0x8] sm:$0xf]
      %v1231 = vld [vmem:[%s5 + $0xc] sm:$0xf]
      %v1232 = vlaneseq
      %v1233 = vshrl.u32 %v1232, 7
      %v1234 = vsub.s32 0, %v1233
      %v1235 = vrot.slane %v476, %v1234
      %v1240 = vunpack.c.l.b16 %v1228
      %v1241 = vunpack.c.l.b16 %v1229
      %v1242 = vunpack.c.l.b16 %v1230
      %v1243 = vunpack.c.l.b16 %v1231
      %v1244 = vpack.c.b16 %v1241, %v1240
      %v1245 = vpack.c.b16 %v1243, %v1242
      %v1249 = vsel %vm477, %v1227, 0
      %1251 = vmatprep.subr.bf16.mxu0 0
      %1252 = vmatpush1.bf16.msra.mxu0 %v1244
      %1253 = vmatprep.subr.bf16.mxu0 0
      %1254 = vmatpush1.bf16.msra.mxu0 %v1245
      %1255 = vmatprep.subr.bf16.mxu0 0
      %1256 = vmatpush1.bf16.msra.mxu0 0
      %1257 = vmatprep.subr.bf16.mxu0 0
      %1258 = vmatpush1.bf16.msra.mxu0 0
      %1259 = vmatprep.subr.bf16.mxu0 0
      %1260 = vmatpush1.bf16.msra.mxu0 0
      %1261 = vmatprep.subr.bf16.mxu0 0
      %1262 = vmatpush1.bf16.msra.mxu0 0
      %1263 = vmatprep.subr.bf16.mxu0 0
      %1264 = vmatpush1.bf16.msra.mxu0 0
      %1265 = vmatprep.subr.bf16.mxu0 0
      %1266 = vmatpush1.bf16.msra.mxu0 0
      %1267 = vmatprep.subr.bf16.mxu0 0
      %1268 = vmatpush1.bf16.msra.mxu0 0
      %1269 = vmatprep.subr.bf16.mxu0 0
      %1270 = vmatpush1.bf16.msra.mxu0 0
      %1271 = vmatprep.subr.bf16.mxu0 0
      %1272 = vmatpush1.bf16.msra.mxu0 0
      %1273 = vmatprep.subr.bf16.mxu0 0
      %1274 = vmatpush1.bf16.msra.mxu0 0
      %1275 = vmatprep.subr.bf16.mxu0 0
      %1276 = vmatpush1.bf16.msra.mxu0 0
      %1277 = vmatprep.subr.bf16.mxu0 0
      %1278 = vmatpush1.bf16.msra.mxu0 0
      %1279 = vmatprep.subr.bf16.mxu0 0
      %1280 = vmatpush1.bf16.msra.mxu0 0
      %1281 = vmatprep.subr.bf16.mxu0 0
      %1282 = vmatpush1.bf16.msra.mxu0 0
      %1283 = vmatprep.mubr.bf16.mxu0 0
      %1284 = vmatmul.mubr.bf16.gmra.mrb[0].mxu0 %v1249
      %v1285 = vpop.f32.mrb[0].mxu0
      %v1286 = vadd.f32 %v1235, %v1285
      %v1287 = vpop.f32.mrb[0].mxu0
      %v1288 = vpop.f32.mrb[0].mxu0
      %v1289 = vpop.f32.mrb[0].mxu0
      %1290 = vdwg.mxu0
      %v1291 = vmax.f32 %v1286, 0.0
      %v1292 = vpack.c.bf16 %v1291, %v1291
      %v1293 = vld [vmem:[%s6] sm:$0xf]
      %v1294 = vld [vmem:[%s6 + $0x4] sm:$0xf]
      %v1295 = vld [vmem:[%s6 + $0x8] sm:$0xf]
      %v1296 = vld [vmem:[%s6 + $0xc] sm:$0xf]
      %v1297 = vld [vmem:[%s6 + $0x10] sm:$0xf]
      %v1298 = vld [vmem:[%s6 + $0x14] sm:$0xf]
      %v1299 = vld [vmem:[%s6 + $0x18] sm:$0xf]
      %v1300 = vld [vmem:[%s6 + $0x1c] sm:$0xf]
      %v1301 = vld [vmem:[%s6 + $0x20] sm:$0xf]
      %v1302 = vld [vmem:[%s6 + $0x24] sm:$0xf]
      %v1303 = vld [vmem:[%s6 + $0x28] sm:$0xf]
      %v1304 = vld [vmem:[%s6 + $0x2c] sm:$0xf]
      %v1305 = vld [vmem:[%s6 + $0x30] sm:$0xf]
      %v1306 = vld [vmem:[%s6 + $0x34] sm:$0xf]
      %v1307 = vld [vmem:[%s6 + $0x38] sm:$0xf]
      %v1308 = vld [vmem:[%s6 + $0x3c] sm:$0xf]
      %v1309 = vlaneseq
      %v1310 = vshrl.u32 %v1309, 7
      %v1311 = vsub.s32 2, %v1310
      %v1312 = vrot.slane %v476, %v1311
      %v1329 = vunpack.c.l.b16 %v1293
      %v1330 = vunpack.c.l.b16 %v1294
      %v1331 = vunpack.c.l.b16 %v1295
      %v1332 = vunpack.c.l.b16 %v1296
      %v1333 = vunpack.c.l.b16 %v1297
      %v1334 = vunpack.c.l.b16 %v1298
      %v1335 = vunpack.c.l.b16 %v1299
      %v1336 = vunpack.c.l.b16 %v1300
      %v1337 = vunpack.c.l.b16 %v1301
      %v1338 = vunpack.c.l.b16 %v1302
      %v1339 = vunpack.c.l.b16 %v1303
      %v1340 = vunpack.c.l.b16 %v1304
      %v1341 = vunpack.c.l.b16 %v1305
      %v1342 = vunpack.c.l.b16 %v1306
      %v1343 = vunpack.c.l.b16 %v1307
      %v1344 = vunpack.c.l.b16 %v1308
      %v1345 = vpack.c.b16 %v1330, %v1329
      %v1346 = vpack.c.b16 %v1332, %v1331
      %v1347 = vpack.c.b16 %v1334, %v1333
      %v1348 = vpack.c.b16 %v1336, %v1335
      %v1349 = vpack.c.b16 %v1338, %v1337
      %v1350 = vpack.c.b16 %v1340, %v1339
      %v1351 = vpack.c.b16 %v1342, %v1341
      %v1352 = vpack.c.b16 %v1344, %v1343
      %1361 = vmatprep.subr.bf16.mxu0 0
      %1362 = vmatpush1.bf16.msra.mxu0 %v1345
      %1363 = vmatprep.subr.bf16.mxu0 0
      %1364 = vmatpush1.bf16.msra.mxu0 %v1346
      %1365 = vmatprep.subr.bf16.mxu0 0
      %1366 = vmatpush1.bf16.msra.mxu0 %v1347
      %1367 = vmatprep.subr.bf16.mxu0 0
      %1368 = vmatpush1.bf16.msra.mxu0 %v1348
      %1369 = vmatprep.subr.bf16.mxu0 0
      %1370 = vmatpush1.bf16.msra.mxu0 %v1349
      %1371 = vmatprep.subr.bf16.mxu0 0
      %1372 = vmatpush1.bf16.msra.mxu0 %v1350
      %1373 = vmatprep.subr.bf16.mxu0 0
      %1374 = vmatpush1.bf16.msra.mxu0 %v1351
      %1375 = vmatprep.subr.bf16.mxu0 0
      %1376 = vmatpush1.bf16.msra.mxu0 %v1352
      %1377 = vmatprep.subr.bf16.mxu0 0
      %1378 = vmatpush1.bf16.msra.mxu0 0
      %1379 = vmatprep.subr.bf16.mxu0 0
      %1380 = vmatpush1.bf16.msra.mxu0 0
      %1381 = vmatprep.subr.bf16.mxu0 0
      %1382 = vmatpush1.bf16.msra.mxu0 0
      %1383 = vmatprep.subr.bf16.mxu0 0
      %1384 = vmatpush1.bf16.msra.mxu0 0
      %1385 = vmatprep.subr.bf16.mxu0 0
      %1386 = vmatpush1.bf16.msra.mxu0 0
      %1387 = vmatprep.subr.bf16.mxu0 0
      %1388 = vmatpush1.bf16.msra.mxu0 0
      %1389 = vmatprep.subr.bf16.mxu0 0
      %1390 = vmatpush1.bf16.msra.mxu0 0
      %1391 = vmatprep.subr.bf16.mxu0 0
      %1392 = vmatpush1.bf16.msra.mxu0 0
      %1393 = vmatprep.mubr.bf16.mxu0 0
      %1394 = vmatmul.mubr.bf16.gmra.mrb[0].mxu0 %v1292
      %v1395 = vpop.f32.mrb[0].mxu0
      %v1396 = vadd.f32 %v1312, %v1395
      %v1397 = vpop.f32.mrb[0].mxu0
      %v1398 = vpop.f32.mrb[0].mxu0
      %v1399 = vpop.f32.mrb[0].mxu0
      %1400 = vdwg.mxu0
      %v1401 = vadd.f32 %v1203, %v1396
      %s1402 = scalar_lea.vmem %s7, 8
      %v1403 = vld [vmem:[%s1402] sm:$0xff]
      %v1404 = vsel %vm477, %v1401, 0.0
      %1405 = vadd.xlane.f32.xlu0 %v1404
      %v1406 = vpop.xlane.xlu0 %1405
      %v1407 = vmul.f32 %v1406, %v481
      %v1408 = vsub.f32 %v1401, %v1407
      %v1409 = vmul.f32 %v1408, %v1408
      %v1410 = vsel %vm477, %v1409, 0.0
      %1411 = vadd.xlane.f32.xlu0 %v1410
      %v1412 = vpop.xlane.xlu0 %1411
      %v1413 = vmul.f32 %v1412, %v481
      %v1414 = vadd.f32 %v1413, 1e-05
      %v1415 = vrsqrt.pop %v1414
      %v1416 = vmul.f32 %v1408, %v1415
      %v1417 = vlaneseq
      %v1418 = vshrl.u32 %v1417, 7
      %v1419 = vsub.s32 3, %v1418
      %v1420 = vrot.slane %v1403, %v1419
      %v1421 = vmul.f32 %v1416, %v1420
      %v1422 = vlaneseq
      %v1423 = vshrl.u32 %v1422, 7
      %v1424 = vsub.s32 4, %v1423
      %v1425 = vrot.slane %v1403, %v1424
      %v1426 = vadd.f32 %v1421, %v1425
      %v1427 = vpack.c.bf16 %v1426, %v1426
      %s1428 = scalar_lea.vmem %s3, 16
      %v1429 = vld [vmem:[%s1428] sm:$0xf]
      %v1430 = vld [vmem:[%s1428 + $0x4] sm:$0xf]
      %v1431 = vld [vmem:[%s1428 + $0x8] sm:$0xf]
      %v1432 = vld [vmem:[%s1428 + $0xc] sm:$0xf]
      %v1437 = vunpack.c.l.b16 %v1429
      %v1438 = vunpack.c.l.b16 %v1430
      %v1439 = vunpack.c.l.b16 %v1431
      %v1440 = vunpack.c.l.b16 %v1432
      %v1441 = vpack.c.b16 %v1438, %v1437
      %v1442 = vpack.c.b16 %v1440, %v1439
      %v1446 = vsel %vm477, %v1427, 0
      %1448 = vmatprep.subr.bf16.mxu0 0
      %1449 = vmatpush1.bf16.msra.mxu0 %v1441
      %1450 = vmatprep.subr.bf16.mxu0 0
      %1451 = vmatpush1.bf16.msra.mxu0 %v1442
      %1452 = vmatprep.subr.bf16.mxu0 0
      %1453 = vmatpush1.bf16.msra.mxu0 0
      %1454 = vmatprep.subr.bf16.mxu0 0
      %1455 = vmatpush1.bf16.msra.mxu0 0
      %1456 = vmatprep.subr.bf16.mxu0 0
      %1457 = vmatpush1.bf16.msra.mxu0 0
      %1458 = vmatprep.subr.bf16.mxu0 0
      %1459 = vmatpush1.bf16.msra.mxu0 0
      %1460 = vmatprep.subr.bf16.mxu0 0
      %1461 = vmatpush1.bf16.msra.mxu0 0
      %1462 = vmatprep.subr.bf16.mxu0 0
      %1463 = vmatpush1.bf16.msra.mxu0 0
      %1464 = vmatprep.subr.bf16.mxu0 0
      %1465 = vmatpush1.bf16.msra.mxu0 0
      %1466 = vmatprep.subr.bf16.mxu0 0
      %1467 = vmatpush1.bf16.msra.mxu0 0
      %1468 = vmatprep.subr.bf16.mxu0 0
      %1469 = vmatpush1.bf16.msra.mxu0 0
      %1470 = vmatprep.subr.bf16.mxu0 0
      %1471 = vmatpush1.bf16.msra.mxu0 0
      %1472 = vmatprep.subr.bf16.mxu0 0
      %1473 = vmatpush1.bf16.msra.mxu0 0
      %1474 = vmatprep.subr.bf16.mxu0 0
      %1475 = vmatpush1.bf16.msra.mxu0 0
      %1476 = vmatprep.subr.bf16.mxu0 0
      %1477 = vmatpush1.bf16.msra.mxu0 0
      %1478 = vmatprep.subr.bf16.mxu0 0
      %1479 = vmatpush1.bf16.msra.mxu0 0
      %1480 = vmatprep.mubr.bf16.mxu0 0
      %1481 = vmatmul.mubr.bf16.gmra.mrb[0].mxu0 %v1446
      %v1482 = vpop.f32.mrb[0].mxu0
      %v1483 = vadd.f32 0.0, %v1482
      %v1484 = vpop.f32.mrb[0].mxu0
      %v1485 = vpop.f32.mrb[0].mxu0
      %v1486 = vpop.f32.mrb[0].mxu0
      %1487 = vdwg.mxu0
      %s1488 = scalar_lea.vmem %s4, 16
      %v1489 = vld [vmem:[%s1488] sm:$0xf]
      %v1490 = vld [vmem:[%s1488 + $0x4] sm:$0xf]
      %v1491 = vld [vmem:[%s1488 + $0x8] sm:$0xf]
      %v1492 = vld [vmem:[%s1488 + $0xc] sm:$0xf]
      %v1493 = vpack.c.bf16 %v1483, %v1483
      %1495 = vrot.lane.b32.xlu0 %v1493, 96
      %v1496 = vpop.permute.xlu0 %1495
      %v1498 = vsel %vm570, %v1493, 0
      %v1501 = vsel %vm570, %v1496, 0
      %1503 = vmatprep.subr.bf16.mxu0 0
      %1504 = vmatpush1.bf16.xpose.msra.mxu0 %v1501
      %1505 = vmatprep.subr.bf16.mxu0 0
      %1506 = vmatpush1.bf16.xpose.msra.mxu0 0
      %1507 = vmatprep.subr.bf16.mxu0 0
      %1508 = vmatpush1.bf16.xpose.msra.mxu0 0
      %1509 = vmatprep.subr.bf16.mxu0 0
      %1510 = vmatpush1.bf16.xpose.msra.mxu0 0
      %1511 = vmatprep.subr.bf16.mxu0 0
      %1512 = vmatpush1.bf16.xpose.msra.mxu0 0
      %1513 = vmatprep.subr.bf16.mxu0 0
      %1514 = vmatpush1.bf16.xpose.msra.mxu0 0
      %1515 = vmatprep.subr.bf16.mxu0 0
      %1516 = vmatpush1.bf16.xpose.msra.mxu0 0
      %1517 = vmatprep.subr.bf16.mxu0 0
      %1518 = vmatpush1.bf16.xpose.msra.mxu0 0
      %1519 = vmatprep.subr.bf16.mxu0 0
      %1520 = vmatpush1.bf16.xpose.msra.mxu0 0
      %1521 = vmatprep.subr.bf16.mxu0 0
      %1522 = vmatpush1.bf16.xpose.msra.mxu0 0
      %1523 = vmatprep.subr.bf16.mxu0 0
      %1524 = vmatpush1.bf16.xpose.msra.mxu0 0
      %1525 = vmatprep.subr.bf16.mxu0 0
      %1526 = vmatpush1.bf16.xpose.msra.mxu0 0
      %1527 = vmatprep.subr.bf16.mxu0 0
      %1528 = vmatpush1.bf16.xpose.msra.mxu0 0
      %1529 = vmatprep.subr.bf16.mxu0 0
      %1530 = vmatpush1.bf16.xpose.msra.mxu0 0
      %1531 = vmatprep.subr.bf16.mxu0 0
      %1532 = vmatpush1.bf16.xpose.msra.mxu0 0
      %1533 = vmatprep.subr.bf16.mxu0 0
      %1534 = vmatpush1.bf16.xpose.msra.mxu0 0
      %1535 = vmatprep.mubr.bf16.mxu0 0
      %1536 = vmatmul.mubr.bf16.gmra.mrb[0].mxu0 %v1498
      %v1537 = vpop.f32.mrb[0].mxu0
      %v1538 = vadd.f32 %v475, %v1537
      %v1539 = vpop.f32.mrb[0].mxu0
      %v1540 = vpop.f32.mrb[0].mxu0
      %v1541 = vpop.f32.mrb[0].mxu0
      %1542 = vdwg.mxu0
      %v1543 = vsel %vm570, %v1538, -inf
      %1544 = vmax.xlane.f32.xlu0 %v1543
      %v1545 = vpop.xlane.xlu0 %1544
      %v1546 = vsub.f32 %v1538, %v1545
      %v1547 = vmul.f32 %v1546, 1.442695
      %v1548 = vpow.pop %v1547
      %v1549 = vsel %vm570, %v1548, 0.0
      %1550 = vadd.xlane.f32.xlu0 %v1549
      %v1551 = vpop.xlane.xlu0 %1550
      %v1552 = vrcp.pop %v1551
      %v1553 = vmul.f32 %v1548, %v1552
      %v1554 = vpack.c.bf16 %v1553, %v1553
      %1555 = vrot.lane.b32.xlu0 %v1493, 64
      %v1556 = vpop.permute.xlu0 %1555
      %v1558 = vsel %vm570, %v1554, 0
      %v1561 = vsel %vm634, %v1556, 0
      %1563 = vmatprep.subr.bf16.mxu0 0
      %1564 = vmatpush1.bf16.msra.mxu0 %v1561
      %1565 = vmatprep.subr.bf16.mxu0 0
      %1566 = vmatpush1.bf16.msra.mxu0 0
      %1567 = vmatprep.subr.bf16.mxu0 0
      %1568 = vmatpush1.bf16.msra.mxu0 0
      %1569 = vmatprep.subr.bf16.mxu0 0
      %1570 = vmatpush1.bf16.msra.mxu0 0
      %1571 = vmatprep.subr.bf16.mxu0 0
      %1572 = vmatpush1.bf16.msra.mxu0 0
      %1573 = vmatprep.subr.bf16.mxu0 0
      %1574 = vmatpush1.bf16.msra.mxu0 0
      %1575 = vmatprep.subr.bf16.mxu0 0
      %1576 = vmatpush1.bf16.msra.mxu0 0
      %1577 = vmatprep.subr.bf16.mxu0 0
      %1578 = vmatpush1.bf16.msra.mxu0 0
      %1579 = vmatprep.subr.bf16.mxu0 0
      %1580 = vmatpush1.bf16.msra.mxu0 0
      %1581 = vmatprep.subr.bf16.mxu0 0
      %1582 = vmatpush1.bf16.msra.mxu0 0
      %1583 = vmatprep.subr.bf16.mxu0 0
      %1584 = vmatpush1.bf16.msra.mxu0 0
      %1585 = vmatprep.subr.bf16.mxu0 0
      %1586 = vmatpush1.bf16.msra.mxu0 0
      %1587 = vmatprep.subr.bf16.mxu0 0
      %1588 = vmatpush1.bf16.msra.mxu0 0
      %1589 = vmatprep.subr.bf16.mxu0 0
      %1590 = vmatpush1.bf16.msra.mxu0 0
      %1591 = vmatprep.subr.bf16.mxu0 0
      %1592 = vmatpush1.bf16.msra.mxu0 0
      %1593 = vmatprep.subr.bf16.mxu0 0
      %1594 = vmatpush1.bf16.msra.mxu0 0
      %1595 = vmatprep.mubr.bf16.mxu0 0
      %1596 = vmatmul.mubr.bf16.gmra.mrb[0].mxu0 %v1558
      %v1597 = vpop.f32.mrb[0].mxu0
      %v1598 = vadd.f32 0.0, %v1597
      %v1599 = vpop.f32.mrb[0].mxu0
      %v1600 = vpop.f32.mrb[0].mxu0
      %v1601 = vpop.f32.mrb[0].mxu0
      %1602 = vdwg.mxu0
      %v1603 = vpack.c.bf16 %v1598, %v1598
      %1604 = vrot.lane.b32.xlu0 %v1493, 120
      %v1605 = vpop.permute.xlu0 %1604
      %1606 = vrot.lane.b32.xlu0 %v1493, 88
      %v1607 = vpop.permute.xlu0 %1606
      %v1609 = vsel %vm570, %v1605, 0
      %v1612 = vsel %vm570, %v1607, 0
      %1614 = vmatprep.subr.bf16.mxu0 0
      %1615 = vmatpush1.bf16.xpose.msra.mxu0 %v1612
      %1616 = vmatprep.subr.bf16.mxu0 0
      %1617 = vmatpush1.bf16.xpose.msra.mxu0 0
      %1618 = vmatprep.subr.bf16.mxu0 0
      %1619 = vmatpush1.bf16.xpose.msra.mxu0 0
      %1620 = vmatprep.subr.bf16.mxu0 0
      %1621 = vmatpush1.bf16.xpose.msra.mxu0 0
      %1622 = vmatprep.subr.bf16.mxu0 0
      %1623 = vmatpush1.bf16.xpose.msra.mxu0 0
      %1624 = vmatprep.subr.bf16.mxu0 0
      %1625 = vmatpush1.bf16.xpose.msra.mxu0 0
      %1626 = vmatprep.subr.bf16.mxu0 0
      %1627 = vmatpush1.bf16.xpose.msra.mxu0 0
      %1628 = vmatprep.subr.bf16.mxu0 0
      %1629 = vmatpush1.bf16.xpose.msra.mxu0 0
      %1630 = vmatprep.subr.bf16.mxu0 0
      %1631 = vmatpush1.bf16.xpose.msra.mxu0 0
      %1632 = vmatprep.subr.bf16.mxu0 0
      %1633 = vmatpush1.bf16.xpose.msra.mxu0 0
      %1634 = vmatprep.subr.bf16.mxu0 0
      %1635 = vmatpush1.bf16.xpose.msra.mxu0 0
      %1636 = vmatprep.subr.bf16.mxu0 0
      %1637 = vmatpush1.bf16.xpose.msra.mxu0 0
      %1638 = vmatprep.subr.bf16.mxu0 0
      %1639 = vmatpush1.bf16.xpose.msra.mxu0 0
      %1640 = vmatprep.subr.bf16.mxu0 0
      %1641 = vmatpush1.bf16.xpose.msra.mxu0 0
      %1642 = vmatprep.subr.bf16.mxu0 0
      %1643 = vmatpush1.bf16.xpose.msra.mxu0 0
      %1644 = vmatprep.subr.bf16.mxu0 0
      %1645 = vmatpush1.bf16.xpose.msra.mxu0 0
      %1646 = vmatprep.mubr.bf16.mxu0 0
      %1647 = vmatmul.mubr.bf16.gmra.mrb[0].mxu0 %v1609
      %v1648 = vpop.f32.mrb[0].mxu0
      %v1649 = vadd.f32 %v475, %v1648
      %v1650 = vpop.f32.mrb[0].mxu0
      %v1651 = vpop.f32.mrb[0].mxu0
      %v1652 = vpop.f32.mrb[0].mxu0
      %1653 = vdwg.mxu0
      %v1654 = vsel %vm570, %v1649, -inf
      %1655 = vmax.xlane.f32.xlu0 %v1654
      %v1656 = vpop.xlane.xlu0 %1655
      %v1657 = vsub.f32 %v1649, %v1656
      %v1658 = vmul.f32 %v1657, 1.442695
      %v1659 = vpow.pop %v1658
      %v1660 = vsel %vm570, %v1659, 0.0
      %1661 = vadd.xlane.f32.xlu0 %v1660
      %v1662 = vpop.xlane.xlu0 %1661
      %v1663 = vrcp.pop %v1662
      %v1664 = vmul.f32 %v1659, %v1663
      %v1665 = vpack.c.bf16 %v1664, %v1664
      %1666 = vrot.lane.b32.xlu0 %v1493, 56
      %v1667 = vpop.permute.xlu0 %1666
      %v1669 = vsel %vm570, %v1665, 0
      %v1672 = vsel %vm634, %v1667, 0
      %1674 = vmatprep.subr.bf16.mxu0 0
      %1675 = vmatpush1.bf16.msra.mxu0 %v1672
      %1676 = vmatprep.subr.bf16.mxu0 0
      %1677 = vmatpush1.bf16.msra.mxu0 0
      %1678 = vmatprep.subr.bf16.mxu0 0
      %1679 = vmatpush1.bf16.msra.mxu0 0
      %1680 = vmatprep.subr.bf16.mxu0 0
      %1681 = vmatpush1.bf16.msra.mxu0 0
      %1682 = vmatprep.subr.bf16.mxu0 0
      %1683 = vmatpush1.bf16.msra.mxu0 0
      %1684 = vmatprep.subr.bf16.mxu0 0
      %1685 = vmatpush1.bf16.msra.mxu0 0
      %1686 = vmatprep.subr.bf16.mxu0 0
      %1687 = vmatpush1.bf16.msra.mxu0 0
      %1688 = vmatprep.subr.bf16.mxu0 0
      %1689 = vmatpush1.bf16.msra.mxu0 0
      %1690 = vmatprep.subr.bf16.mxu0 0
      %1691 = vmatpush1.bf16.msra.mxu0 0
      %1692 = vmatprep.subr.bf16.mxu0 0
      %1693 = vmatpush1.bf16.msra.mxu0 0
      %1694 = vmatprep.subr.bf16.mxu0 0
      %1695 = vmatpush1.bf16.msra.mxu0 0
      %1696 = vmatprep.subr.bf16.mxu0 0
      %1697 = vmatpush1.bf16.msra.mxu0 0
      %1698 = vmatprep.subr.bf16.mxu0 0
      %1699 = vmatpush1.bf16.msra.mxu0 0
      %1700 = vmatprep.subr.bf16.mxu0 0
      %1701 = vmatpush1.bf16.msra.mxu0 0
      %1702 = vmatprep.subr.bf16.mxu0 0
      %1703 = vmatpush1.bf16.msra.mxu0 0
      %1704 = vmatprep.subr.bf16.mxu0 0
      %1705 = vmatpush1.bf16.msra.mxu0 0
      %1706 = vmatprep.mubr.bf16.mxu0 0
      %1707 = vmatmul.mubr.bf16.gmra.mrb[0].mxu0 %v1669
      %v1708 = vpop.f32.mrb[0].mxu0
      %v1709 = vadd.f32 0.0, %v1708
      %v1710 = vpop.f32.mrb[0].mxu0
      %v1711 = vpop.f32.mrb[0].mxu0
      %v1712 = vpop.f32.mrb[0].mxu0
      %1713 = vdwg.mxu0
      %v1714 = vpack.c.bf16 %v1709, %v1709
      %v1716 = vsel %vm570, %v1714, 0
      %v1719 = vsel %vm634, %v1490, 0
      %1721 = vmatprep.subr.bf16.mxu0 0
      %1722 = vmatpush1.bf16.msra.mxu0 %v1719
      %1723 = vmatprep.subr.bf16.mxu0 0
      %1724 = vmatpush1.bf16.msra.mxu0 0
      %1725 = vmatprep.subr.bf16.mxu0 0
      %1726 = vmatpush1.bf16.msra.mxu0 0
      %1727 = vmatprep.subr.bf16.mxu0 0
      %1728 = vmatpush1.bf16.msra.mxu0 0
      %1729 = vmatprep.subr.bf16.mxu0 0
      %1730 = vmatpush1.bf16.msra.mxu0 0
      %1731 = vmatprep.subr.bf16.mxu0 0
      %1732 = vmatpush1.bf16.msra.mxu0 0
      %1733 = vmatprep.subr.bf16.mxu0 0
      %1734 = vmatpush1.bf16.msra.mxu0 0
      %1735 = vmatprep.subr.bf16.mxu0 0
      %1736 = vmatpush1.bf16.msra.mxu0 0
      %1737 = vmatprep.subr.bf16.mxu0 0
      %1738 = vmatpush1.bf16.msra.mxu0 0
      %1739 = vmatprep.subr.bf16.mxu0 0
      %1740 = vmatpush1.bf16.msra.mxu0 0
      %1741 = vmatprep.subr.bf16.mxu0 0
      %1742 = vmatpush1.bf16.msra.mxu0 0
      %1743 = vmatprep.subr.bf16.mxu0 0
      %1744 = vmatpush1.bf16.msra.mxu0 0
      %1745 = vmatprep.subr.bf16.mxu0 0
      %1746 = vmatpush1.bf16.msra.mxu0 0
      %1747 = vmatprep.subr.bf16.mxu0 0
      %1748 = vmatpush1.bf16.msra.mxu0 0
      %1749 = vmatprep.subr.bf16.mxu0 0
      %1750 = vmatpush1.bf16.msra.mxu0 0
      %1751 = vmatprep.subr.bf16.mxu0 0
      %1752 = vmatpush1.bf16.msra.mxu0 0
      %1753 = vmatprep.mubr.bf16.mxu0 0
      %1754 = vmatmul.mubr.bf16.gmra.mrb[0].mxu0 %v1716
      %v1755 = vpop.f32.mrb[0].mxu0
      %v1756 = vadd.f32 0.0, %v1755
      %v1757 = vpop.f32.mrb[0].mxu0
      %v1758 = vpop.f32.mrb[0].mxu0
      %v1759 = vpop.f32.mrb[0].mxu0
      %1760 = vdwg.mxu0
      %v1762 = vsel %vm570, %v1603, 0
      %v1765 = vsel %vm634, %v1489, 0
      %1767 = vmatprep.subr.bf16.mxu0 0
      %1768 = vmatpush1.bf16.msra.mxu0 %v1765
      %1769 = vmatprep.subr.bf16.mxu0 0
      %1770 = vmatpush1.bf16.msra.mxu0 0
      %1771 = vmatprep.subr.bf16.mxu0 0
      %1772 = vmatpush1.bf16.msra.mxu0 0
      %1773 = vmatprep.subr.bf16.mxu0 0
      %1774 = vmatpush1.bf16.msra.mxu0 0
      %1775 = vmatprep.subr.bf16.mxu0 0
      %1776 = vmatpush1.bf16.msra.mxu0 0
      %1777 = vmatprep.subr.bf16.mxu0 0
      %1778 = vmatpush1.bf16.msra.mxu0 0
      %1779 = vmatprep.subr.bf16.mxu0 0
      %1780 = vmatpush1.bf16.msra.mxu0 0
      %1781 = vmatprep.subr.bf16.mxu0 0
      %1782 = vmatpush1.bf16.msra.mxu0 0
      %1783 = vmatprep.subr.bf16.mxu0 0
      %1784 = vmatpush1.bf16.msra.mxu0 0
      %1785 = vmatprep.subr.bf16.mxu0 0
      %1786 = vmatpush1.bf16.msra.mxu0 0
      %1787 = vmatprep.subr.bf16.mxu0 0
      %1788 = vmatpush1.bf16.msra.mxu0 0
      %1789 = vmatprep.subr.bf16.mxu0 0
      %1790 = vmatpush1.bf16.msra.mxu0 0
      %1791 = vmatprep.subr.bf16.mxu0 0
      %1792 = vmatpush1.bf16.msra.mxu0 0
      %1793 = vmatprep.subr.bf16.mxu0 0
      %1794 = vmatpush1.bf16.msra.mxu0 0
      %1795 = vmatprep.subr.bf16.mxu0 0
      %1796 = vmatpush1.bf16.msra.mxu0 0
      %1797 = vmatprep.subr.bf16.mxu0 0
      %1798 = vmatpush1.bf16.msra.mxu0 0
      %1799 = vmatprep.mubr.bf16.mxu0 0
      %1800 = vmatmul.mubr.bf16.gmra.mrb[0].mxu0 %v1762
      %v1801 = vpop.f32.mrb[0].mxu0
      %v1802 = vadd.f32 %v1756, %v1801
      %v1803 = vpop.f32.mrb[0].mxu0
      %v1804 = vpop.f32.mrb[0].mxu0
      %v1805 = vpop.f32.mrb[0].mxu0
      %1806 = vdwg.mxu0
      %1807 = vrot.lane.b32.xlu0 %v1493, 112
      %v1808 = vpop.permute.xlu0 %1807
      %1809 = vrot.lane.b32.xlu0 %v1493, 80
      %v1810 = vpop.permute.xlu0 %1809
      %v1812 = vsel %vm570, %v1808, 0
      %v1815 = vsel %vm570, %v1810, 0
      %1817 = vmatprep.subr.bf16.mxu0 0
      %1818 = vmatpush1.bf16.xpose.msra.mxu0 %v1815
      %1819 = vmatprep.subr.bf16.mxu0 0
      %1820 = vmatpush1.bf16.xpose.msra.mxu0 0
      %1821 = vmatprep.subr.bf16.mxu0 0
      %1822 = vmatpush1.bf16.xpose.msra.mxu0 0
      %1823 = vmatprep.subr.bf16.mxu0 0
      %1824 = vmatpush1.bf16.xpose.msra.mxu0 0
      %1825 = vmatprep.subr.bf16.mxu0 0
      %1826 = vmatpush1.bf16.xpose.msra.mxu0 0
      %1827 = vmatprep.subr.bf16.mxu0 0
      %1828 = vmatpush1.bf16.xpose.msra.mxu0 0
      %1829 = vmatprep.subr.bf16.mxu0 0
      %1830 = vmatpush1.bf16.xpose.msra.mxu0 0
      %1831 = vmatprep.subr.bf16.mxu0 0
      %1832 = vmatpush1.bf16.xpose.msra.mxu0 0
      %1833 = vmatprep.subr.bf16.mxu0 0
      %1834 = vmatpush1.bf16.xpose.msra.mxu0 0
      %1835 = vmatprep.subr.bf16.mxu0 0
      %1836 = vmatpush1.bf16.xpose.msra.mxu0 0
      %1837 = vmatprep.subr.bf16.mxu0 0
      %1838 = vmatpush1.bf16.xpose.msra.mxu0 0
      %1839 = vmatprep.subr.bf16.mxu0 0
      %1840 = vmatpush1.bf16.xpose.msra.mxu0 0
      %1841 = vmatprep.subr.bf16.mxu0 0
      %1842 = vmatpush1.bf16.xpose.msra.mxu0 0
      %1843 = vmatprep.subr.bf16.mxu0 0
      %1844 = vmatpush1.bf16.xpose.msra.mxu0 0
      %1845 = vmatprep.subr.bf16.mxu0 0
      %1846 = vmatpush1.bf16.xpose.msra.mxu0 0
      %1847 = vmatprep.subr.bf16.mxu0 0
      %1848 = vmatpush1.bf16.xpose.msra.mxu0 0
      %1849 = vmatprep.mubr.bf16.mxu0 0
      %1850 = vmatmul.mubr.bf16.gmra.mrb[0].mxu0 %v1812
      %v1851 = vpop.f32.mrb[0].mxu0
      %v1852 = vadd.f32 %v475, %v1851
      %v1853 = vpop.f32.mrb[0].mxu0
      %v1854 = vpop.f32.mrb[0].mxu0
      %v1855 = vpop.f32.mrb[0].mxu0
      %1856 = vdwg.mxu0
      %v1857 = vsel %vm570, %v1852, -inf
      %1858 = vmax.xlane.f32.xlu0 %v1857
      %v1859 = vpop.xlane.xlu0 %1858
      %v1860 = vsub.f32 %v1852, %v1859
      %v1861 = vmul.f32 %v1860, 1.442695
      %v1862 = vpow.pop %v1861
      %v1863 = vsel %vm570, %v1862, 0.0
      %1864 = vadd.xlane.f32.xlu0 %v1863
      %v1865 = vpop.xlane.xlu0 %1864
      %v1866 = vrcp.pop %v1865
      %v1867 = vmul.f32 %v1862, %v1866
      %v1868 = vpack.c.bf16 %v1867, %v1867
      %1869 = vrot.lane.b32.xlu0 %v1493, 48
      %v1870 = vpop.permute.xlu0 %1869
      %v1872 = vsel %vm570, %v1868, 0
      %v1875 = vsel %vm634, %v1870, 0
      %1877 = vmatprep.subr.bf16.mxu0 0
      %1878 = vmatpush1.bf16.msra.mxu0 %v1875
      %1879 = vmatprep.subr.bf16.mxu0 0
      %1880 = vmatpush1.bf16.msra.mxu0 0
      %1881 = vmatprep.subr.bf16.mxu0 0
      %1882 = vmatpush1.bf16.msra.mxu0 0
      %1883 = vmatprep.subr.bf16.mxu0 0
      %1884 = vmatpush1.bf16.msra.mxu0 0
      %1885 = vmatprep.subr.bf16.mxu0 0
      %1886 = vmatpush1.bf16.msra.mxu0 0
      %1887 = vmatprep.subr.bf16.mxu0 0
      %1888 = vmatpush1.bf16.msra.mxu0 0
      %1889 = vmatprep.subr.bf16.mxu0 0
      %1890 = vmatpush1.bf16.msra.mxu0 0
      %1891 = vmatprep.subr.bf16.mxu0 0
      %1892 = vmatpush1.bf16.msra.mxu0 0
      %1893 = vmatprep.subr.bf16.mxu0 0
      %1894 = vmatpush1.bf16.msra.mxu0 0
      %1895 = vmatprep.subr.bf16.mxu0 0
      %1896 = vmatpush1.bf16.msra.mxu0 0
      %1897 = vmatprep.subr.bf16.mxu0 0
      %1898 = vmatpush1.bf16.msra.mxu0 0
      %1899 = vmatprep.subr.bf16.mxu0 0
      %1900 = vmatpush1.bf16.msra.mxu0 0
      %1901 = vmatprep.subr.bf16.mxu0 0
      %1902 = vmatpush1.bf16.msra.mxu0 0
      %1903 = vmatprep.subr.bf16.mxu0 0
      %1904 = vmatpush1.bf16.msra.mxu0 0
      %1905 = vmatprep.subr.bf16.mxu0 0
      %1906 = vmatpush1.bf16.msra.mxu0 0
      %1907 = vmatprep.subr.bf16.mxu0 0
      %1908 = vmatpush1.bf16.msra.mxu0 0
      %1909 = vmatprep.mubr.bf16.mxu0 0
      %1910 = vmatmul.mubr.bf16.gmra.mrb[0].mxu0 %v1872
      %v1911 = vpop.f32.mrb[0].mxu0
      %v1912 = vadd.f32 0.0, %v1911
      %v1913 = vpop.f32.mrb[0].mxu0
      %v1914 = vpop.f32.mrb[0].mxu0
      %v1915 = vpop.f32.mrb[0].mxu0
      %1916 = vdwg.mxu0
      %v1917 = vpack.c.bf16 %v1912, %v1912
      %v1919 = vsel %vm570, %v1917, 0
      %v1922 = vsel %vm634, %v1491, 0
      %1924 = vmatprep.subr.bf16.mxu0 0
      %1925 = vmatpush1.bf16.msra.mxu0 %v1922
      %1926 = vmatprep.subr.bf16.mxu0 0
      %1927 = vmatpush1.bf16.msra.mxu0 0
      %1928 = vmatprep.subr.bf16.mxu0 0
      %1929 = vmatpush1.bf16.msra.mxu0 0
      %1930 = vmatprep.subr.bf16.mxu0 0
      %1931 = vmatpush1.bf16.msra.mxu0 0
      %1932 = vmatprep.subr.bf16.mxu0 0
      %1933 = vmatpush1.bf16.msra.mxu0 0
      %1934 = vmatprep.subr.bf16.mxu0 0
      %1935 = vmatpush1.bf16.msra.mxu0 0
      %1936 = vmatprep.subr.bf16.mxu0 0
      %1937 = vmatpush1.bf16.msra.mxu0 0
      %1938 = vmatprep.subr.bf16.mxu0 0
      %1939 = vmatpush1.bf16.msra.mxu0 0
      %1940 = vmatprep.subr.bf16.mxu0 0
      %1941 = vmatpush1.bf16.msra.mxu0 0
      %1942 = vmatprep.subr.bf16.mxu0 0
      %1943 = vmatpush1.bf16.msra.mxu0 0
      %1944 = vmatprep.subr.bf16.mxu0 0
      %1945 = vmatpush1.bf16.msra.mxu0 0
      %1946 = vmatprep.subr.bf16.mxu0 0
      %1947 = vmatpush1.bf16.msra.mxu0 0
      %1948 = vmatprep.subr.bf16.mxu0 0
      %1949 = vmatpush1.bf16.msra.mxu0 0
      %1950 = vmatprep.subr.bf16.mxu0 0
      %1951 = vmatpush1.bf16.msra.mxu0 0
      %1952 = vmatprep.subr.bf16.mxu0 0
      %1953 = vmatpush1.bf16.msra.mxu0 0
      %1954 = vmatprep.subr.bf16.mxu0 0
      %1955 = vmatpush1.bf16.msra.mxu0 0
      %1956 = vmatprep.mubr.bf16.mxu0 0
      %1957 = vmatmul.mubr.bf16.gmra.mrb[0].mxu0 %v1919
      %v1958 = vpop.f32.mrb[0].mxu0
      %v1959 = vadd.f32 0.0, %v1958
      %v1960 = vpop.f32.mrb[0].mxu0
      %v1961 = vpop.f32.mrb[0].mxu0
      %v1962 = vpop.f32.mrb[0].mxu0
      %1963 = vdwg.mxu0
      %v1964 = vadd.f32 %v1802, %v1959
      %1965 = vrot.lane.b32.xlu0 %v1493, 104
      %v1966 = vpop.permute.xlu0 %1965
      %1967 = vrot.lane.b32.xlu0 %v1493, 72
      %v1968 = vpop.permute.xlu0 %1967
      %v1970 = vsel %vm570, %v1966, 0
      %v1973 = vsel %vm570, %v1968, 0
      %1975 = vmatprep.subr.bf16.mxu0 0
      %1976 = vmatpush1.bf16.xpose.msra.mxu0 %v1973
      %1977 = vmatprep.subr.bf16.mxu0 0
      %1978 = vmatpush1.bf16.xpose.msra.mxu0 0
      %1979 = vmatprep.subr.bf16.mxu0 0
      %1980 = vmatpush1.bf16.xpose.msra.mxu0 0
      %1981 = vmatprep.subr.bf16.mxu0 0
      %1982 = vmatpush1.bf16.xpose.msra.mxu0 0
      %1983 = vmatprep.subr.bf16.mxu0 0
      %1984 = vmatpush1.bf16.xpose.msra.mxu0 0
      %1985 = vmatprep.subr.bf16.mxu0 0
      %1986 = vmatpush1.bf16.xpose.msra.mxu0 0
      %1987 = vmatprep.subr.bf16.mxu0 0
      %1988 = vmatpush1.bf16.xpose.msra.mxu0 0
      %1989 = vmatprep.subr.bf16.mxu0 0
      %1990 = vmatpush1.bf16.xpose.msra.mxu0 0
      %1991 = vmatprep.subr.bf16.mxu0 0
      %1992 = vmatpush1.bf16.xpose.msra.mxu0 0
      %1993 = vmatprep.subr.bf16.mxu0 0
      %1994 = vmatpush1.bf16.xpose.msra.mxu0 0
      %1995 = vmatprep.subr.bf16.mxu0 0
      %1996 = vmatpush1.bf16.xpose.msra.mxu0 0
      %1997 = vmatprep.subr.bf16.mxu0 0
      %1998 = vmatpush1.bf16.xpose.msra.mxu0 0
      %1999 = vmatprep.subr.bf16.mxu0 0
      %2000 = vmatpush1.bf16.xpose.msra.mxu0 0
      %2001 = vmatprep.subr.bf16.mxu0 0
      %2002 = vmatpush1.bf16.xpose.msra.mxu0 0
      %2003 = vmatprep.subr.bf16.mxu0 0
      %2004 = vmatpush1.bf16.xpose.msra.mxu0 0
      %2005 = vmatprep.subr.bf16.mxu0 0
      %2006 = vmatpush1.bf16.xpose.msra.mxu0 0
      %2007 = vmatprep.mubr.bf16.mxu0 0
      %2008 = vmatmul.mubr.bf16.gmra.mrb[0].mxu0 %v1970
      %v2009 = vpop.f32.mrb[0].mxu0
      %v2010 = vadd.f32 %v475, %v2009
      %v2011 = vpop.f32.mrb[0].mxu0
      %v2012 = vpop.f32.mrb[0].mxu0
      %v2013 = vpop.f32.mrb[0].mxu0
      %2014 = vdwg.mxu0
      %v2015 = vsel %vm570, %v2010, -inf
      %2016 = vmax.xlane.f32.xlu0 %v2015
      %v2017 = vpop.xlane.xlu0 %2016
      %v2018 = vsub.f32 %v2010, %v2017
      %v2019 = vmul.f32 %v2018, 1.442695
      %v2020 = vpow.pop %v2019
      %v2021 = vsel %vm570, %v2020, 0.0
      %2022 = vadd.xlane.f32.xlu0 %v2021
      %v2023 = vpop.xlane.xlu0 %2022
      %v2024 = vrcp.pop %v2023
      %v2025 = vmul.f32 %v2020, %v2024
      %v2026 = vpack.c.bf16 %v2025, %v2025
      %2027 = vrot.lane.b32.xlu0 %v1493, 40
      %v2028 = vpop.permute.xlu0 %2027
      %v2030 = vsel %vm570, %v2026, 0
      %v2033 = vsel %vm634, %v2028, 0
      %2035 = vmatprep.subr.bf16.mxu0 0
      %2036 = vmatpush1.bf16.msra.mxu0 %v2033
      %2037 = vmatprep.subr.bf16.mxu0 0
      %2038 = vmatpush1.bf16.msra.mxu0 0
      %2039 = vmatprep.subr.bf16.mxu0 0
      %2040 = vmatpush1.bf16.msra.mxu0 0
      %2041 = vmatprep.subr.bf16.mxu0 0
      %2042 = vmatpush1.bf16.msra.mxu0 0
      %2043 = vmatprep.subr.bf16.mxu0 0
      %2044 = vmatpush1.bf16.msra.mxu0 0
      %2045 = vmatprep.subr.bf16.mxu0 0
      %2046 = vmatpush1.bf16.msra.mxu0 0
      %2047 = vmatprep.subr.bf16.mxu0 0
      %2048 = vmatpush1.bf16.msra.mxu0 0
      %2049 = vmatprep.subr.bf16.mxu0 0
      %2050 = vmatpush1.bf16.msra.mxu0 0
      %2051 = vmatprep.subr.bf16.mxu0 0
      %2052 = vmatpush1.bf16.msra.mxu0 0
      %2053 = vmatprep.subr.bf16.mxu0 0
      %2054 = vmatpush1.bf16.msra.mxu0 0
      %2055 = vmatprep.subr.bf16.mxu0 0
      %2056 = vmatpush1.bf16.msra.mxu0 0
      %2057 = vmatprep.subr.bf16.mxu0 0
      %2058 = vmatpush1.bf16.msra.mxu0 0
      %2059 = vmatprep.subr.bf16.mxu0 0
      %2060 = vmatpush1.bf16.msra.mxu0 0
      %2061 = vmatprep.subr.bf16.mxu0 0
      %2062 = vmatpush1.bf16.msra.mxu0 0
      %2063 = vmatprep.subr.bf16.mxu0 0
      %2064 = vmatpush1.bf16.msra.mxu0 0
      %2065 = vmatprep.subr.bf16.mxu0 0
      %2066 = vmatpush1.bf16.msra.mxu0 0
      %2067 = vmatprep.mubr.bf16.mxu0 0
      %2068 = vmatmul.mubr.bf16.gmra.mrb[0].mxu0 %v2030
      %v2069 = vpop.f32.mrb[0].mxu0
      %v2070 = vadd.f32 0.0, %v2069
      %v2071 = vpop.f32.mrb[0].mxu0
      %v2072 = vpop.f32.mrb[0].mxu0
      %v2073 = vpop.f32.mrb[0].mxu0
      %2074 = vdwg.mxu0
      %v2075 = vpack.c.bf16 %v2070, %v2070
      %v2077 = vsel %vm570, %v2075, 0
      %v2080 = vsel %vm634, %v1492, 0
      %2082 = vmatprep.subr.bf16.mxu0 0
      %2083 = vmatpush1.bf16.msra.mxu0 %v2080
      %2084 = vmatprep.subr.bf16.mxu0 0
      %2085 = vmatpush1.bf16.msra.mxu0 0
      %2086 = vmatprep.subr.bf16.mxu0 0
      %2087 = vmatpush1.bf16.msra.mxu0 0
      %2088 = vmatprep.subr.bf16.mxu0 0
      %2089 = vmatpush1.bf16.msra.mxu0 0
      %2090 = vmatprep.subr.bf16.mxu0 0
      %2091 = vmatpush1.bf16.msra.mxu0 0
      %2092 = vmatprep.subr.bf16.mxu0 0
      %2093 = vmatpush1.bf16.msra.mxu0 0
      %2094 = vmatprep.subr.bf16.mxu0 0
      %2095 = vmatpush1.bf16.msra.mxu0 0
      %2096 = vmatprep.subr.bf16.mxu0 0
      %2097 = vmatpush1.bf16.msra.mxu0 0
      %2098 = vmatprep.subr.bf16.mxu0 0
      %2099 = vmatpush1.bf16.msra.mxu0 0
      %2100 = vmatprep.subr.bf16.mxu0 0
      %2101 = vmatpush1.bf16.msra.mxu0 0
      %2102 = vmatprep.subr.bf16.mxu0 0
      %2103 = vmatpush1.bf16.msra.mxu0 0
      %2104 = vmatprep.subr.bf16.mxu0 0
      %2105 = vmatpush1.bf16.msra.mxu0 0
      %2106 = vmatprep.subr.bf16.mxu0 0
      %2107 = vmatpush1.bf16.msra.mxu0 0
      %2108 = vmatprep.subr.bf16.mxu0 0
      %2109 = vmatpush1.bf16.msra.mxu0 0
      %2110 = vmatprep.subr.bf16.mxu0 0
      %2111 = vmatpush1.bf16.msra.mxu0 0
      %2112 = vmatprep.subr.bf16.mxu0 0
      %2113 = vmatpush1.bf16.msra.mxu0 0
      %2114 = vmatprep.mubr.bf16.mxu0 0
      %2115 = vmatmul.mubr.bf16.gmra.mrb[0].mxu0 %v2077
      %v2116 = vpop.f32.mrb[0].mxu0
      %v2117 = vadd.f32 0.0, %v2116
      %v2118 = vpop.f32.mrb[0].mxu0
      %v2119 = vpop.f32.mrb[0].mxu0
      %v2120 = vpop.f32.mrb[0].mxu0
      %2121 = vdwg.mxu0
      %v2122 = vadd.f32 %v1964, %v2117
      %v2123 = vadd.f32 %v1401, %v2122
      %v2124 = vlaneseq
      %v2125 = vshrl.u32 %v2124, 7
      %v2126 = vsub.s32 1, %v2125
      %v2127 = vrot.slane %v1403, %v2126
      %v2128 = vadd.f32 %v2123, %v2127
      %v2129 = vsel %vm477, %v2128, 0.0
      %2130 = vadd.xlane.f32.xlu0 %v2129
      %v2131 = vpop.xlane.xlu0 %2130
      %v2132 = vmul.f32 %v2131, %v481
      %v2133 = vsub.f32 %v2128, %v2132
      %v2134 = vmul.f32 %v2133, %v2133
      %v2135 = vsel %vm477, %v2134, 0.0
      %2136 = vadd.xlane.f32.xlu0 %v2135
      %v2137 = vpop.xlane.xlu0 %2136
      %v2138 = vmul.f32 %v2137, %v481
      %v2139 = vadd.f32 %v2138, 1e-05
      %v2140 = vrsqrt.pop %v2139
      %v2141 = vmul.f32 %v2133, %v2140
      %v2142 = vlaneseq
      %v2143 = vshrl.u32 %v2142, 7
      %v2144 = vsub.s32 5, %v2143
      %v2145 = vrot.slane %v1403, %v2144
      %v2146 = vmul.f32 %v2141, %v2145
      %v2147 = vlaneseq
      %v2148 = vshrl.u32 %v2147, 7
      %v2149 = vsub.s32 6, %v2148
      %v2150 = vrot.slane %v1403, %v2149
      %v2151 = vadd.f32 %v2146, %v2150
      %v2152 = vpack.c.bf16 %v2151, %v2151
      %s2153 = scalar_lea.vmem %s5, 16
      %v2154 = vld [vmem:[%s2153] sm:$0xf]
      %v2155 = vld [vmem:[%s2153 + $0x4] sm:$0xf]
      %v2156 = vld [vmem:[%s2153 + $0x8] sm:$0xf]
      %v2157 = vld [vmem:[%s2153 + $0xc] sm:$0xf]
      %v2158 = vlaneseq
      %v2159 = vshrl.u32 %v2158, 7
      %v2160 = vsub.s32 0, %v2159
      %v2161 = vrot.slane %v1403, %v2160
      %v2166 = vunpack.c.l.b16 %v2154
      %v2167 = vunpack.c.l.b16 %v2155
      %v2168 = vunpack.c.l.b16 %v2156
      %v2169 = vunpack.c.l.b16 %v2157
      %v2170 = vpack.c.b16 %v2167, %v2166
      %v2171 = vpack.c.b16 %v2169, %v2168
      %v2175 = vsel %vm477, %v2152, 0
      %2177 = vmatprep.subr.bf16.mxu0 0
      %2178 = vmatpush1.bf16.msra.mxu0 %v2170
      %2179 = vmatprep.subr.bf16.mxu0 0
      %2180 = vmatpush1.bf16.msra.mxu0 %v2171
      %2181 = vmatprep.subr.bf16.mxu0 0
      %2182 = vmatpush1.bf16.msra.mxu0 0
      %2183 = vmatprep.subr.bf16.mxu0 0
      %2184 = vmatpush1.bf16.msra.mxu0 0
      %2185 = vmatprep.subr.bf16.mxu0 0
      %2186 = vmatpush1.bf16.msra.mxu0 0
      %2187 = vmatprep.subr.bf16.mxu0 0
      %2188 = vmatpush1.bf16.msra.mxu0 0
      %2189 = vmatprep.subr.bf16.mxu0 0
      %2190 = vmatpush1.bf16.msra.mxu0 0
      %2191 = vmatprep.subr.bf16.mxu0 0
      %2192 = vmatpush1.bf16.msra.mxu0 0
      %2193 = vmatprep.subr.bf16.mxu0 0
      %2194 = vmatpush1.bf16.msra.mxu0 0
      %2195 = vmatprep.subr.bf16.mxu0 0
      %2196 = vmatpush1.bf16.msra.mxu0 0
      %2197 = vmatprep.subr.bf16.mxu0 0
      %2198 = vmatpush1.bf16.msra.mxu0 0
      %2199 = vmatprep.subr.bf16.mxu0 0
      %2200 = vmatpush1.bf16.msra.mxu0 0
      %2201 = vmatprep.subr.bf16.mxu0 0
      %2202 = vmatpush1.bf16.msra.mxu0 0
      %2203 = vmatprep.subr.bf16.mxu0 0
      %2204 = vmatpush1.bf16.msra.mxu0 0
      %2205 = vmatprep.subr.bf16.mxu0 0
      %2206 = vmatpush1.bf16.msra.mxu0 0
      %2207 = vmatprep.subr.bf16.mxu0 0
      %2208 = vmatpush1.bf16.msra.mxu0 0
      %2209 = vmatprep.mubr.bf16.mxu0 0
      %2210 = vmatmul.mubr.bf16.gmra.mrb[0].mxu0 %v2175
      %v2211 = vpop.f32.mrb[0].mxu0
      %v2212 = vadd.f32 %v2161, %v2211
      %v2213 = vpop.f32.mrb[0].mxu0
      %v2214 = vpop.f32.mrb[0].mxu0
      %v2215 = vpop.f32.mrb[0].mxu0
      %2216 = vdwg.mxu0
      %v2217 = vmax.f32 %v2212, 0.0
      %v2218 = vpack.c.bf16 %v2217, %v2217
      %s2219 = scalar_lea.vmem %s6, 64
      %v2220 = vld [vmem:[%s2219] sm:$0xf]
      %v2221 = vld [vmem:[%s2219 + $0x4] sm:$0xf]
      %v2222 = vld [vmem:[%s2219 + $0x8] sm:$0xf]
      %v2223 = vld [vmem:[%s2219 + $0xc] sm:$0xf]
      %v2224 = vld [vmem:[%s2219 + $0x10] sm:$0xf]
      %v2225 = vld [vmem:[%s2219 + $0x14] sm:$0xf]
      %v2226 = vld [vmem:[%s2219 + $0x18] sm:$0xf]
      %v2227 = vld [vmem:[%s2219 + $0x1c] sm:$0xf]
      %v2228 = vld [vmem:[%s2219 + $0x20] sm:$0xf]
      %v2229 = vld [vmem:[%s2219 + $0x24] sm:$0xf]
      %v2230 = vld [vmem:[%s2219 + $0x28] sm:$0xf]
      %v2231 = vld [vmem:[%s2219 + $0x2c] sm:$0xf]
      %v2232 = vld [vmem:[%s2219 + $0x30] sm:$0xf]
      %v2233 = vld [vmem:[%s2219 + $0x34] sm:$0xf]
      %v2234 = vld [vmem:[%s2219 + $0x38] sm:$0xf]
      %v2235 = vld [vmem:[%s2219 + $0x3c] sm:$0xf]
      %v2236 = vlaneseq
      %v2237 = vshrl.u32 %v2236, 7
      %v2238 = vsub.s32 2, %v2237
      %v2239 = vrot.slane %v1403, %v2238
      %v2256 = vunpack.c.l.b16 %v2220
      %v2257 = vunpack.c.l.b16 %v2221
      %v2258 = vunpack.c.l.b16 %v2222
      %v2259 = vunpack.c.l.b16 %v2223
      %v2260 = vunpack.c.l.b16 %v2224
      %v2261 = vunpack.c.l.b16 %v2225
      %v2262 = vunpack.c.l.b16 %v2226
      %v2263 = vunpack.c.l.b16 %v2227
      %v2264 = vunpack.c.l.b16 %v2228
      %v2265 = vunpack.c.l.b16 %v2229
      %v2266 = vunpack.c.l.b16 %v2230
      %v2267 = vunpack.c.l.b16 %v2231
      %v2268 = vunpack.c.l.b16 %v2232
      %v2269 = vunpack.c.l.b16 %v2233
      %v2270 = vunpack.c.l.b16 %v2234
      %v2271 = vunpack.c.l.b16 %v2235
      %v2272 = vpack.c.b16 %v2257, %v2256
      %v2273 = vpack.c.b16 %v2259, %v2258
      %v2274 = vpack.c.b16 %v2261, %v2260
      %v2275 = vpack.c.b16 %v2263, %v2262
      %v2276 = vpack.c.b16 %v2265, %v2264
      %v2277 = vpack.c.b16 %v2267, %v2266
      %v2278 = vpack.c.b16 %v2269, %v2268
      %v2279 = vpack.c.b16 %v2271, %v2270
      %2288 = vmatprep.subr.bf16.mxu0 0
      %2289 = vmatpush1.bf16.msra.mxu0 %v2272
      %2290 = vmatprep.subr.bf16.mxu0 0
      %2291 = vmatpush1.bf16.msra.mxu0 %v2273
      %2292 = vmatprep.subr.bf16.mxu0 0
      %2293 = vmatpush1.bf16.msra.mxu0 %v2274
      %2294 = vmatprep.subr.bf16.mxu0 0
      %2295 = vmatpush1.bf16.msra.mxu0 %v2275
      %2296 = vmatprep.subr.bf16.mxu0 0
      %2297 = vmatpush1.bf16.msra.mxu0 %v2276
      %2298 = vmatprep.subr.bf16.mxu0 0
      %2299 = vmatpush1.bf16.msra.mxu0 %v2277
      %2300 = vmatprep.subr.bf16.mxu0 0
      %2301 = vmatpush1.bf16.msra.mxu0 %v2278
      %2302 = vmatprep.subr.bf16.mxu0 0
      %2303 = vmatpush1.bf16.msra.mxu0 %v2279
      %2304 = vmatprep.subr.bf16.mxu0 0
      %2305 = vmatpush1.bf16.msra.mxu0 0
      %2306 = vmatprep.subr.bf16.mxu0 0
      %2307 = vmatpush1.bf16.msra.mxu0 0
      %2308 = vmatprep.subr.bf16.mxu0 0
      %2309 = vmatpush1.bf16.msra.mxu0 0
      %2310 = vmatprep.subr.bf16.mxu0 0
      %2311 = vmatpush1.bf16.msra.mxu0 0
      %2312 = vmatprep.subr.bf16.mxu0 0
      %2313 = vmatpush1.bf16.msra.mxu0 0
      %2314 = vmatprep.subr.bf16.mxu0 0
      %2315 = vmatpush1.bf16.msra.mxu0 0
      %2316 = vmatprep.subr.bf16.mxu0 0
      %2317 = vmatpush1.bf16.msra.mxu0 0
      %2318 = vmatprep.subr.bf16.mxu0 0
      %2319 = vmatpush1.bf16.msra.mxu0 0
      %2320 = vmatprep.mubr.bf16.mxu0 0
      %2321 = vmatmul.mubr.bf16.gmra.mrb[0].mxu0 %v2218
      %v2322 = vpop.f32.mrb[0].mxu0
      %v2323 = vadd.f32 %v2239, %v2322
      %v2324 = vpop.f32.mrb[0].mxu0
      %v2325 = vpop.f32.mrb[0].mxu0
      %v2326 = vpop.f32.mrb[0].mxu0
      %2327 = vdwg.mxu0
      %v2328 = vadd.f32 %v2128, %v2323
      %v2329 = vld [vmem:[%s8] sm:$0xf]
      %v2330 = vld [vmem:[%s8 + $0x4] sm:$0xf]
      %v2331 = vld [vmem:[%s8 + $0x8] sm:$0xf]
      %v2332 = vld [vmem:[%s8 + $0xc] sm:$0xf]
      %v2333 = vld [vmem:[%s8 + $0x10] sm:$0x1]
      %v2334 = vunpack.c.l.bf16 %v2333
      %v2335 = vpack.c.bf16 %v2328, %v2328
      %v2336 = vlaneseq
      %v2337 = vshrl.u32 %v2336, 7
      %v2338 = vsub.s32 0, %v2337
      %v2339 = vrot.slane %v2334, %v2338
      %v2344 = vunpack.c.l.b16 %v2329
      %v2345 = vunpack.c.l.b16 %v2330
      %v2346 = vunpack.c.l.b16 %v2331
      %v2347 = vunpack.c.l.b16 %v2332
      %v2348 = vpack.c.b16 %v2345, %v2344
      %v2349 = vpack.c.b16 %v2347, %v2346
      %v2353 = vsel %vm477, %v2335, 0
      %2355 = vmatprep.subr.bf16.mxu0 0
      %2356 = vmatpush1.bf16.msra.mxu0 %v2348
      %2357 = vmatprep.subr.bf16.mxu0 0
      %2358 = vmatpush1.bf16.msra.mxu0 %v2349
      %2359 = vmatprep.subr.bf16.mxu0 0
      %2360 = vmatpush1.bf16.msra.mxu0 0
      %2361 = vmatprep.subr.bf16.mxu0 0
      %2362 = vmatpush1.bf16.msra.mxu0 0
      %2363 = vmatprep.subr.bf16.mxu0 0
      %2364 = vmatpush1.bf16.msra.mxu0 0
      %2365 = vmatprep.subr.bf16.mxu0 0
      %2366 = vmatpush1.bf16.msra.mxu0 0
      %2367 = vmatprep.subr.bf16.mxu0 0
      %2368 = vmatpush1.bf16.msra.mxu0 0
      %2369 = vmatprep.subr.bf16.mxu0 0
      %2370 = vmatpush1.bf16.msra.mxu0 0
      %2371 = vmatprep.subr.bf16.mxu0 0
      %2372 = vmatpush1.bf16.msra.mxu0 0
      %2373 = vmatprep.subr.bf16.mxu0 0
      %2374 = vmatpush1.bf16.msra.mxu0 0
      %2375 = vmatprep.subr.bf16.mxu0 0
      %2376 = vmatpush1.bf16.msra.mxu0 0
      %2377 = vmatprep.subr.bf16.mxu0 0
      %2378 = vmatpush1.bf16.msra.mxu0 0
      %2379 = vmatprep.subr.bf16.mxu0 0
      %2380 = vmatpush1.bf16.msra.mxu0 0
      %2381 = vmatprep.subr.bf16.mxu0 0
      %2382 = vmatpush1.bf16.msra.mxu0 0
      %2383 = vmatprep.subr.bf16.mxu0 0
      %2384 = vmatpush1.bf16.msra.mxu0 0
      %2385 = vmatprep.subr.bf16.mxu0 0
      %2386 = vmatpush1.bf16.msra.mxu0 0
      %2387 = vmatprep.mubr.bf16.mxu0 0
      %2388 = vmatmul.mubr.bf16.gmra.mrb[0].mxu0 %v2353
      %v2389 = vpop.f32.mrb[0].mxu0
      %v2390 = vadd.f32 %v2339, %v2389
      %v2391 = vpop.f32.mrb[0].mxu0
      %v2392 = vpop.f32.mrb[0].mxu0
      %v2393 = vpop.f32.mrb[0].mxu0
      %2394 = vdwg.mxu0
      %2395 = vst [vmem:[%s378] sm:$0xff] %v2390
      %v2396 = vld [vmem:[%s374] sm:$0xff]
      %vm2397 = vcmp.lt.s32.totalorder %v386, 64
      %v2398 = vsel %vm2397, %v2390, -1e+30
      %2399 = vmax.xlane.f32.xlu0 %v2398
      %v2400 = vpop.xlane.xlu0 %2399
      %v2401 = vsub.f32 %v2398, %v2400
      %v2402 = vmul.f32 %v2401, 1.442695
      %v2403 = vpow.pop %v2402
      %2404 = vadd.xlane.f32.xlu0 %v2403
      %v2405 = vpop.xlane.xlu0 %2404
      %v2406 = vlog2.pop %v2405
      %v2407 = vmul.f32 %v2406, 0.6931472
      %v2408 = vadd.f32 %v2400, %v2407
      %2409 = vset.pattern.permute.xlu0 0
      %2410 = vperm.xlu0 %2409, %v2396
      %v2411 = vpop.permute.xlu0 %2410
      %vm2412 = vcmp.eq.s32.totalorder %v386, %v2411
      %v2413 = vsel %vm2412, %v2390, 0.0
      %2414 = vadd.xlane.f32.xlu0 %v2413
      %v2415 = vpop.xlane.xlu0 %2414
      %v2416 = vsub.f32 %v2408, %v2415
      %vm2417 = vcmask 7168
      %2418 = vst.msk [vmem:[%s382] sm:$0xff] %vm2417, %v2416
      %p2419 = scmp.lt.s32.totalorder %s22, 1
      %s2420 = scalar_select %p2419, %s22, 1
      %s2421 = smul.addr %s2420, 8
      %s2422 = scalar_lea.vmem %s9, %s2421
      %p2423 = scmp.lt.s32.totalorder %s22, 1
      %s2424 = scalar_select %p2423, %s22, 1
      %s2425 = smul.addr %s2424, 8
      %s2426 = scalar_lea.vmem %s10, %s2425
      // Predicated region
      $region57: #{forward.1} parent=55 // pred_check
        %p2427 = pneg %p239
      $region58: #{forward.1} parent=55 // pred_check_branch
        %2429 = sbr.rel (%p2427) target = $region60
      $region59: #{forward.1} parent=55 // pred_region
        _
      $region60: #{forward.1} parent=55 // pred_fallthru
        _
      // Predicated region
      $region61: #{forward.1} parent=55 // pred_check
        %p2430 = pneg %p265
      $region62: #{forward.1} parent=55 // pred_check_branch
        %2432 = sbr.rel (%p2430) target = $region64
      $region63: #{forward.1} parent=55 // pred_region
        _
      $region64: #{forward.1} parent=55 // pred_fallthru
        _
    $region56: #{forward.1} parent=5 // pred_fallthru
      _
    %p2433 = scmp.le.s32.totalorder 2, %s17
    // Predicated region
    $region65: #{forward.1} parent=5 // pred_check
      %p2434 = pneg %p2433
    $region66: #{forward.1} parent=5 // pred_check_branch
      %2436 = sbr.rel (%p2434) target = $region68
    $region67: #{forward.1} parent=5 // pred_region
      %s2437 = ssub.s32 %s17, 2
      // Predicated region
      $region69: #{forward.1} parent=67 // pred_check
        %p2438 = pneg %p245
      $region70: #{forward.1} parent=67 // pred_check_branch
        %2440 = sbr.rel (%p2438) target = $region72
      $region71: #{forward.1} parent=67 // pred_region
        %p2441 = scmp.lt.s32.totalorder %s23, 1
        %s2442 = scalar_select %p2441, %s23, 1
        %s2443 = smul.addr %s2442, 8
        %s2444 = scalar_lea.vmem %s9, %s2443
      $region72: #{forward.1} parent=67 // pred_fallthru
        _
      // Predicated region
      $region73: #{forward.1} parent=67 // pred_check
        %p2445 = pneg %p271
      $region74: #{forward.1} parent=67 // pred_check_branch
        %2447 = sbr.rel (%p2445) target = $region76
      $region75: #{forward.1} parent=67 // pred_region
        %p2448 = scmp.lt.s32.totalorder %s23, 1
        %s2449 = scalar_select %p2448, %s23, 1
        %s2450 = smul.addr %s2449, 8
        %s2451 = scalar_lea.vmem %s10, %s2450
      $region76: #{forward.1} parent=67 // pred_fallthru
        _
    $region68: #{forward.1} parent=5 // pred_fallthru
      _
  $region6: #{forward.1} parent=0 // loop_footer
    %s21 = sadd.s32 1, %s17
  $region7: #{forward.1} parent=0 // loop_footer_branch
    %16 = sbr.rel target = $region3
  $region8: #{forward.1} parent=0 // loop_exit
    _

</llo_original>
